<compile_context>
chip_gen: v5e
topology: v5e:2x2
jax: 0.10.0
libtpu: 0.0.40
codegen_flags: <defaults>
</compile_context>

<pallas_src>
import functools

import jax
import jax.numpy as jnp
from jax.experimental import pallas as pl
from jax.experimental.pallas import tpu as pltpu

EPS = 1e-5
_MIN_MATMUL_M = 512     # target rows*W per row block (fills 256-wide MXU)
_MAX_MATMUL_M = 1024    # cap on rows*W per single im2col matmul (bounds patch VMEM)

_VMEM_LIMIT_CACHE = None


def _vmem_limit_bytes():
    """Per-generation scoped-VMEM limit (v5e/v6e: ~112 of 128 MiB; v7x: ~48 of 64)."""
    global _VMEM_LIMIT_CACHE
    if _VMEM_LIMIT_CACHE is None:
        try:
            cap = int(pltpu.get_tpu_info().vmem_capacity_bytes)
            _VMEM_LIMIT_CACHE = int(
                max(32 * 1024 * 1024, min(cap - 16 * 1024 * 1024, 112 * 1024 * 1024)))
        except Exception:  # pragma: no cover - conservative fallback
            _VMEM_LIMIT_CACHE = 48 * 1024 * 1024
    return _VMEM_LIMIT_CACHE


def _compiler_params():
    return pltpu.CompilerParams(
        dimension_semantics=("parallel", "parallel"),
        vmem_limit_bytes=_vmem_limit_bytes(),
    )


def _pick_row_block(H, W):
    """Smallest divisor of H whose per-block matmul M = rows*W reaches _MIN_MATMUL_M."""
    for d in range(1, H + 1):
        if H % d == 0 and d * W >= _MIN_MATMUL_M:
            return d
    return H


# ----------------------------- kernel helpers ------------------------------


def _load_padded_rows(ref, row0, rb, H, W):
    """Rows [row0-1, row0+rb] (replicate-clamped) of a (1, H, W, C) block, plus
    replicate padding along W.  Returns (rb+2, W+2, C) in the ref dtype."""
    top = jnp.maximum(row0 - 1, 0)
    bot = jnp.minimum(row0 + rb, H - 1)
    rows = jnp.concatenate(
        [ref[0, pl.ds(top, 1), :, :],
         ref[0, pl.ds(row0, rb), :, :],
         ref[0, pl.ds(bot, 1), :, :]], axis=0)                 # (rb+2, W, C)
    return jnp.concatenate([rows[:, :1], rows, rows[:, -1:]], axis=1)


def _conv3x3_stream(xp, w, rb, W, z_ref):
    """3x3 / stride-1 conv of one padded row chunk via im2col matmuls.

    xp: (rb+2, W+2, Cin) padded activations; w: (9*Cin, Cout) compute dtype.
    Each row-chunk matmul result is streamed straight into z_ref (cast to the
    storage dtype) and its per-channel (sum, sumsq) folded into a (2, Cout) f32
    accumulator, which is returned.  Nothing block-sized is materialized twice.
    """
    # TODO(synk): K=3*Cin x 3-matmul decomposition (accumulate over dw) would
    # cut patch copy traffic ~3x; on v7x the partials accumulate in the MRB.
    Cin = xp.shape[-1]
    Cout = w.shape[-1]
    xp = xp.astype(w.dtype)            # single rounding point; halves patch copies
    chunk = max(1, min(rb, _MAX_MATMUL_M // max(W, 1)))
    s = jnp.zeros((1, Cout), jnp.float32)
    ss = jnp.zeros((1, Cout), jnp.float32)
    r = 0
    while r < rb:                      # static python loop (unrolled at trace time)
        th = min(chunk, rb - r)
        cols = []
        for dh in range(3):
            for dw in range(3):
                cols.append(
                    xp[r + dh:r + dh + th, dw:dw + W, :].reshape(th * W, Cin))
        patch = jnp.concatenate(cols, axis=-1)                       # (th*W, 9*Cin)
        acc = jnp.dot(patch, w, preferred_element_type=jnp.float32)  # (th*W, Cout) f32
        if r == 0 and th == rb:        # common single-chunk path: full-tile store
            z_ref[...] = acc.reshape(1, th, W, Cout).astype(z_ref.dtype)
        else:
            z_ref[0, pl.ds(r, th), :, :] = (
                acc.reshape(th, W, Cout).astype(z_ref.dtype))
        s = s + jnp.sum(acc, axis=0, keepdims=True)
        ss = ss + jnp.sum(acc * acc, axis=0, keepdims=True)
        r += th
    return jnp.concatenate([s, ss], axis=0)                          # (2, Cout)


# -------------------------------- kernels ----------------------------------


def _conv_stats_kernel(x_ref, w_ref, z_ref, stats_ref):
    # x_ref: (1, H, W, Cin) full image (resident across row steps of one image)
    # z_ref: (1, rb, W, Cout) raw conv1 output for this row block
    # stats_ref: (1, 1, 2, Cout) partial BN1 (sum, sumsq) for this (image, block)
    _, H, W, _ = x_ref.shape
    rb = z_ref.shape[1]
    row0 = pl.program_id(1) * rb
    xp = _load_padded_rows(x_ref, row0, rb, H, W)
    stats = _conv3x3_stream(xp, w_ref[...], rb, W, z_ref)
    stats_ref[...] = stats.reshape(1, 1, 2, -1)


def _bn_relu_conv_stats_kernel(z1_ref, scale_ref, shift_ref, w_ref,
                               z2_ref, stats_ref):
    # Fused: BN1 affine + ReLU (VMEM only, including halo rows) -> conv2 -> BN2 stats.
    _, H, W, _ = z1_ref.shape
    rb = z2_ref.shape[1]
    row0 = pl.program_id(1) * rb
    zp = _load_padded_rows(z1_ref, row0, rb, H, W).astype(jnp.float32)
    yp = jnp.maximum(zp * scale_ref[...] + shift_ref[...], 0.0)   # (rb+2, W+2, C)
    stats = _conv3x3_stream(yp, w_ref[...], rb, W, z2_ref)
    stats_ref[...] = stats.reshape(1, 1, 2, -1)


def _bn_add_relu_kernel(z2_ref, scale_ref, shift_ref, x_ref, out_ref):
    # BN2 affine + residual add + ReLU (elementwise, row-block tiles).
    y = z2_ref[...].astype(jnp.float32) * scale_ref[...] + shift_ref[...] + x_ref[...]
    out_ref[...] = jnp.maximum(y, 0.0)


# ----------------------------- pallas_call glue -----------------------------


def _conv_stats(x, w_packed, Cout, rb, store_dtype):
    N, H, W, Cin = x.shape
    K = w_packed.shape[0]
    R = H // rb
    return pl.pallas_call(
        _conv_stats_kernel,
        grid=(N, R),
        out_shape=(jax.ShapeDtypeStruct((N, H, W, Cout), store_dtype),
                   jax.ShapeDtypeStruct((N, R, 2, Cout), jnp.float32)),
        in_specs=[
            pl.BlockSpec((1, H, W, Cin), lambda n, r: (n, 0, 0, 0)),  # batch-resident
            pl.BlockSpec((K, Cout), lambda n, r: (0, 0)),             # resident weights
        ],
        out_specs=(
            pl.BlockSpec((1, rb, W, Cout), lambda n, r: (n, r, 0, 0)),
            pl.BlockSpec((1, 1, 2, Cout), lambda n, r: (n, r, 0, 0)),
        ),
        compiler_params=_compiler_params(),
    )(x, w_packed)


def _bn_relu_conv_stats(z1, scale, shift, w_packed, Cout, rb, store_dtype):
    N, H, W, C = z1.shape
    K = w_packed.shape[0]
    R = H // rb
    return pl.pallas_call(
        _bn_relu_conv_stats_kernel,
        grid=(N, R),
        out_shape=(jax.ShapeDtypeStruct((N, H, W, Cout), store_dtype),
                   jax.ShapeDtypeStruct((N, R, 2, Cout), jnp.float32)),
        in_specs=[
            pl.BlockSpec((1, H, W, C), lambda n, r: (n, 0, 0, 0)),    # batch-resident
            pl.BlockSpec((1, C), lambda n, r: (0, 0)),                # resident affine
            pl.BlockSpec((1, C), lambda n, r: (0, 0)),
            pl.BlockSpec((K, Cout), lambda n, r: (0, 0)),             # resident weights
        ],
        out_specs=(
            pl.BlockSpec((1, rb, W, Cout), lambda n, r: (n, r, 0, 0)),
            pl.BlockSpec((1, 1, 2, Cout), lambda n, r: (n, r, 0, 0)),
        ),
        compiler_params=_compiler_params(),
    )(z1, scale, shift, w_packed)


def _bn_add_relu(z2, scale, shift, identity, rb):
    N, H, W, C = z2.shape
    return pl.pallas_call(
        _bn_add_relu_kernel,
        grid=(N, H // rb),
        out_shape=jax.ShapeDtypeStruct((N, H, W, C), jnp.float32),
        in_specs=[
            pl.BlockSpec((1, rb, W, C), lambda n, r: (n, r, 0, 0)),
            pl.BlockSpec((1, C), lambda n, r: (0, 0)),
            pl.BlockSpec((1, C), lambda n, r: (0, 0)),
            pl.BlockSpec((1, rb, W, C), lambda n, r: (n, r, 0, 0)),   # residual tile
        ],
        out_specs=pl.BlockSpec((1, rb, W, C), lambda n, r: (n, r, 0, 0)),
        compiler_params=_compiler_params(),
    )(z2, scale, shift, identity)


def _bn_affine_from_stats(stats, gamma, beta, count):
    """Fold per-(image, row-block) (sum, sumsq) into the BN affine. O(C) work."""
    s = jnp.sum(stats[..., 0, :], axis=(0, 1))
    ss = jnp.sum(stats[..., 1, :], axis=(0, 1))
    mean = s / count
    var = jnp.maximum(ss / count - mean * mean, 0.0)     # biased variance, f32
    # TODO(synk): use a mean-shifted / Welford-style combination if activation
    # magnitudes grow enough for the E[x^2]-E[x]^2 cancellation to matter.
    scale = gamma * jax.lax.rsqrt(var + EPS)
    shift = beta - mean * scale
    return scale.reshape(1, -1), shift.reshape(1, -1)


# -------------------------------- forward ----------------------------------


def resblock_forward(x_nchw, params, compute_dtype=jnp.bfloat16, row_block=None):
    """ResBlock forward. x_nchw: (N, C, H, W) float32 -> (N, C, H, W) float32.

    compute_dtype controls the MXU operand dtype AND the HBM storage dtype of
    the two conv intermediates (bf16 default for MXU throughput / halved
    intermediate bytes; jnp.float32 for bit-tight numerics).  Accumulation,
    BN statistics and the final output are always f32.
    """
    # TODO(synk): fold the NCHW<->NHWC relayouts into kernels 1/3 (read NCHW and
    # transpose the tile in VMEM, write NCHW via the out_spec) and pad C to a
    # multiple of 128 for lane-dense stores at small channel counts.
    x = jnp.transpose(x_nchw, (0, 2, 3, 1)).astype(jnp.float32)   # NCHW -> NHWC
    N, H, W, Cin = x.shape
    Cout = params["w1"].shape[0]
    count = float(N * H * W)

    rb = _pick_row_block(H, W) if row_block is None else int(row_block)
    if H % rb != 0:
        raise ValueError(f"row_block={rb} must divide H={H}")

    store_dtype = compute_dtype
    # OIHW -> HWIO -> (9*Cin, Cout); column order (dh, dw, ci) matches im2col.
    w1 = jnp.transpose(params["w1"], (2, 3, 1, 0)).reshape(9 * Cin, Cout)
    w2 = jnp.transpose(params["w2"], (2, 3, 1, 0)).reshape(9 * Cout, Cout)
    w1 = w1.astype(compute_dtype)
    w2 = w2.astype(compute_dtype)

    # conv1 (replicate halo sliced in-kernel) + per-row-block BN1 partial stats
    z1, stats1 = _conv_stats(x, w1, Cout, rb, store_dtype)
    scale1, shift1 = _bn_affine_from_stats(
        stats1, params["gamma1"], params["beta1"], count)

    # fused BN1-affine + ReLU + conv2 + BN2 partial stats (y1 never hits HBM)
    z2, stats2 = _bn_relu_conv_stats(z1, scale1, shift1, w2, Cout, rb, store_dtype)
    scale2, shift2 = _bn_affine_from_stats(
        stats2, params["gamma2"], params["beta2"], count)

    # BN2-affine + identity add + ReLU
    out = _bn_add_relu(z2, scale2, shift2, x, rb)
    return jnp.transpose(out, (0, 3, 1, 2))   # NHWC -> NCHW


# ------------------------------- reference ----------------------------------


def _ref_forward(x_nchw, params):
    """Pure-JAX reference (two-pass BN, lax conv) for correctness checking."""
    x = jnp.transpose(x_nchw, (0, 2, 3, 1))

    def conv(xin, w_oihw):
        w = jnp.transpose(w_oihw, (2, 3, 1, 0))  # HWIO
        xp = jnp.pad(xin, ((0, 0), (1, 1), (1, 1), (0, 0)), mode="edge")
        return jax.lax.conv_general_dilated(
            xp, w, (1, 1), "VALID", dimension_numbers=("NHWC", "HWIO", "NHWC"))

    def bn(y, gamma, beta):
        mean = jnp.mean(y, axis=(0, 1, 2), keepdims=True)
        var = jnp.mean((y - mean) ** 2, axis=(0, 1, 2), keepdims=True)
        return ((y - mean) * jax.lax.rsqrt(var + EPS) * gamma.reshape(1, 1, 1, -1)
                + beta.reshape(1, 1, 1, -1))

    y = jnp.maximum(bn(conv(x, params["w1"]), params["gamma1"], params["beta1"]), 0.0)
    y = bn(conv(y, params["w2"]), params["gamma2"], params["beta2"]) + x
    y = jnp.maximum(y, 0.0)
    return jnp.transpose(y, (0, 3, 1, 2))


if __name__ == "__main__":
    key = jax.random.PRNGKey(0)
    k1, k2, kx = jax.random.split(key, 3)

    # stride=1 and in_channel == out_channel so the residual add is well-formed
    N, C, H, W = 2, 4, 16, 16
    Cout = C

    params = {
        "w1": 0.1 * jax.random.normal(k1, (Cout, C, 3, 3), jnp.float32),
        "w2": 0.1 * jax.random.normal(k2, (Cout, Cout, 3, 3), jnp.float32),
        # PyTorch BatchNorm2d default init: weight=1, bias=0
        "gamma1": jnp.ones((Cout,), jnp.float32),
        "beta1": jnp.zeros((Cout,), jnp.float32),
        "gamma2": jnp.ones((Cout,), jnp.float32),
        "beta2": jnp.zeros((Cout,), jnp.float32),
    }
    x = jax.random.normal(kx, (N, C, H, W), jnp.float32)
    ref = _ref_forward(x, params)

    # 1) f32 path with a forced multi-row-block grid (exercises the in-kernel
    #    halo / replicate-clamp logic across block boundaries); tight tolerance.
    f32_fn = jax.jit(functools.partial(
        resblock_forward, compute_dtype=jnp.float32, row_block=8))
    out_f32 = jax.block_until_ready(f32_fn(x, params))
    assert out_f32.shape == (N, C, H, W)
    if not jnp.allclose(out_f32, ref, atol=1e-4, rtol=1e-4):
        raise AssertionError(
            "f32 kernel/reference mismatch, max abs diff = "
            f"{jnp.max(jnp.abs(out_f32 - ref))}")

    # 2) Default fast path: bf16 MXU operands + bf16 intermediates, auto row
    #    block.  Looser tolerance vs the f32 reference (expected from bf16).
    fast_fn = jax.jit(resblock_forward)
    out_fast = jax.block_until_ready(fast_fn(x, params))
    if not jnp.allclose(out_fast, ref, atol=5e-2, rtol=5e-2):
        raise AssertionError(
            "bf16 kernel/reference mismatch, max abs diff = "
            f"{jnp.max(jnp.abs(out_fast - ref))}")

    print("KERNEL_OK")
</pallas_src>

<mosaic_0001>
module attributes {stable_mosaic.version = 11 : i64} {
  func.func @_conv_stats_kernel(%arg0: i32, %arg1: i32, %arg2: memref<1x16x16x4xf32, #tpu.memory_space<vmem>>, %arg3: memref<36x4xf32, #tpu.memory_space<vmem>>, %arg4: memref<1x8x16x4xf32, #tpu.memory_space<vmem>>, %arg5: memref<1x1x2x4xf32, #tpu.memory_space<vmem>>) attributes {dimension_semantics = [#tpu.dimension_semantics<parallel>, #tpu.dimension_semantics<parallel>], iteration_bounds = array<i64: 2, 2>, scalar_prefetch = 0 : i64, scratch_operands = 0 : i64, tpu.core_type = #tpu.core_type<tc>, window_params = [{transform_indices = @transform_0, window_bounds = array<i64: 1, 16, 16, 4>}, {pipeline_mode = #tpu.pipeline_mode<synchronous>, transform_indices = @transform_1, window_bounds = array<i64: 36, 4>}, {transform_indices = @transform_2, window_bounds = array<i64: 1, 8, 16, 4>}, {transform_indices = @transform_3, window_bounds = array<i64: 1, 1, 2, 4>}]} {
    %c8_i32 = arith.constant 8 : i32
    %0 = arith.muli %arg1, %c8_i32 : i32
    %c1_i32 = arith.constant 1 : i32
    %1 = arith.subi %0, %c1_i32 : i32
    %c0_i32 = arith.constant 0 : i32
    %2 = arith.maxsi %1, %c0_i32 : i32
    %c8_i32_0 = arith.constant 8 : i32
    %3 = arith.addi %0, %c8_i32_0 : i32
    %c15_i32 = arith.constant 15 : i32
    %4 = arith.minsi %3, %c15_i32 : i32
    %c0 = arith.constant 0 : index
    %5 = arith.index_cast %2 : i32 to index
    %c0_1 = arith.constant 0 : index
    %c0_2 = arith.constant 0 : index
    %6 = vector.load %arg2[%c0, %5, %c0_1, %c0_2] : memref<1x16x16x4xf32, #tpu.memory_space<vmem>>, vector<1x1x16x4xf32>
    %7 = vector.shape_cast %6 : vector<1x1x16x4xf32> to vector<1x16x4xf32>
    %c0_3 = arith.constant 0 : index
    %8 = arith.index_cast %0 : i32 to index
    %c0_4 = arith.constant 0 : index
    %c0_5 = arith.constant 0 : index
    %9 = vector.load %arg2[%c0_3, %8, %c0_4, %c0_5] : memref<1x16x16x4xf32, #tpu.memory_space<vmem>>, vector<1x8x16x4xf32>
    %10 = vector.shape_cast %9 : vector<1x8x16x4xf32> to vector<8x16x4xf32>
    %c0_6 = arith.constant 0 : index
    %11 = arith.index_cast %4 : i32 to index
    %c0_7 = arith.constant 0 : index
    %c0_8 = arith.constant 0 : index
    %12 = vector.load %arg2[%c0_6, %11, %c0_7, %c0_8] : memref<1x16x16x4xf32, #tpu.memory_space<vmem>>, vector<1x1x16x4xf32>
    %13 = vector.shape_cast %12 : vector<1x1x16x4xf32> to vector<1x16x4xf32>
    %14 = tpu.concatenate %7, %10, %13 in 0 : vector<1x16x4xf32>, vector<8x16x4xf32>, vector<1x16x4xf32> -> vector<10x16x4xf32>
    %15 = vector.extract_strided_slice %14 {offsets = [0, 0, 0], sizes = [10, 1, 4], strides = [1, 1, 1]} : vector<10x16x4xf32> to vector<10x1x4xf32>
    %16 = vector.extract_strided_slice %14 {offsets = [0, 15, 0], sizes = [10, 1, 4], strides = [1, 1, 1]} : vector<10x16x4xf32> to vector<10x1x4xf32>
    %17 = tpu.concatenate %15, %14, %16 in 1 : vector<10x1x4xf32>, vector<10x16x4xf32>, vector<10x1x4xf32> -> vector<10x18x4xf32>
    %c0_9 = arith.constant 0 : index
    %c0_10 = arith.constant 0 : index
    %18 = vector.load %arg3[%c0_9, %c0_10] : memref<36x4xf32, #tpu.memory_space<vmem>>, vector<36x4xf32>
    %cst = arith.constant 0.000000e+00 : f32
    %19 = vector.broadcast %cst : f32 to vector<1x4xf32>
    %cst_11 = arith.constant 0.000000e+00 : f32
    %20 = vector.broadcast %cst_11 : f32 to vector<1x4xf32>
    %21 = vector.extract_strided_slice %17 {offsets = [0, 0, 0], sizes = [8, 16, 4], strides = [1, 1, 1]} : vector<10x18x4xf32> to vector<8x16x4xf32>
    %22 = vector.shape_cast %21 : vector<8x16x4xf32> to vector<128x4xf32>
    %23 = vector.extract_strided_slice %17 {offsets = [0, 1, 0], sizes = [8, 16, 4], strides = [1, 1, 1]} : vector<10x18x4xf32> to vector<8x16x4xf32>
    %24 = vector.shape_cast %23 : vector<8x16x4xf32> to vector<128x4xf32>
    %25 = vector.extract_strided_slice %17 {offsets = [0, 2, 0], sizes = [8, 16, 4], strides = [1, 1, 1]} : vector<10x18x4xf32> to vector<8x16x4xf32>
    %26 = vector.shape_cast %25 : vector<8x16x4xf32> to vector<128x4xf32>
    %27 = vector.extract_strided_slice %17 {offsets = [1, 0, 0], sizes = [8, 16, 4], strides = [1, 1, 1]} : vector<10x18x4xf32> to vector<8x16x4xf32>
    %28 = vector.shape_cast %27 : vector<8x16x4xf32> to vector<128x4xf32>
    %29 = vector.extract_strided_slice %17 {offsets = [1, 1, 0], sizes = [8, 16, 4], strides = [1, 1, 1]} : vector<10x18x4xf32> to vector<8x16x4xf32>
    %30 = vector.shape_cast %29 : vector<8x16x4xf32> to vector<128x4xf32>
    %31 = vector.extract_strided_slice %17 {offsets = [1, 2, 0], sizes = [8, 16, 4], strides = [1, 1, 1]} : vector<10x18x4xf32> to vector<8x16x4xf32>
    %32 = vector.shape_cast %31 : vector<8x16x4xf32> to vector<128x4xf32>
    %33 = vector.extract_strided_slice %17 {offsets = [2, 0, 0], sizes = [8, 16, 4], strides = [1, 1, 1]} : vector<10x18x4xf32> to vector<8x16x4xf32>
    %34 = vector.shape_cast %33 : vector<8x16x4xf32> to vector<128x4xf32>
    %35 = vector.extract_strided_slice %17 {offsets = [2, 1, 0], sizes = [8, 16, 4], strides = [1, 1, 1]} : vector<10x18x4xf32> to vector<8x16x4xf32>
    %36 = vector.shape_cast %35 : vector<8x16x4xf32> to vector<128x4xf32>
    %37 = vector.extract_strided_slice %17 {offsets = [2, 2, 0], sizes = [8, 16, 4], strides = [1, 1, 1]} : vector<10x18x4xf32> to vector<8x16x4xf32>
    %38 = vector.shape_cast %37 : vector<8x16x4xf32> to vector<128x4xf32>
    %39 = tpu.concatenate %22, %24, %26, %28, %30, %32, %34, %36, %38 in 1 : vector<128x4xf32>, vector<128x4xf32>, vector<128x4xf32>, vector<128x4xf32>, vector<128x4xf32>, vector<128x4xf32>, vector<128x4xf32>, vector<128x4xf32>, vector<128x4xf32> -> vector<128x36xf32>
    %cst_12 = arith.constant dense<0.000000e+00> : vector<128x4xf32>
    %40 = tpu.matmul %39, %18, %cst_12 {dimension_numbers = #tpu.dot_dimension_numbers<[1], [0], [0], [1], [0, 0, 1, 1], [], []>} : vector<128x36xf32>, vector<36x4xf32>, vector<128x4xf32> -> vector<128x4xf32>
    %41 = vector.shape_cast %40 : vector<128x4xf32> to vector<1x8x16x4xf32>
    %c0_13 = arith.constant 0 : index
    %c0_14 = arith.constant 0 : index
    %c0_15 = arith.constant 0 : index
    %c0_16 = arith.constant 0 : index
    %42 = vector.load %arg4[%c0_13, %c0_14, %c0_15, %c0_16] : memref<1x8x16x4xf32, #tpu.memory_space<vmem>>, vector<1x8x16x4xf32>
    tpu.vector_store %arg4[%c0_13, %c0_14, %c0_15, %c0_16], %41 {strides = array<i32>} : memref<1x8x16x4xf32, #tpu.memory_space<vmem>>, vector<1x8x16x4xf32>,
    %cst_17 = arith.constant dense<0.000000e+00> : vector<4xf32>
    %43 = vector.multi_reduction <add>, %40, %cst_17 [0] : vector<128x4xf32> to vector<4xf32>
    %44 = vector.shape_cast %43 : vector<4xf32> to vector<1x4xf32>
    %45 = arith.addf %19, %44 : vector<1x4xf32>
    %46 = arith.mulf %40, %40 : vector<128x4xf32>
    %cst_18 = arith.constant dense<0.000000e+00> : vector<4xf32>
    %47 = vector.multi_reduction <add>, %46, %cst_18 [0] : vector<128x4xf32> to vector<4xf32>
    %48 = vector.shape_cast %47 : vector<4xf32> to vector<1x4xf32>
    %49 = arith.addf %20, %48 : vector<1x4xf32>
    %50 = tpu.concatenate %45, %49 in 0 : vector<1x4xf32>, vector<1x4xf32> -> vector<2x4xf32>
    %51 = vector.shape_cast %50 : vector<2x4xf32> to vector<1x1x2x4xf32>
    %c0_19 = arith.constant 0 : index
    %c0_20 = arith.constant 0 : index
    %c0_21 = arith.constant 0 : index
    %c0_22 = arith.constant 0 : index
    %52 = vector.load %arg5[%c0_19, %c0_20, %c0_21, %c0_22] : memref<1x1x2x4xf32, #tpu.memory_space<vmem>>, vector<1x1x2x4xf32>
    tpu.vector_store %arg5[%c0_19, %c0_20, %c0_21, %c0_22], %51 {strides = array<i32>} : memref<1x1x2x4xf32, #tpu.memory_space<vmem>>, vector<1x1x2x4xf32>,
    return
  }
  func.func @transform_0(%arg0: i32, %arg1: i32) -> (i32, i32, i32, i32) {
    %c0_i32 = arith.constant 0 : i32
    %c0_i32_0 = arith.constant 0 : i32
    %c0_i32_1 = arith.constant 0 : i32
    %c0_i32_2 = arith.constant 0 : i32
    return %arg0, %c0_i32, %c0_i32_0, %c0_i32_1 : i32, i32, i32, i32
  }
  func.func @transform_1(%arg0: i32, %arg1: i32) -> (i32, i32) {
    %c0_i32 = arith.constant 0 : i32
    %c0_i32_0 = arith.constant 0 : i32
    %c0_i32_1 = arith.constant 0 : i32
    return %c0_i32, %c0_i32_0 : i32, i32
  }
  func.func @transform_2(%arg0: i32, %arg1: i32) -> (i32, i32, i32, i32) {
    %c0_i32 = arith.constant 0 : i32
    %c0_i32_0 = arith.constant 0 : i32
    %c0_i32_1 = arith.constant 0 : i32
    return %arg0, %arg1, %c0_i32, %c0_i32_0 : i32, i32, i32, i32
  }
  func.func @transform_3(%arg0: i32, %arg1: i32) -> (i32, i32, i32, i32) {
    %c0_i32 = arith.constant 0 : i32
    %c0_i32_0 = arith.constant 0 : i32
    %c0_i32_1 = arith.constant 0 : i32
    return %arg0, %arg1, %c0_i32, %c0_i32_0 : i32, i32, i32, i32
  }
}

module attributes {stable_mosaic.version = 11 : i64} {
  func.func @_bn_add_relu_kernel(%arg0: i32, %arg1: i32, %arg2: memref<1x8x16x4xf32, #tpu.memory_space<vmem>>, %arg3: memref<1x4xf32, #tpu.memory_space<vmem>>, %arg4: memref<1x4xf32, #tpu.memory_space<vmem>>, %arg5: memref<1x8x16x4xf32, #tpu.memory_space<vmem>>, %arg6: memref<1x8x16x4xf32, #tpu.memory_space<vmem>>) attributes {dimension_semantics = [#tpu.dimension_semantics<parallel>, #tpu.dimension_semantics<parallel>], iteration_bounds = array<i64: 2, 2>, scalar_prefetch = 0 : i64, scratch_operands = 0 : i64, tpu.core_type = #tpu.core_type<tc>, window_params = [{transform_indices = @transform_0, window_bounds = array<i64: 1, 8, 16, 4>}, {pipeline_mode = #tpu.pipeline_mode<synchronous>, transform_indices = @transform_1, window_bounds = array<i64: 1, 4>}, {pipeline_mode = #tpu.pipeline_mode<synchronous>, transform_indices = @transform_2, window_bounds = array<i64: 1, 4>}, {transform_indices = @transform_3, window_bounds = array<i64: 1, 8, 16, 4>}, {transform_indices = @transform_4, window_bounds = array<i64: 1, 8, 16, 4>}]} {
    %c0 = arith.constant 0 : index
    %c0_0 = arith.constant 0 : index
    %c0_1 = arith.constant 0 : index
    %c0_2 = arith.constant 0 : index
    %0 = vector.load %arg2[%c0, %c0_0, %c0_1, %c0_2] : memref<1x8x16x4xf32, #tpu.memory_space<vmem>>, vector<1x8x16x4xf32>
    %c0_3 = arith.constant 0 : index
    %c0_4 = arith.constant 0 : index
    %1 = vector.load %arg3[%c0_3, %c0_4] : memref<1x4xf32, #tpu.memory_space<vmem>>, vector<1x4xf32>
    %2 = vector.shape_cast %1 : vector<1x4xf32> to vector<1x1x1x4xf32>
    %3 = vector.broadcast %2 : vector<1x1x1x4xf32> to vector<1x8x16x4xf32>
    %4 = arith.mulf %0, %3 : vector<1x8x16x4xf32>
    %c0_5 = arith.constant 0 : index
    %c0_6 = arith.constant 0 : index
    %5 = vector.load %arg4[%c0_5, %c0_6] : memref<1x4xf32, #tpu.memory_space<vmem>>, vector<1x4xf32>
    %6 = vector.shape_cast %5 : vector<1x4xf32> to vector<1x1x1x4xf32>
    %7 = vector.broadcast %6 : vector<1x1x1x4xf32> to vector<1x8x16x4xf32>
    %8 = arith.addf %4, %7 : vector<1x8x16x4xf32>
    %c0_7 = arith.constant 0 : index
    %c0_8 = arith.constant 0 : index
    %c0_9 = arith.constant 0 : index
    %c0_10 = arith.constant 0 : index
    %9 = vector.load %arg5[%c0_7, %c0_8, %c0_9, %c0_10] : memref<1x8x16x4xf32, #tpu.memory_space<vmem>>, vector<1x8x16x4xf32>
    %10 = arith.addf %8, %9 : vector<1x8x16x4xf32>
    %cst = arith.constant 0.000000e+00 : f32
    %11 = vector.broadcast %cst : f32 to vector<1x8x16x4xf32>
    %12 = arith.maximumf %10, %11 : vector<1x8x16x4xf32>
    %c0_11 = arith.constant 0 : index
    %c0_12 = arith.constant 0 : index
    %c0_13 = arith.constant 0 : index
    %c0_14 = arith.constant 0 : index
    %13 = vector.load %arg6[%c0_11, %c0_12, %c0_13, %c0_14] : memref<1x8x16x4xf32, #tpu.memory_space<vmem>>, vector<1x8x16x4xf32>
    tpu.vector_store %arg6[%c0_11, %c0_12, %c0_13, %c0_14], %12 {strides = array<i32>} : memref<1x8x16x4xf32, #tpu.memory_space<vmem>>, vector<1x8x16x4xf32>,
    return
  }
  func.func @transform_0(%arg0: i32, %arg1: i32) -> (i32, i32, i32, i32) {
    %c0_i32 = arith.constant 0 : i32
    %c0_i32_0 = arith.constant 0 : i32
    %c0_i32_1 = arith.constant 0 : i32
    return %arg0, %arg1, %c0_i32, %c0_i32_0 : i32, i32, i32, i32
  }
  func.func @transform_1(%arg0: i32, %arg1: i32) -> (i32, i32) {
    %c0_i32 = arith.constant 0 : i32
    %c0_i32_0 = arith.constant 0 : i32
    %c0_i32_1 = arith.constant 0 : i32
    return %c0_i32, %c0_i32_0 : i32, i32
  }
  func.func @transform_2(%arg0: i32, %arg1: i32) -> (i32, i32) {
    %c0_i32 = arith.constant 0 : i32
    %c0_i32_0 = arith.constant 0 : i32
    %c0_i32_1 = arith.constant 0 : i32
    return %c0_i32, %c0_i32_0 : i32, i32
  }
  func.func @transform_3(%arg0: i32, %arg1: i32) -> (i32, i32, i32, i32) {
    %c0_i32 = arith.constant 0 : i32
    %c0_i32_0 = arith.constant 0 : i32
    %c0_i32_1 = arith.constant 0 : i32
    return %arg0, %arg1, %c0_i32, %c0_i32_0 : i32, i32, i32, i32
  }
  func.func @transform_4(%arg0: i32, %arg1: i32) -> (i32, i32, i32, i32) {
    %c0_i32 = arith.constant 0 : i32
    %c0_i32_0 = arith.constant 0 : i32
    %c0_i32_1 = arith.constant 0 : i32
    return %arg0, %arg1, %c0_i32, %c0_i32_0 : i32, i32, i32, i32
  }
}

module attributes {stable_mosaic.version = 11 : i64} {
  func.func @_bn_relu_conv_stats_kernel(%arg0: i32, %arg1: i32, %arg2: memref<1x16x16x4xf32, #tpu.memory_space<vmem>>, %arg3: memref<1x4xf32, #tpu.memory_space<vmem>>, %arg4: memref<1x4xf32, #tpu.memory_space<vmem>>, %arg5: memref<36x4xf32, #tpu.memory_space<vmem>>, %arg6: memref<1x8x16x4xf32, #tpu.memory_space<vmem>>, %arg7: memref<1x1x2x4xf32, #tpu.memory_space<vmem>>) attributes {dimension_semantics = [#tpu.dimension_semantics<parallel>, #tpu.dimension_semantics<parallel>], iteration_bounds = array<i64: 2, 2>, scalar_prefetch = 0 : i64, scratch_operands = 0 : i64, tpu.core_type = #tpu.core_type<tc>, window_params = [{transform_indices = @transform_0, window_bounds = array<i64: 1, 16, 16, 4>}, {pipeline_mode = #tpu.pipeline_mode<synchronous>, transform_indices = @transform_1, window_bounds = array<i64: 1, 4>}, {pipeline_mode = #tpu.pipeline_mode<synchronous>, transform_indices = @transform_2, window_bounds = array<i64: 1, 4>}, {pipeline_mode = #tpu.pipeline_mode<synchronous>, transform_indices = @transform_3, window_bounds = array<i64: 36, 4>}, {transform_indices = @transform_4, window_bounds = array<i64: 1, 8, 16, 4>}, {transform_indices = @transform_5, window_bounds = array<i64: 1, 1, 2, 4>}]} {
    %c8_i32 = arith.constant 8 : i32
    %0 = arith.muli %arg1, %c8_i32 : i32
    %c1_i32 = arith.constant 1 : i32
    %1 = arith.subi %0, %c1_i32 : i32
    %c0_i32 = arith.constant 0 : i32
    %2 = arith.maxsi %1, %c0_i32 : i32
    %c8_i32_0 = arith.constant 8 : i32
    %3 = arith.addi %0, %c8_i32_0 : i32
    %c15_i32 = arith.constant 15 : i32
    %4 = arith.minsi %3, %c15_i32 : i32
    %c0 = arith.constant 0 : index
    %5 = arith.index_cast %2 : i32 to index
    %c0_1 = arith.constant 0 : index
    %c0_2 = arith.constant 0 : index
    %6 = vector.load %arg2[%c0, %5, %c0_1, %c0_2] : memref<1x16x16x4xf32, #tpu.memory_space<vmem>>, vector<1x1x16x4xf32>
    %7 = vector.shape_cast %6 : vector<1x1x16x4xf32> to vector<1x16x4xf32>
    %c0_3 = arith.constant 0 : index
    %8 = arith.index_cast %0 : i32 to index
    %c0_4 = arith.constant 0 : index
    %c0_5 = arith.constant 0 : index
    %9 = vector.load %arg2[%c0_3, %8, %c0_4, %c0_5] : memref<1x16x16x4xf32, #tpu.memory_space<vmem>>, vector<1x8x16x4xf32>
    %10 = vector.shape_cast %9 : vector<1x8x16x4xf32> to vector<8x16x4xf32>
    %c0_6 = arith.constant 0 : index
    %11 = arith.index_cast %4 : i32 to index
    %c0_7 = arith.constant 0 : index
    %c0_8 = arith.constant 0 : index
    %12 = vector.load %arg2[%c0_6, %11, %c0_7, %c0_8] : memref<1x16x16x4xf32, #tpu.memory_space<vmem>>, vector<1x1x16x4xf32>
    %13 = vector.shape_cast %12 : vector<1x1x16x4xf32> to vector<1x16x4xf32>
    %14 = tpu.concatenate %7, %10, %13 in 0 : vector<1x16x4xf32>, vector<8x16x4xf32>, vector<1x16x4xf32> -> vector<10x16x4xf32>
    %15 = vector.extract_strided_slice %14 {offsets = [0, 0, 0], sizes = [10, 1, 4], strides = [1, 1, 1]} : vector<10x16x4xf32> to vector<10x1x4xf32>
    %16 = vector.extract_strided_slice %14 {offsets = [0, 15, 0], sizes = [10, 1, 4], strides = [1, 1, 1]} : vector<10x16x4xf32> to vector<10x1x4xf32>
    %17 = tpu.concatenate %15, %14, %16 in 1 : vector<10x1x4xf32>, vector<10x16x4xf32>, vector<10x1x4xf32> -> vector<10x18x4xf32>
    %c0_9 = arith.constant 0 : index
    %c0_10 = arith.constant 0 : index
    %18 = vector.load %arg3[%c0_9, %c0_10] : memref<1x4xf32, #tpu.memory_space<vmem>>, vector<1x4xf32>
    %19 = vector.shape_cast %18 : vector<1x4xf32> to vector<1x1x4xf32>
    %20 = vector.broadcast %19 : vector<1x1x4xf32> to vector<10x18x4xf32>
    %21 = arith.mulf %17, %20 : vector<10x18x4xf32>
    %c0_11 = arith.constant 0 : index
    %c0_12 = arith.constant 0 : index
    %22 = vector.load %arg4[%c0_11, %c0_12] : memref<1x4xf32, #tpu.memory_space<vmem>>, vector<1x4xf32>
    %23 = vector.shape_cast %22 : vector<1x4xf32> to vector<1x1x4xf32>
    %24 = vector.broadcast %23 : vector<1x1x4xf32> to vector<10x18x4xf32>
    %25 = arith.addf %21, %24 : vector<10x18x4xf32>
    %cst = arith.constant 0.000000e+00 : f32
    %26 = vector.broadcast %cst : f32 to vector<10x18x4xf32>
    %27 = arith.maximumf %25, %26 : vector<10x18x4xf32>
    %c0_13 = arith.constant 0 : index
    %c0_14 = arith.constant 0 : index
    %28 = vector.load %arg5[%c0_13, %c0_14] : memref<36x4xf32, #tpu.memory_space<vmem>>, vector<36x4xf32>
    %cst_15 = arith.constant 0.000000e+00 : f32
    %29 = vector.broadcast %cst_15 : f32 to vector<1x4xf32>
    %cst_16 = arith.constant 0.000000e+00 : f32
    %30 = vector.broadcast %cst_16 : f32 to vector<1x4xf32>
    %31 = vector.extract_strided_slice %27 {offsets = [0, 0, 0], sizes = [8, 16, 4], strides = [1, 1, 1]} : vector<10x18x4xf32> to vector<8x16x4xf32>
    %32 = vector.shape_cast %31 : vector<8x16x4xf32> to vector<128x4xf32>
    %33 = vector.extract_strided_slice %27 {offsets = [0, 1, 0], sizes = [8, 16, 4], strides = [1, 1, 1]} : vector<10x18x4xf32> to vector<8x16x4xf32>
    %34 = vector.shape_cast %33 : vector<8x16x4xf32> to vector<128x4xf32>
    %35 = vector.extract_strided_slice %27 {offsets = [0, 2, 0], sizes = [8, 16, 4], strides = [1, 1, 1]} : vector<10x18x4xf32> to vector<8x16x4xf32>
    %36 = vector.shape_cast %35 : vector<8x16x4xf32> to vector<128x4xf32>
    %37 = vector.extract_strided_slice %27 {offsets = [1, 0, 0], sizes = [8, 16, 4], strides = [1, 1, 1]} : vector<10x18x4xf32> to vector<8x16x4xf32>
    %38 = vector.shape_cast %37 : vector<8x16x4xf32> to vector<128x4xf32>
    %39 = vector.extract_strided_slice %27 {offsets = [1, 1, 0], sizes = [8, 16, 4], strides = [1, 1, 1]} : vector<10x18x4xf32> to vector<8x16x4xf32>
    %40 = vector.shape_cast %39 : vector<8x16x4xf32> to vector<128x4xf32>
    %41 = vector.extract_strided_slice %27 {offsets = [1, 2, 0], sizes = [8, 16, 4], strides = [1, 1, 1]} : vector<10x18x4xf32> to vector<8x16x4xf32>
    %42 = vector.shape_cast %41 : vector<8x16x4xf32> to vector<128x4xf32>
    %43 = vector.extract_strided_slice %27 {offsets = [2, 0, 0], sizes = [8, 16, 4], strides = [1, 1, 1]} : vector<10x18x4xf32> to vector<8x16x4xf32>
    %44 = vector.shape_cast %43 : vector<8x16x4xf32> to vector<128x4xf32>
    %45 = vector.extract_strided_slice %27 {offsets = [2, 1, 0], sizes = [8, 16, 4], strides = [1, 1, 1]} : vector<10x18x4xf32> to vector<8x16x4xf32>
    %46 = vector.shape_cast %45 : vector<8x16x4xf32> to vector<128x4xf32>
    %47 = vector.extract_strided_slice %27 {offsets = [2, 2, 0], sizes = [8, 16, 4], strides = [1, 1, 1]} : vector<10x18x4xf32> to vector<8x16x4xf32>
    %48 = vector.shape_cast %47 : vector<8x16x4xf32> to vector<128x4xf32>
    %49 = tpu.concatenate %32, %34, %36, %38, %40, %42, %44, %46, %48 in 1 : vector<128x4xf32>, vector<128x4xf32>, vector<128x4xf32>, vector<128x4xf32>, vector<128x4xf32>, vector<128x4xf32>, vector<128x4xf32>, vector<128x4xf32>, vector<128x4xf32> -> vector<128x36xf32>
    %cst_17 = arith.constant dense<0.000000e+00> : vector<128x4xf32>
    %50 = tpu.matmul %49, %28, %cst_17 {dimension_numbers = #tpu.dot_dimension_numbers<[1], [0], [0], [1], [0, 0, 1, 1], [], []>} : vector<128x36xf32>, vector<36x4xf32>, vector<128x4xf32> -> vector<128x4xf32>
    %51 = vector.shape_cast %50 : vector<128x4xf32> to vector<1x8x16x4xf32>
    %c0_18 = arith.constant 0 : index
    %c0_19 = arith.constant 0 : index
    %c0_20 = arith.constant 0 : index
    %c0_21 = arith.constant 0 : index
    %52 = vector.load %arg6[%c0_18, %c0_19, %c0_20, %c0_21] : memref<1x8x16x4xf32, #tpu.memory_space<vmem>>, vector<1x8x16x4xf32>
    tpu.vector_store %arg6[%c0_18, %c0_19, %c0_20, %c0_21], %51 {strides = array<i32>} : memref<1x8x16x4xf32, #tpu.memory_space<vmem>>, vector<1x8x16x4xf32>,
    %cst_22 = arith.constant dense<0.000000e+00> : vector<4xf32>
    %53 = vector.multi_reduction <add>, %50, %cst_22 [0] : vector<128x4xf32> to vector<4xf32>
    %54 = vector.shape_cast %53 : vector<4xf32> to vector<1x4xf32>
    %55 = arith.addf %29, %54 : vector<1x4xf32>
    %56 = arith.mulf %50, %50 : vector<128x4xf32>
    %cst_23 = arith.constant dense<0.000000e+00> : vector<4xf32>
    %57 = vector.multi_reduction <add>, %56, %cst_23 [0] : vector<128x4xf32> to vector<4xf32>
    %58 = vector.shape_cast %57 : vector<4xf32> to vector<1x4xf32>
    %59 = arith.addf %30, %58 : vector<1x4xf32>
    %60 = tpu.concatenate %55, %59 in 0 : vector<1x4xf32>, vector<1x4xf32> -> vector<2x4xf32>
    %61 = vector.shape_cast %60 : vector<2x4xf32> to vector<1x1x2x4xf32>
    %c0_24 = arith.constant 0 : index
    %c0_25 = arith.constant 0 : index
    %c0_26 = arith.constant 0 : index
    %c0_27 = arith.constant 0 : index
    %62 = vector.load %arg7[%c0_24, %c0_25, %c0_26, %c0_27] : memref<1x1x2x4xf32, #tpu.memory_space<vmem>>, vector<1x1x2x4xf32>
    tpu.vector_store %arg7[%c0_24, %c0_25, %c0_26, %c0_27], %61 {strides = array<i32>} : memref<1x1x2x4xf32, #tpu.memory_space<vmem>>, vector<1x1x2x4xf32>,
    return
  }
  func.func @transform_0(%arg0: i32, %arg1: i32) -> (i32, i32, i32, i32) {
    %c0_i32 = arith.constant 0 : i32
    %c0_i32_0 = arith.constant 0 : i32
    %c0_i32_1 = arith.constant 0 : i32
    %c0_i32_2 = arith.constant 0 : i32
    return %arg0, %c0_i32, %c0_i32_0, %c0_i32_1 : i32, i32, i32, i32
  }
  func.func @transform_1(%arg0: i32, %arg1: i32) -> (i32, i32) {
    %c0_i32 = arith.constant 0 : i32
    %c0_i32_0 = arith.constant 0 : i32
    %c0_i32_1 = arith.constant 0 : i32
    return %c0_i32, %c0_i32_0 : i32, i32
  }
  func.func @transform_2(%arg0: i32, %arg1: i32) -> (i32, i32) {
    %c0_i32 = arith.constant 0 : i32
    %c0_i32_0 = arith.constant 0 : i32
    %c0_i32_1 = arith.constant 0 : i32
    return %c0_i32, %c0_i32_0 : i32, i32
  }
  func.func @transform_3(%arg0: i32, %arg1: i32) -> (i32, i32) {
    %c0_i32 = arith.constant 0 : i32
    %c0_i32_0 = arith.constant 0 : i32
    %c0_i32_1 = arith.constant 0 : i32
    return %c0_i32, %c0_i32_0 : i32, i32
  }
  func.func @transform_4(%arg0: i32, %arg1: i32) -> (i32, i32, i32, i32) {
    %c0_i32 = arith.constant 0 : i32
    %c0_i32_0 = arith.constant 0 : i32
    %c0_i32_1 = arith.constant 0 : i32
    return %arg0, %arg1, %c0_i32, %c0_i32_0 : i32, i32, i32, i32
  }
  func.func @transform_5(%arg0: i32, %arg1: i32) -> (i32, i32, i32, i32) {
    %c0_i32 = arith.constant 0 : i32
    %c0_i32_0 = arith.constant 0 : i32
    %c0_i32_1 = arith.constant 0 : i32
    return %arg0, %arg1, %c0_i32, %c0_i32_0 : i32, i32, i32, i32
  }
}

</mosaic_0001>

<llo_original>
// kernel: resblock_forward.5
$region0: #{resblock_forward.5}
  #allocation0 [shape = 'u32[]', space=smem, size = 0x4, offset = 0x4, fixed_abs, tag = 'smem constant byte address 0x4 - core index']
  #allocation1 [shape = 'u32[72,128]{1,0:T(1,128)}', space=vmem, size = 0x9000, scoped, tag = 'internal scratch']
  %s0 = inlined_call_operand.vmem [shape: f32[2,16,16,4], index: 0, kind: input, shape index: {}]
  %s1 = inlined_call_operand.vmem [shape: f32[1,4], index: 1, kind: input, shape index: {}]
  %s2 = inlined_call_operand.vmem [shape: f32[1,4], index: 2, kind: input, shape index: {}]
  %s3 = inlined_call_operand.vmem [shape: f32[2,16,16,4], index: 3, kind: input, shape index: {}]
  %s4 = inlined_call_operand.vmem [shape: f32[2,16,16,4], index: 4, kind: output, shape index: {}]
  %s5 = sld [smem:[#allocation0]]
  $region49: #{resblock_forward.5} parent=0
    _
  %s7 = ssub.s32 1, %s5
  %s8 = scalar_select 0, %s7, %s5
  loop: start=0, step=1, limit=6
  $region2: #{resblock_forward.5} parent=0 // loop_pre_header
    _
  $region3: #{resblock_forward.5} parent=0 // loop_header
    %s10 = sphi 0, %s14
    %p11 = scmp.ge.s32.totalorder %s10, 6
    %s17 = sphi 0, %s29
    %s18 = sphi 0, %s25
    %s19 = sphi 0, %s17
    %s20 = sphi 0, %s18
    %s21 = sphi 0, %s19
    %s22 = sphi 0, %s20
    %s34 = sphi 0, %s36
    %s37 = sphi 0, %s34
    %s38 = sphi 0, %s37
    %s54 = sphi 0, %s38
    %s58 = sphi 0, %s58
    %s60 = sphi 0, %s58
    %s61 = sphi 0, %s60
    %s75 = sphi 0, %s61
    %s79 = sphi 0, %s79
    %s81 = sphi 0, %s79
    %s82 = sphi 0, %s81
    %s96 = sphi 0, %s82
    %s104 = sphi 0, %s106
    %s107 = sphi 0, %s104
    %s108 = sphi 0, %s107
    %s124 = sphi 0, %s108
    %s132 = sphi 0, %s134
    %s135 = sphi 0, %s132
    %s136 = sphi 0, %s135
    %s152 = sphi 0, %s136
  $region4: #{resblock_forward.5} parent=0 // loop_header_branch
    %13 = sbr.rel (%p11) target = $region8
  $region5: #{resblock_forward.5} parent=0 // loop_body
    %s15 = ssub.s32 %s10, 1
    %s16 = ssub.s32 %s10, 2
    %s23 = sadd.s32 1, %s18
    %p24 = scmp.ge.s32.totalorder %s23, 2
    %s25 = scalar_select %p24, 0, %s23
    %s26 = sadd.s32 1, %s17
    %s27 = scalar_select %p24, %s26, %s17
    %p28 = scmp.ge.s32.totalorder %s27, 2
    %s29 = scalar_select %p28, 0, %s27
    %s30 = ssub.s32 %s17, %s29
    %s31 = ssub.s32 %s18, %s25
    %s32 = sor.u32 %s30, %s31
    %p33 = scmp.eq.s32.totalorder %s32, 0
    %s35 = sadd.s32 %s34, 1
    %s36 = scalar_select %p33, %s34, %s35
    %p39 = pneg %p33
    %p40 = scmp.eq.s32.totalorder %s10, 3
    %p41 = por %p39, %p40
    %p42 = scmp.ne.s32.totalorder %s34, %s37
    %p43 = scmp.eq.s32.totalorder %s10, 0
    %p44 = por %p42, %p43
    %p45 = scmp.ne.s32.totalorder %s34, %s37
    %p46 = scmp.eq.s32.totalorder %s15, 3
    %p47 = por %p45, %p46
    %p48 = scmp.ne.s32.totalorder %s37, %s38
    %p49 = scmp.eq.s32.totalorder %s15, 0
    %p50 = por %p48, %p49
    %p51 = scmp.ne.s32.totalorder %s37, %s38
    %p52 = scmp.eq.s32.totalorder %s16, 3
    %p53 = por %p51, %p52
    %p55 = scmp.ne.s32.totalorder %s38, %s54
    %p56 = scmp.eq.s32.totalorder %s16, 0
    %p57 = por %p55, %p56
    %s59 = sadd.s32 %s58, 1
    %p62 = scmp.eq.s32.totalorder %s10, 3
    %p63 = scmp.ne.s32.totalorder %s58, %s60
    %p64 = scmp.eq.s32.totalorder %s10, 0
    %p65 = por %p63, %p64
    %p66 = scmp.ne.s32.totalorder %s58, %s60
    %p67 = scmp.eq.s32.totalorder %s15, 3
    %p68 = por %p66, %p67
    %p69 = scmp.ne.s32.totalorder %s60, %s61
    %p70 = scmp.eq.s32.totalorder %s15, 0
    %p71 = por %p69, %p70
    %p72 = scmp.ne.s32.totalorder %s60, %s61
    %p73 = scmp.eq.s32.totalorder %s16, 3
    %p74 = por %p72, %p73
    %p76 = scmp.ne.s32.totalorder %s61, %s75
    %p77 = scmp.eq.s32.totalorder %s16, 0
    %p78 = por %p76, %p77
    %s80 = sadd.s32 %s79, 1
    %p83 = scmp.eq.s32.totalorder %s10, 3
    %p84 = scmp.ne.s32.totalorder %s79, %s81
    %p85 = scmp.eq.s32.totalorder %s10, 0
    %p86 = por %p84, %p85
    %p87 = scmp.ne.s32.totalorder %s79, %s81
    %p88 = scmp.eq.s32.totalorder %s15, 3
    %p89 = por %p87, %p88
    %p90 = scmp.ne.s32.totalorder %s81, %s82
    %p91 = scmp.eq.s32.totalorder %s15, 0
    %p92 = por %p90, %p91
    %p93 = scmp.ne.s32.totalorder %s81, %s82
    %p94 = scmp.eq.s32.totalorder %s16, 3
    %p95 = por %p93, %p94
    %p97 = scmp.ne.s32.totalorder %s82, %s96
    %p98 = scmp.eq.s32.totalorder %s16, 0
    %p99 = por %p97, %p98
    %s100 = ssub.s32 %s17, %s29
    %s101 = ssub.s32 %s18, %s25
    %s102 = sor.u32 %s100, %s101
    %p103 = scmp.eq.s32.totalorder %s102, 0
    %s105 = sadd.s32 %s104, 1
    %s106 = scalar_select %p103, %s104, %s105
    %p109 = pneg %p103
    %p110 = scmp.eq.s32.totalorder %s10, 3
    %p111 = por %p109, %p110
    %p112 = scmp.ne.s32.totalorder %s104, %s107
    %p113 = scmp.eq.s32.totalorder %s10, 0
    %p114 = por %p112, %p113
    %p115 = scmp.ne.s32.totalorder %s104, %s107
    %p116 = scmp.eq.s32.totalorder %s15, 3
    %p117 = por %p115, %p116
    %p118 = scmp.ne.s32.totalorder %s107, %s108
    %p119 = scmp.eq.s32.totalorder %s15, 0
    %p120 = por %p118, %p119
    %p121 = scmp.ne.s32.totalorder %s107, %s108
    %p122 = scmp.eq.s32.totalorder %s16, 3
    %p123 = por %p121, %p122
    %p125 = scmp.ne.s32.totalorder %s108, %s124
    %p126 = scmp.eq.s32.totalorder %s16, 0
    %p127 = por %p125, %p126
    %s128 = ssub.s32 %s17, %s29
    %s129 = ssub.s32 %s18, %s25
    %s130 = sor.u32 %s128, %s129
    %p131 = scmp.eq.s32.totalorder %s130, 0
    %s133 = sadd.s32 %s132, 1
    %s134 = scalar_select %p131, %s132, %s133
    %p137 = pneg %p131
    %p138 = scmp.eq.s32.totalorder %s10, 3
    %p139 = por %p137, %p138
    %p140 = scmp.ne.s32.totalorder %s132, %s135
    %p141 = scmp.eq.s32.totalorder %s10, 0
    %p142 = por %p140, %p141
    %p143 = scmp.ne.s32.totalorder %s132, %s135
    %p144 = scmp.eq.s32.totalorder %s15, 3
    %p145 = por %p143, %p144
    %p146 = scmp.ne.s32.totalorder %s135, %s136
    %p147 = scmp.eq.s32.totalorder %s15, 0
    %p148 = por %p146, %p147
    %p149 = scmp.ne.s32.totalorder %s135, %s136
    %p150 = scmp.eq.s32.totalorder %s16, 3
    %p151 = por %p149, %p150
    %p153 = scmp.ne.s32.totalorder %s136, %s152
    %p154 = scmp.eq.s32.totalorder %s16, 0
    %p155 = por %p153, %p154
    %p156 = scmp.le.s32.totalorder 1, %s10
    %p157 = scmp.lt.s32.totalorder %s10, 5
    %p158 = pnand %p156, %p157
    %p159 = pneg %p158
    // Predicated region
    $region9: #{resblock_forward.5} parent=5 // pred_check
      _
    $region10: #{resblock_forward.5} parent=5 // pred_check_branch
      %161 = sbr.rel (%p158) target = $region12
    $region11: #{resblock_forward.5} parent=5 // pred_region
      %s162 = ssub.s32 %s10, 1
      // Predicated region
      $region13: #{resblock_forward.5} parent=11 // pred_check
        %p163 = pneg %p71
      $region14: #{resblock_forward.5} parent=11 // pred_check_branch
        %165 = sbr.rel (%p163) target = $region16
      $region15: #{resblock_forward.5} parent=11 // pred_region
        _
      $region16: #{resblock_forward.5} parent=11 // pred_fallthru
        _
      // Predicated region
      $region17: #{resblock_forward.5} parent=11 // pred_check
        %p166 = pneg %p92
      $region18: #{resblock_forward.5} parent=11 // pred_check_branch
        %168 = sbr.rel (%p166) target = $region20
      $region19: #{resblock_forward.5} parent=11 // pred_region
        _
      $region20: #{resblock_forward.5} parent=11 // pred_fallthru
        _
    $region12: #{resblock_forward.5} parent=5 // pred_fallthru
      _
    %p169 = scmp.lt.s32.totalorder %s10, 4
    // Predicated region
    $region21: #{resblock_forward.5} parent=5 // pred_check
      %p170 = pneg %p169
    $region22: #{resblock_forward.5} parent=5 // pred_check_branch
      %172 = sbr.rel (%p170) target = $region24
    $region23: #{resblock_forward.5} parent=5 // pred_region
      // Predicated region
      $region25: #{resblock_forward.5} parent=23 // pred_check
        %p173 = pneg %p44
      $region26: #{resblock_forward.5} parent=23 // pred_check_branch
        %175 = sbr.rel (%p173) target = $region28
      $region27: #{resblock_forward.5} parent=23 // pred_region
        %s176 = smul.u32 8, %s18
        %p177 = scmp.lt.s32.totalorder %s17, 1
        %s178 = scalar_select %p177, %s17, 1
        %p179 = scmp.lt.s32.totalorder %s176, 15
        %s180 = scalar_select %p179, %s176, 15
        %s181 = smul.addr %s180, 2
        %s182 = smul.addr %s178, 32
        %s183 = sadd.s32 %s181, %s182
        %s184 = smul.addr %s183, 8
        %s185 = scalar_lea.vmem %s0, %s184
        %s186 = smul.u32 8, %s18
      $region28: #{resblock_forward.5} parent=23 // pred_fallthru
        _
      // Predicated region
      $region29: #{resblock_forward.5} parent=23 // pred_check
        %p187 = pneg %p114
      $region30: #{resblock_forward.5} parent=23 // pred_check_branch
        %189 = sbr.rel (%p187) target = $region32
      $region31: #{resblock_forward.5} parent=23 // pred_region
        %s190 = smul.u32 8, %s18
        %p191 = scmp.lt.s32.totalorder %s17, 1
        %s192 = scalar_select %p191, %s17, 1
        %p193 = scmp.lt.s32.totalorder %s190, 15
        %s194 = scalar_select %p193, %s190, 15
        %s195 = smul.addr %s194, 2
        %s196 = smul.addr %s192, 32
        %s197 = sadd.s32 %s195, %s196
        %s198 = smul.addr %s197, 8
        %s199 = scalar_lea.vmem %s3, %s198
        %s200 = smul.u32 8, %s18
      $region32: #{resblock_forward.5} parent=23 // pred_fallthru
        _
    $region24: #{resblock_forward.5} parent=5 // pred_fallthru
      _
    %p201 = scmp.le.s32.totalorder 1, %s10
    %p202 = scmp.lt.s32.totalorder %s10, 5
    %p203 = pnand %p201, %p202
    %p204 = pneg %p203
    // Predicated region
    $region33: #{resblock_forward.5} parent=5 // pred_check
      _
    $region34: #{resblock_forward.5} parent=5 // pred_check_branch
      %206 = sbr.rel (%p203) target = $region36
    $region35: #{resblock_forward.5} parent=5 // pred_region
      %s207 = ssub.s32 %s10, 1
      %s208 = smul.u32 8, %s20
      %p209 = scmp.lt.s32.totalorder %s19, 1
      %s210 = scalar_select %p209, %s19, 1
      %p211 = scmp.lt.s32.totalorder %s208, 15
      %s212 = scalar_select %p211, %s208, 15
      %s213 = smul.addr %s212, 2
      %s214 = smul.addr %s210, 32
      %s215 = sadd.s32 %s213, %s214
      %s216 = smul.addr %s215, 8
      %s217 = scalar_lea.vmem %s0, %s216
      %p218 = pneg %p50
      %p219 = pneg %p47
      %p220 = pneg %p71
      %p221 = pneg %p68
      %p222 = pneg %p92
      %p223 = pneg %p89
      %s224 = smul.u32 8, %s20
      %p225 = scmp.lt.s32.totalorder %s19, 1
      %s226 = scalar_select %p225, %s19, 1
      %p227 = scmp.lt.s32.totalorder %s224, 15
      %s228 = scalar_select %p227, %s224, 15
      %s229 = smul.addr %s228, 2
      %s230 = smul.addr %s226, 32
      %s231 = sadd.s32 %s229, %s230
      %s232 = smul.addr %s231, 8
      %s233 = scalar_lea.vmem %s3, %s232
      %p234 = pneg %p120
      %p235 = pneg %p117
      %p236 = pneg %p148
      %p237 = pneg %p145
      %s238 = smul.u32 8, %s20
      %p239 = scmp.lt.s32.totalorder %s19, 1
      %s240 = scalar_select %p239, %s19, 1
      %p241 = scmp.lt.s32.totalorder %s238, 15
      %s242 = scalar_select %p241, %s238, 15
      %s243 = smul.addr %s242, 2
      %s244 = smul.addr %s240, 32
      %s245 = sadd.s32 %s243, %s244
      %s246 = smul.addr %s245, 8
      %s247 = scalar_lea.vmem %s4, %s246
      %s248 = smul.u32 8, %s20
      %p249 = scmp.lt.s32.totalorder %s19, 1
      %s250 = scalar_select %p249, %s19, 1
      %p251 = scmp.lt.s32.totalorder %s248, 15
      %s252 = scalar_select %p251, %s248, 15
      %s253 = smul.addr %s252, 2
      %s254 = smul.addr %s250, 32
      %s255 = sadd.s32 %s253, %s254
      %s256 = smul.addr %s255, 8
      %s257 = scalar_lea.vmem %s0, %s256
      %s258 = smul.u32 8, %s20
      %s259 = smul.u32 8, %s20
      %p260 = scmp.lt.s32.totalorder %s19, 1
      %s261 = scalar_select %p260, %s19, 1
      %p262 = scmp.lt.s32.totalorder %s259, 15
      %s263 = scalar_select %p262, %s259, 15
      %s264 = smul.addr %s263, 2
      %s265 = smul.addr %s261, 32
      %s266 = sadd.s32 %s264, %s265
      %s267 = smul.addr %s266, 8
      %s268 = scalar_lea.vmem %s3, %s267
      %s269 = smul.u32 8, %s20
      %s270 = smul.u32 8, %s20
      %p271 = scmp.lt.s32.totalorder %s19, 1
      %s272 = scalar_select %p271, %s19, 1
      %p273 = scmp.lt.s32.totalorder %s270, 15
      %s274 = scalar_select %p273, %s270, 15
      %s275 = smul.addr %s274, 2
      %s276 = smul.addr %s272, 32
      %s277 = sadd.s32 %s275, %s276
      %s278 = smul.addr %s277, 8
      %s279 = scalar_lea.vmem %s4, %s278
      %s280 = smul.u32 8, %s20
      %v281 = vld [vmem:[%s257] sm:$0xff]
      %v282 = vld [vmem:[%s257 + $0x8] sm:$0xff]
      %v283 = vld [vmem:[%s257 + $0x10] sm:$0xff]
      %v284 = vld [vmem:[%s257 + $0x18] sm:$0xff]
      %v285 = vld [vmem:[%s257 + $0x20] sm:$0xff]
      %v286 = vld [vmem:[%s257 + $0x28] sm:$0xff]
      %v287 = vld [vmem:[%s257 + $0x30] sm:$0xff]
      %v288 = vld [vmem:[%s257 + $0x38] sm:$0xff]
      %v289 = vld [vmem:[%s257 + $0x40] sm:$0xff]
      %v290 = vld [vmem:[%s257 + $0x48] sm:$0xff]
      %v291 = vld [vmem:[%s257 + $0x50] sm:$0xff]
      %v292 = vld [vmem:[%s257 + $0x58] sm:$0xff]
      %v293 = vld [vmem:[%s257 + $0x60] sm:$0xff]
      %v294 = vld [vmem:[%s257 + $0x68] sm:$0xff]
      %v295 = vld [vmem:[%s257 + $0x70] sm:$0xff]
      %v296 = vld [vmem:[%s257 + $0x78] sm:$0xff]
      %v297 = vld [vmem:[%s1] sm:$0x1]
      %v299 = vperm.slane %v297, 0
      %v301 = vmul.f32 %v281, %v299
      %v302 = vmul.f32 %v282, %v299
      %v303 = vmul.f32 %v283, %v299
      %v304 = vmul.f32 %v284, %v299
      %v305 = vmul.f32 %v285, %v299
      %v306 = vmul.f32 %v286, %v299
      %v307 = vmul.f32 %v287, %v299
      %v308 = vmul.f32 %v288, %v299
      %v309 = vmul.f32 %v289, %v299
      %v310 = vmul.f32 %v290, %v299
      %v311 = vmul.f32 %v291, %v299
      %v312 = vmul.f32 %v292, %v299
      %v313 = vmul.f32 %v293, %v299
      %v314 = vmul.f32 %v294, %v299
      %v315 = vmul.f32 %v295, %v299
      %v316 = vmul.f32 %v296, %v299
      %v317 = vld [vmem:[%s2] sm:$0x1]
      %v319 = vperm.slane %v317, 0
      %v321 = vadd.f32 %v301, %v319
      %v322 = vadd.f32 %v302, %v319
      %v323 = vadd.f32 %v303, %v319
      %v324 = vadd.f32 %v304, %v319
      %v325 = vadd.f32 %v305, %v319
      %v326 = vadd.f32 %v306, %v319
      %v327 = vadd.f32 %v307, %v319
      %v328 = vadd.f32 %v308, %v319
      %v329 = vadd.f32 %v309, %v319
      %v330 = vadd.f32 %v310, %v319
      %v331 = vadd.f32 %v311, %v319
      %v332 = vadd.f32 %v312, %v319
      %v333 = vadd.f32 %v313, %v319
      %v334 = vadd.f32 %v314, %v319
      %v335 = vadd.f32 %v315, %v319
      %v336 = vadd.f32 %v316, %v319
      %v337 = vld [vmem:[%s268] sm:$0xff]
      %v338 = vld [vmem:[%s268 + $0x8] sm:$0xff]
      %v339 = vld [vmem:[%s268 + $0x10] sm:$0xff]
      %v340 = vld [vmem:[%s268 + $0x18] sm:$0xff]
      %v341 = vld [vmem:[%s268 + $0x20] sm:$0xff]
      %v342 = vld [vmem:[%s268 + $0x28] sm:$0xff]
      %v343 = vld [vmem:[%s268 + $0x30] sm:$0xff]
      %v344 = vld [vmem:[%s268 + $0x38] sm:$0xff]
      %v345 = vld [vmem:[%s268 + $0x40] sm:$0xff]
      %v346 = vld [vmem:[%s268 + $0x48] sm:$0xff]
      %v347 = vld [vmem:[%s268 + $0x50] sm:$0xff]
      %v348 = vld [vmem:[%s268 + $0x58] sm:$0xff]
      %v349 = vld [vmem:[%s268 + $0x60] sm:$0xff]
      %v350 = vld [vmem:[%s268 + $0x68] sm:$0xff]
      %v351 = vld [vmem:[%s268 + $0x70] sm:$0xff]
      %v352 = vld [vmem:[%s268 + $0x78] sm:$0xff]
      %v353 = vadd.f32 %v321, %v337
      %v354 = vadd.f32 %v322, %v338
      %v355 = vadd.f32 %v323, %v339
      %v356 = vadd.f32 %v324, %v340
      %v357 = vadd.f32 %v325, %v341
      %v358 = vadd.f32 %v326, %v342
      %v359 = vadd.f32 %v327, %v343
      %v360 = vadd.f32 %v328, %v344
      %v361 = vadd.f32 %v329, %v345
      %v362 = vadd.f32 %v330, %v346
      %v363 = vadd.f32 %v331, %v347
      %v364 = vadd.f32 %v332, %v348
      %v365 = vadd.f32 %v333, %v349
      %v366 = vadd.f32 %v334, %v350
      %v367 = vadd.f32 %v335, %v351
      %v368 = vadd.f32 %v336, %v352
      %v369 = vmax.f32 %v353, 0.0
      %v370 = vmax.f32 %v354, 0.0
      %v371 = vmax.f32 %v355, 0.0
      %v372 = vmax.f32 %v356, 0.0
      %v373 = vmax.f32 %v357, 0.0
      %v374 = vmax.f32 %v358, 0.0
      %v375 = vmax.f32 %v359, 0.0
      %v376 = vmax.f32 %v360, 0.0
      %v377 = vmax.f32 %v361, 0.0
      %v378 = vmax.f32 %v362, 0.0
      %v379 = vmax.f32 %v363, 0.0
      %v380 = vmax.f32 %v364, 0.0
      %v381 = vmax.f32 %v365, 0.0
      %v382 = vmax.f32 %v366, 0.0
      %v383 = vmax.f32 %v367, 0.0
      %v384 = vmax.f32 %v368, 0.0
      %vm385 = vcmask 31744
      %386 = vst.msk [vmem:[%s279] sm:$0xff] %vm385, %v369
      %387 = vst.msk [vmem:[%s279 + $0x8] sm:$0xff] %vm385, %v370
      %388 = vst.msk [vmem:[%s279 + $0x10] sm:$0xff] %vm385, %v371
      %389 = vst.msk [vmem:[%s279 + $0x18] sm:$0xff] %vm385, %v372
      %390 = vst.msk [vmem:[%s279 + $0x20] sm:$0xff] %vm385, %v373
      %391 = vst.msk [vmem:[%s279 + $0x28] sm:$0xff] %vm385, %v374
      %392 = vst.msk [vmem:[%s279 + $0x30] sm:$0xff] %vm385, %v375
      %393 = vst.msk [vmem:[%s279 + $0x38] sm:$0xff] %vm385, %v376
      %394 = vst.msk [vmem:[%s279 + $0x40] sm:$0xff] %vm385, %v377
      %395 = vst.msk [vmem:[%s279 + $0x48] sm:$0xff] %vm385, %v378
      %396 = vst.msk [vmem:[%s279 + $0x50] sm:$0xff] %vm385, %v379
      %397 = vst.msk [vmem:[%s279 + $0x58] sm:$0xff] %vm385, %v380
      %398 = vst.msk [vmem:[%s279 + $0x60] sm:$0xff] %vm385, %v381
      %399 = vst.msk [vmem:[%s279 + $0x68] sm:$0xff] %vm385, %v382
      %400 = vst.msk [vmem:[%s279 + $0x70] sm:$0xff] %vm385, %v383
      %401 = vst.msk [vmem:[%s279 + $0x78] sm:$0xff] %vm385, %v384
      %s402 = smul.u32 8, %s20
      %p403 = scmp.lt.s32.totalorder %s19, 1
      %s404 = scalar_select %p403, %s19, 1
      %p405 = scmp.lt.s32.totalorder %s402, 15
      %s406 = scalar_select %p405, %s402, 15
      %s407 = smul.addr %s406, 2
      %s408 = smul.addr %s404, 32
      %s409 = sadd.s32 %s407, %s408
      %s410 = smul.addr %s409, 8
      %s411 = scalar_lea.vmem %s4, %s410
      // Predicated region
      $region37: #{resblock_forward.5} parent=35 // pred_check
        %p412 = pneg %p145
      $region38: #{resblock_forward.5} parent=35 // pred_check_branch
        %414 = sbr.rel (%p412) target = $region40
      $region39: #{resblock_forward.5} parent=35 // pred_region
        %s415 = smul.u32 8, %s20
      $region40: #{resblock_forward.5} parent=35 // pred_fallthru
        _
    $region36: #{resblock_forward.5} parent=5 // pred_fallthru
      _
    %p416 = scmp.le.s32.totalorder 2, %s10
    // Predicated region
    $region41: #{resblock_forward.5} parent=5 // pred_check
      %p417 = pneg %p416
    $region42: #{resblock_forward.5} parent=5 // pred_check_branch
      %419 = sbr.rel (%p417) target = $region44
    $region43: #{resblock_forward.5} parent=5 // pred_region
      %s420 = ssub.s32 %s10, 2
      // Predicated region
      $region45: #{resblock_forward.5} parent=43 // pred_check
        %p421 = pneg %p151
      $region46: #{resblock_forward.5} parent=43 // pred_check_branch
        %423 = sbr.rel (%p421) target = $region48
      $region47: #{resblock_forward.5} parent=43 // pred_region
        %s424 = smul.u32 8, %s22
        %p425 = scmp.lt.s32.totalorder %s21, 1
        %s426 = scalar_select %p425, %s21, 1
        %p427 = scmp.lt.s32.totalorder %s424, 15
        %s428 = scalar_select %p427, %s424, 15
        %s429 = smul.addr %s428, 2
        %s430 = smul.addr %s426, 32
        %s431 = sadd.s32 %s429, %s430
        %s432 = smul.addr %s431, 8
        %s433 = scalar_lea.vmem %s4, %s432
      $region48: #{resblock_forward.5} parent=43 // pred_fallthru
        _
    $region44: #{resblock_forward.5} parent=5 // pred_fallthru
      _
  $region6: #{resblock_forward.5} parent=0 // loop_footer
    %s14 = sadd.s32 1, %s10
  $region7: #{resblock_forward.5} parent=0 // loop_footer_branch
    %9 = sbr.rel target = $region3
  $region8: #{resblock_forward.5} parent=0 // loop_exit
    _

// kernel: resblock_forward.3
$region0: #{resblock_forward.3}
  #allocation0 [shape = 'u32[]', space=smem, size = 0x4, offset = 0x4, fixed_abs, tag = 'smem constant byte address 0x4 - core index']
  #allocation1 [shape = 'u32[72,128]{1,0:T(1,128)}', space=vmem, size = 0x9000, scoped, tag = 'internal scratch']
  %s0 = inlined_call_operand.vmem [shape: f32[2,16,16,4], index: 0, kind: input, shape index: {}]
  %s1 = inlined_call_operand.vmem [shape: f32[36,4], index: 1, kind: input, shape index: {}]
  %s2 = inlined_call_operand.vmem [shape: f32[2,16,16,4], index: 2, kind: output, shape index: {0}]
  %s3 = inlined_call_operand.vmem [shape: f32[2,2,2,4], index: 3, kind: output, shape index: {1}]
  %4 = xla_tuple %s2, %s3
  %s5 = sld [smem:[#allocation0]]
  $region49: #{resblock_forward.3} parent=0
    _
  %s7 = ssub.s32 1, %s5
  %s8 = scalar_select 0, %s7, %s5
  loop: start=0, step=1, limit=6
  $region2: #{resblock_forward.3} parent=0 // loop_pre_header
    _
  $region3: #{resblock_forward.3} parent=0 // loop_header
    %s10 = sphi 0, %s14
    %p11 = scmp.ge.s32.totalorder %s10, 6
    %s17 = sphi 0, %s29
    %s18 = sphi 0, %s25
    %s19 = sphi 0, %s17
    %s20 = sphi 0, %s18
    %s21 = sphi 0, %s19
    %s22 = sphi 0, %s20
    %s32 = sphi 0, %s34
    %s35 = sphi 0, %s32
    %s36 = sphi 0, %s35
    %s52 = sphi 0, %s36
    %s56 = sphi 0, %s56
    %s58 = sphi 0, %s56
    %s59 = sphi 0, %s58
    %s73 = sphi 0, %s59
    %s81 = sphi 0, %s83
    %s84 = sphi 0, %s81
    %s85 = sphi 0, %s84
    %s101 = sphi 0, %s85
    %s109 = sphi 0, %s111
    %s112 = sphi 0, %s109
    %s113 = sphi 0, %s112
    %s129 = sphi 0, %s113
  $region4: #{resblock_forward.3} parent=0 // loop_header_branch
    %13 = sbr.rel (%p11) target = $region8
  $region5: #{resblock_forward.3} parent=0 // loop_body
    %s15 = ssub.s32 %s10, 1
    %s16 = ssub.s32 %s10, 2
    %s23 = sadd.s32 1, %s18
    %p24 = scmp.ge.s32.totalorder %s23, 2
    %s25 = scalar_select %p24, 0, %s23
    %s26 = sadd.s32 1, %s17
    %s27 = scalar_select %p24, %s26, %s17
    %p28 = scmp.ge.s32.totalorder %s27, 2
    %s29 = scalar_select %p28, 0, %s27
    %s30 = ssub.s32 %s17, %s29
    %p31 = scmp.eq.s32.totalorder %s30, 0
    %s33 = sadd.s32 %s32, 1
    %s34 = scalar_select %p31, %s32, %s33
    %p37 = pneg %p31
    %p38 = scmp.eq.s32.totalorder %s10, 3
    %p39 = por %p37, %p38
    %p40 = scmp.ne.s32.totalorder %s32, %s35
    %p41 = scmp.eq.s32.totalorder %s10, 0
    %p42 = por %p40, %p41
    %p43 = scmp.ne.s32.totalorder %s32, %s35
    %p44 = scmp.eq.s32.totalorder %s15, 3
    %p45 = por %p43, %p44
    %p46 = scmp.ne.s32.totalorder %s35, %s36
    %p47 = scmp.eq.s32.totalorder %s15, 0
    %p48 = por %p46, %p47
    %p49 = scmp.ne.s32.totalorder %s35, %s36
    %p50 = scmp.eq.s32.totalorder %s16, 3
    %p51 = por %p49, %p50
    %p53 = scmp.ne.s32.totalorder %s36, %s52
    %p54 = scmp.eq.s32.totalorder %s16, 0
    %p55 = por %p53, %p54
    %s57 = sadd.s32 %s56, 1
    %p60 = scmp.eq.s32.totalorder %s10, 3
    %p61 = scmp.ne.s32.totalorder %s56, %s58
    %p62 = scmp.eq.s32.totalorder %s10, 0
    %p63 = por %p61, %p62
    %p64 = scmp.ne.s32.totalorder %s56, %s58
    %p65 = scmp.eq.s32.totalorder %s15, 3
    %p66 = por %p64, %p65
    %p67 = scmp.ne.s32.totalorder %s58, %s59
    %p68 = scmp.eq.s32.totalorder %s15, 0
    %p69 = por %p67, %p68
    %p70 = scmp.ne.s32.totalorder %s58, %s59
    %p71 = scmp.eq.s32.totalorder %s16, 3
    %p72 = por %p70, %p71
    %p74 = scmp.ne.s32.totalorder %s59, %s73
    %p75 = scmp.eq.s32.totalorder %s16, 0
    %p76 = por %p74, %p75
    %s77 = ssub.s32 %s17, %s29
    %s78 = ssub.s32 %s18, %s25
    %s79 = sor.u32 %s77, %s78
    %p80 = scmp.eq.s32.totalorder %s79, 0
    %s82 = sadd.s32 %s81, 1
    %s83 = scalar_select %p80, %s81, %s82
    %p86 = pneg %p80
    %p87 = scmp.eq.s32.totalorder %s10, 3
    %p88 = por %p86, %p87
    %p89 = scmp.ne.s32.totalorder %s81, %s84
    %p90 = scmp.eq.s32.totalorder %s10, 0
    %p91 = por %p89, %p90
    %p92 = scmp.ne.s32.totalorder %s81, %s84
    %p93 = scmp.eq.s32.totalorder %s15, 3
    %p94 = por %p92, %p93
    %p95 = scmp.ne.s32.totalorder %s84, %s85
    %p96 = scmp.eq.s32.totalorder %s15, 0
    %p97 = por %p95, %p96
    %p98 = scmp.ne.s32.totalorder %s84, %s85
    %p99 = scmp.eq.s32.totalorder %s16, 3
    %p100 = por %p98, %p99
    %p102 = scmp.ne.s32.totalorder %s85, %s101
    %p103 = scmp.eq.s32.totalorder %s16, 0
    %p104 = por %p102, %p103
    %s105 = ssub.s32 %s17, %s29
    %s106 = ssub.s32 %s18, %s25
    %s107 = sor.u32 %s105, %s106
    %p108 = scmp.eq.s32.totalorder %s107, 0
    %s110 = sadd.s32 %s109, 1
    %s111 = scalar_select %p108, %s109, %s110
    %p114 = pneg %p108
    %p115 = scmp.eq.s32.totalorder %s10, 3
    %p116 = por %p114, %p115
    %p117 = scmp.ne.s32.totalorder %s109, %s112
    %p118 = scmp.eq.s32.totalorder %s10, 0
    %p119 = por %p117, %p118
    %p120 = scmp.ne.s32.totalorder %s109, %s112
    %p121 = scmp.eq.s32.totalorder %s15, 3
    %p122 = por %p120, %p121
    %p123 = scmp.ne.s32.totalorder %s112, %s113
    %p124 = scmp.eq.s32.totalorder %s15, 0
    %p125 = por %p123, %p124
    %p126 = scmp.ne.s32.totalorder %s112, %s113
    %p127 = scmp.eq.s32.totalorder %s16, 3
    %p128 = por %p126, %p127
    %p130 = scmp.ne.s32.totalorder %s113, %s129
    %p131 = scmp.eq.s32.totalorder %s16, 0
    %p132 = por %p130, %p131
    %p133 = scmp.le.s32.totalorder 1, %s10
    %p134 = scmp.lt.s32.totalorder %s10, 5
    %p135 = pnand %p133, %p134
    %p136 = pneg %p135
    // Predicated region
    $region9: #{resblock_forward.3} parent=5 // pred_check
      _
    $region10: #{resblock_forward.3} parent=5 // pred_check_branch
      %138 = sbr.rel (%p135) target = $region12
    $region11: #{resblock_forward.3} parent=5 // pred_region
      %s139 = ssub.s32 %s10, 1
      // Predicated region
      $region13: #{resblock_forward.3} parent=11 // pred_check
        %p140 = pneg %p69
      $region14: #{resblock_forward.3} parent=11 // pred_check_branch
        %142 = sbr.rel (%p140) target = $region16
      $region15: #{resblock_forward.3} parent=11 // pred_region
        _
      $region16: #{resblock_forward.3} parent=11 // pred_fallthru
        _
    $region12: #{resblock_forward.3} parent=5 // pred_fallthru
      _
    %p143 = scmp.lt.s32.totalorder %s10, 4
    // Predicated region
    $region17: #{resblock_forward.3} parent=5 // pred_check
      %p144 = pneg %p143
    $region18: #{resblock_forward.3} parent=5 // pred_check_branch
      %146 = sbr.rel (%p144) target = $region20
    $region19: #{resblock_forward.3} parent=5 // pred_region
      // Predicated region
      $region21: #{resblock_forward.3} parent=19 // pred_check
        %p147 = pneg %p42
      $region22: #{resblock_forward.3} parent=19 // pred_check_branch
        %149 = sbr.rel (%p147) target = $region24
      $region23: #{resblock_forward.3} parent=19 // pred_region
        %p150 = scmp.lt.s32.totalorder %s17, 1
        %s151 = scalar_select %p150, %s17, 1
        %s152 = smul.addr %s151, 32
        %s153 = smul.addr %s152, 8
        %s154 = scalar_lea.vmem %s0, %s153
      $region24: #{resblock_forward.3} parent=19 // pred_fallthru
        _
    $region20: #{resblock_forward.3} parent=5 // pred_fallthru
      _
    %p155 = scmp.le.s32.totalorder 1, %s10
    %p156 = scmp.lt.s32.totalorder %s10, 5
    %p157 = pnand %p155, %p156
    %p158 = pneg %p157
    // Predicated region
    $region25: #{resblock_forward.3} parent=5 // pred_check
      _
    $region26: #{resblock_forward.3} parent=5 // pred_check_branch
      %160 = sbr.rel (%p157) target = $region28
    $region27: #{resblock_forward.3} parent=5 // pred_region
      %s161 = ssub.s32 %s10, 1
      %p162 = scmp.lt.s32.totalorder %s19, 1
      %s163 = scalar_select %p162, %s19, 1
      %s164 = smul.addr %s163, 32
      %s165 = smul.addr %s164, 8
      %s166 = scalar_lea.vmem %s0, %s165
      %p167 = pneg %p48
      %p168 = pneg %p45
      %p169 = pneg %p69
      %p170 = pneg %p66
      %p171 = pneg %p97
      %p172 = pneg %p94
      %s173 = smul.u32 8, %s20
      %p174 = scmp.lt.s32.totalorder %s19, 1
      %s175 = scalar_select %p174, %s19, 1
      %p176 = scmp.lt.s32.totalorder %s173, 15
      %s177 = scalar_select %p176, %s173, 15
      %s178 = smul.addr %s177, 2
      %s179 = smul.addr %s175, 32
      %s180 = sadd.s32 %s178, %s179
      %s181 = smul.addr %s180, 8
      %s182 = scalar_lea.vmem %s2, %s181
      %p183 = pneg %p125
      %p184 = pneg %p122
      %p185 = scmp.lt.s32.totalorder %s19, 1
      %s186 = scalar_select %p185, %s19, 1
      %p187 = scmp.lt.s32.totalorder %s20, 1
      %s188 = scalar_select %p187, %s20, 1
      %s189 = smul.addr %s186, 2
      %s190 = sadd.s32 %s188, %s189
      %s191 = smul.addr %s190, 2
      %s192 = scalar_lea.vmem %s3, %s191
      %p193 = scmp.lt.s32.totalorder %s19, 1
      %s194 = scalar_select %p193, %s19, 1
      %s195 = smul.addr %s194, 32
      %s196 = smul.addr %s195, 8
      %s197 = scalar_lea.vmem %s0, %s196
      %s198 = smul.u32 8, %s20
      %p199 = scmp.lt.s32.totalorder %s19, 1
      %s200 = scalar_select %p199, %s19, 1
      %p201 = scmp.lt.s32.totalorder %s198, 15
      %s202 = scalar_select %p201, %s198, 15
      %s203 = smul.addr %s202, 2
      %s204 = smul.addr %s200, 32
      %s205 = sadd.s32 %s203, %s204
      %s206 = smul.addr %s205, 8
      %s207 = scalar_lea.vmem %s2, %s206
      %s208 = smul.u32 8, %s20
      %p209 = scmp.lt.s32.totalorder %s19, 1
      %s210 = scalar_select %p209, %s19, 1
      %p211 = scmp.lt.s32.totalorder %s20, 1
      %s212 = scalar_select %p211, %s20, 1
      %s213 = smul.addr %s210, 2
      %s214 = sadd.s32 %s212, %s213
      %s215 = smul.addr %s214, 2
      %s216 = scalar_lea.vmem %s3, %s215
      %s217 = smul.u32 %s20, 8
      %s218 = ssub.s32 %s217, 1
      %p219 = scmp.gt.s32.totalorder %s218, 0
      %s220 = scalar_select %p219, %s218, 0
      %s221 = sadd.s32 %s217, 8
      %p222 = scmp.lt.s32.totalorder %s221, 15
      %s223 = scalar_select %p222, %s221, 15
      %s224 = smul.u32 %s220, 16
      %s225 = scalar_lea.vmem %s197, %s224
      %v226 = vld [vmem:[%s225] sm:$0xff]
      %v227 = vld [vmem:[%s225 + $0x8] sm:$0xff]
      %s228 = smul.u32 %s217, 16
      %s229 = scalar_lea.vmem %s197, %s228
      %v230 = vld [vmem:[%s229] sm:$0xff]
      %v231 = vld [vmem:[%s229 + $0x8] sm:$0xff]
      %v232 = vld [vmem:[%s229 + $0x10] sm:$0xff]
      %v233 = vld [vmem:[%s229 + $0x18] sm:$0xff]
      %v234 = vld [vmem:[%s229 + $0x20] sm:$0xff]
      %v235 = vld [vmem:[%s229 + $0x28] sm:$0xff]
      %v236 = vld [vmem:[%s229 + $0x30] sm:$0xff]
      %v237 = vld [vmem:[%s229 + $0x38] sm:$0xff]
      %v238 = vld [vmem:[%s229 + $0x40] sm:$0xff]
      %v239 = vld [vmem:[%s229 + $0x48] sm:$0xff]
      %v240 = vld [vmem:[%s229 + $0x50] sm:$0xff]
      %v241 = vld [vmem:[%s229 + $0x58] sm:$0xff]
      %v242 = vld [vmem:[%s229 + $0x60] sm:$0xff]
      %v243 = vld [vmem:[%s229 + $0x68] sm:$0xff]
      %v244 = vld [vmem:[%s229 + $0x70] sm:$0xff]
      %v245 = vld [vmem:[%s229 + $0x78] sm:$0xff]
      %s246 = smul.u32 %s223, 16
      %s247 = scalar_lea.vmem %s197, %s246
      %v248 = vld [vmem:[%s247] sm:$0xff]
      %v249 = vld [vmem:[%s247 + $0x8] sm:$0xff]
      %vm270 = vcmask 1040384
      %v271 = vrot.slane %v226, 7
      %v272 = vrot.slane %v227, 7
      %v273 = vsel %vm270, %v271, %v272
      %v274 = vrot.slane %v230, 7
      %v275 = vrot.slane %v231, 7
      %v276 = vsel %vm270, %v274, %v275
      %v277 = vrot.slane %v232, 7
      %v278 = vrot.slane %v233, 7
      %v279 = vsel %vm270, %v277, %v278
      %v280 = vrot.slane %v234, 7
      %v281 = vrot.slane %v235, 7
      %v282 = vsel %vm270, %v280, %v281
      %v283 = vrot.slane %v236, 7
      %v284 = vrot.slane %v237, 7
      %v285 = vsel %vm270, %v283, %v284
      %v286 = vrot.slane %v238, 7
      %v287 = vrot.slane %v239, 7
      %v288 = vsel %vm270, %v286, %v287
      %v289 = vrot.slane %v240, 7
      %v290 = vrot.slane %v241, 7
      %v291 = vsel %vm270, %v289, %v290
      %v292 = vrot.slane %v242, 7
      %v293 = vrot.slane %v243, 7
      %v294 = vsel %vm270, %v292, %v293
      %v295 = vrot.slane %v244, 7
      %v296 = vrot.slane %v245, 7
      %v297 = vsel %vm270, %v295, %v296
      %v298 = vrot.slane %v248, 7
      %v299 = vrot.slane %v249, 7
      %v300 = vsel %vm270, %v298, %v299
      %v329 = vrot.slane %v227, 6
      %v330 = vrot.slane %v231, 6
      %v331 = vrot.slane %v233, 6
      %v332 = vrot.slane %v235, 6
      %v333 = vrot.slane %v237, 6
      %v334 = vrot.slane %v239, 6
      %v335 = vrot.slane %v241, 6
      %v336 = vrot.slane %v243, 6
      %v337 = vrot.slane %v245, 6
      %v338 = vrot.slane %v249, 6
      %v349 = vsel %vm270, %v226, %v271
      %v350 = vsel %vm270, %v230, %v274
      %v351 = vsel %vm270, %v232, %v277
      %v352 = vsel %vm270, %v234, %v280
      %v353 = vsel %vm270, %v236, %v283
      %v354 = vsel %vm270, %v238, %v286
      %v355 = vsel %vm270, %v240, %v289
      %v356 = vsel %vm270, %v242, %v292
      %v357 = vsel %vm270, %v244, %v295
      %v358 = vsel %vm270, %v248, %v298
      %v359 = vsel %vm270, %v272, %v329
      %v360 = vsel %vm270, %v275, %v330
      %v361 = vsel %vm270, %v278, %v331
      %v362 = vsel %vm270, %v281, %v332
      %v363 = vsel %vm270, %v284, %v333
      %v364 = vsel %vm270, %v287, %v334
      %v365 = vsel %vm270, %v290, %v335
      %v366 = vsel %vm270, %v293, %v336
      %v367 = vsel %vm270, %v296, %v337
      %v368 = vsel %vm270, %v299, %v338
      %v369 = vld [vmem:[%s1] sm:$0xff]
      %v370 = vld [vmem:[%s1 + $0x8] sm:$0xff]
      %v371 = vld [vmem:[%s1 + $0x10] sm:$0xff]
      %v372 = vld [vmem:[%s1 + $0x18] sm:$0xff]
      %v373 = vld [vmem:[%s1 + $0x20] sm:$0xf]
      %vm390 = vcmask 1046528
      %v391 = vrot.slane %v349, 1
      %v392 = vrot.slane %v273, 1
      %v393 = vsel %vm390, %v391, %v392
      %v394 = vrot.slane %v359, 1
      %v395 = vsel %vm390, %v392, %v394
      %v396 = vrot.slane %v350, 1
      %v397 = vrot.slane %v276, 1
      %v398 = vsel %vm390, %v396, %v397
      %v399 = vrot.slane %v360, 1
      %v400 = vsel %vm390, %v397, %v399
      %v401 = vrot.slane %v351, 1
      %v402 = vrot.slane %v279, 1
      %v403 = vsel %vm390, %v401, %v402
      %v404 = vrot.slane %v361, 1
      %v405 = vsel %vm390, %v402, %v404
      %v406 = vrot.slane %v352, 1
      %v407 = vrot.slane %v282, 1
      %v408 = vsel %vm390, %v406, %v407
      %v409 = vrot.slane %v362, 1
      %v410 = vsel %vm390, %v407, %v409
      %v411 = vrot.slane %v353, 1
      %v412 = vrot.slane %v285, 1
      %v413 = vsel %vm390, %v411, %v412
      %v414 = vrot.slane %v363, 1
      %v415 = vsel %vm390, %v412, %v414
      %v416 = vrot.slane %v354, 1
      %v417 = vrot.slane %v288, 1
      %v418 = vsel %vm390, %v416, %v417
      %v419 = vrot.slane %v364, 1
      %v420 = vsel %vm390, %v417, %v419
      %v421 = vrot.slane %v355, 1
      %v422 = vrot.slane %v291, 1
      %v423 = vsel %vm390, %v421, %v422
      %v424 = vrot.slane %v365, 1
      %v425 = vsel %vm390, %v422, %v424
      %v426 = vrot.slane %v356, 1
      %v427 = vrot.slane %v294, 1
      %v428 = vsel %vm390, %v426, %v427
      %v429 = vrot.slane %v366, 1
      %v430 = vsel %vm390, %v427, %v429
      %vm431 = vcmask 1045504
      %v432 = vrot.slane %v349, 2
      %v433 = vrot.slane %v273, 2
      %v434 = vsel %vm431, %v432, %v433
      %v435 = vrot.slane %v359, 2
      %v436 = vsel %vm431, %v433, %v435
      %v437 = vrot.slane %v350, 2
      %v438 = vrot.slane %v276, 2
      %v439 = vsel %vm431, %v437, %v438
      %v440 = vrot.slane %v360, 2
      %v441 = vsel %vm431, %v438, %v440
      %v442 = vrot.slane %v351, 2
      %v443 = vrot.slane %v279, 2
      %v444 = vsel %vm431, %v442, %v443
      %v445 = vrot.slane %v361, 2
      %v446 = vsel %vm431, %v443, %v445
      %v447 = vrot.slane %v352, 2
      %v448 = vrot.slane %v282, 2
      %v449 = vsel %vm431, %v447, %v448
      %v450 = vrot.slane %v362, 2
      %v451 = vsel %vm431, %v448, %v450
      %v452 = vrot.slane %v353, 2
      %v453 = vrot.slane %v285, 2
      %v454 = vsel %vm431, %v452, %v453
      %v455 = vrot.slane %v363, 2
      %v456 = vsel %vm431, %v453, %v455
      %v457 = vrot.slane %v354, 2
      %v458 = vrot.slane %v288, 2
      %v459 = vsel %vm431, %v457, %v458
      %v460 = vrot.slane %v364, 2
      %v461 = vsel %vm431, %v458, %v460
      %v462 = vrot.slane %v355, 2
      %v463 = vrot.slane %v291, 2
      %v464 = vsel %vm431, %v462, %v463
      %v465 = vrot.slane %v365, 2
      %v466 = vsel %vm431, %v463, %v465
      %v467 = vrot.slane %v356, 2
      %v468 = vrot.slane %v294, 2
      %v469 = vsel %vm431, %v467, %v468
      %v470 = vrot.slane %v366, 2
      %v471 = vsel %vm431, %v468, %v470
      %v474 = vrot.slane %v357, 1
      %v475 = vrot.slane %v297, 1
      %v476 = vsel %vm390, %v474, %v475
      %v477 = vrot.slane %v367, 1
      %v478 = vsel %vm390, %v475, %v477
      %v479 = vrot.slane %v357, 2
      %v480 = vrot.slane %v297, 2
      %v481 = vsel %vm431, %v479, %v480
      %v482 = vrot.slane %v367, 2
      %v483 = vsel %vm431, %v480, %v482
      %v486 = vrot.slane %v358, 1
      %v487 = vrot.slane %v300, 1
      %v488 = vsel %vm390, %v486, %v487
      %v489 = vrot.slane %v368, 1
      %v490 = vsel %vm390, %v487, %v489
      %v491 = vrot.slane %v358, 2
      %v492 = vrot.slane %v300, 2
      %v493 = vsel %vm431, %v491, %v492
      %v494 = vrot.slane %v368, 2
      %v495 = vsel %vm431, %v492, %v494
      %496 = vrot.lane.b32.xlu0 %v393, 4
      %v497 = vpop.permute.xlu0 %496
      %498 = vrot.lane.b32.xlu0 %v395, 4
      %v499 = vpop.permute.xlu0 %498
      %500 = vrot.lane.b32.xlu0 %v398, 4
      %v501 = vpop.permute.xlu0 %500
      %502 = vrot.lane.b32.xlu0 %v400, 4
      %v503 = vpop.permute.xlu0 %502
      %504 = vrot.lane.b32.xlu0 %v403, 4
      %v505 = vpop.permute.xlu0 %504
      %506 = vrot.lane.b32.xlu0 %v405, 4
      %v507 = vpop.permute.xlu0 %506
      %508 = vrot.lane.b32.xlu0 %v408, 4
      %v509 = vpop.permute.xlu0 %508
      %510 = vrot.lane.b32.xlu0 %v410, 4
      %v511 = vpop.permute.xlu0 %510
      %512 = vrot.lane.b32.xlu0 %v413, 4
      %v513 = vpop.permute.xlu0 %512
      %514 = vrot.lane.b32.xlu0 %v415, 4
      %v515 = vpop.permute.xlu0 %514
      %516 = vrot.lane.b32.xlu0 %v418, 4
      %v517 = vpop.permute.xlu0 %516
      %518 = vrot.lane.b32.xlu0 %v420, 4
      %v519 = vpop.permute.xlu0 %518
      %520 = vrot.lane.b32.xlu0 %v423, 4
      %v521 = vpop.permute.xlu0 %520
      %522 = vrot.lane.b32.xlu0 %v425, 4
      %v523 = vpop.permute.xlu0 %522
      %524 = vrot.lane.b32.xlu0 %v428, 4
      %v525 = vpop.permute.xlu0 %524
      %526 = vrot.lane.b32.xlu0 %v430, 4
      %v527 = vpop.permute.xlu0 %526
      %544 = vrot.lane.b32.xlu0 %v434, 8
      %v545 = vpop.permute.xlu0 %544
      %546 = vrot.lane.b32.xlu0 %v436, 8
      %v547 = vpop.permute.xlu0 %546
      %548 = vrot.lane.b32.xlu0 %v439, 8
      %v549 = vpop.permute.xlu0 %548
      %550 = vrot.lane.b32.xlu0 %v441, 8
      %v551 = vpop.permute.xlu0 %550
      %552 = vrot.lane.b32.xlu0 %v444, 8
      %v553 = vpop.permute.xlu0 %552
      %554 = vrot.lane.b32.xlu0 %v446, 8
      %v555 = vpop.permute.xlu0 %554
      %556 = vrot.lane.b32.xlu0 %v449, 8
      %v557 = vpop.permute.xlu0 %556
      %558 = vrot.lane.b32.xlu0 %v451, 8
      %v559 = vpop.permute.xlu0 %558
      %560 = vrot.lane.b32.xlu0 %v454, 8
      %v561 = vpop.permute.xlu0 %560
      %562 = vrot.lane.b32.xlu0 %v456, 8
      %v563 = vpop.permute.xlu0 %562
      %564 = vrot.lane.b32.xlu0 %v459, 8
      %v565 = vpop.permute.xlu0 %564
      %566 = vrot.lane.b32.xlu0 %v461, 8
      %v567 = vpop.permute.xlu0 %566
      %568 = vrot.lane.b32.xlu0 %v464, 8
      %v569 = vpop.permute.xlu0 %568
      %570 = vrot.lane.b32.xlu0 %v466, 8
      %v571 = vpop.permute.xlu0 %570
      %572 = vrot.lane.b32.xlu0 %v469, 8
      %v573 = vpop.permute.xlu0 %572
      %574 = vrot.lane.b32.xlu0 %v471, 8
      %v575 = vpop.permute.xlu0 %574
      %592 = vrot.lane.b32.xlu0 %v350, 12
      %v593 = vpop.permute.xlu0 %592
      %594 = vrot.lane.b32.xlu0 %v276, 12
      %v595 = vpop.permute.xlu0 %594
      %596 = vrot.lane.b32.xlu0 %v351, 12
      %v597 = vpop.permute.xlu0 %596
      %598 = vrot.lane.b32.xlu0 %v279, 12
      %v599 = vpop.permute.xlu0 %598
      %600 = vrot.lane.b32.xlu0 %v352, 12
      %v601 = vpop.permute.xlu0 %600
      %602 = vrot.lane.b32.xlu0 %v282, 12
      %v603 = vpop.permute.xlu0 %602
      %604 = vrot.lane.b32.xlu0 %v353, 12
      %v605 = vpop.permute.xlu0 %604
      %606 = vrot.lane.b32.xlu0 %v285, 12
      %v607 = vpop.permute.xlu0 %606
      %608 = vrot.lane.b32.xlu0 %v354, 12
      %v609 = vpop.permute.xlu0 %608
      %610 = vrot.lane.b32.xlu0 %v288, 12
      %v611 = vpop.permute.xlu0 %610
      %612 = vrot.lane.b32.xlu0 %v355, 12
      %v613 = vpop.permute.xlu0 %612
      %614 = vrot.lane.b32.xlu0 %v291, 12
      %v615 = vpop.permute.xlu0 %614
      %616 = vrot.lane.b32.xlu0 %v356, 12
      %v617 = vpop.permute.xlu0 %616
      %618 = vrot.lane.b32.xlu0 %v294, 12
      %v619 = vpop.permute.xlu0 %618
      %620 = vrot.lane.b32.xlu0 %v357, 12
      %v621 = vpop.permute.xlu0 %620
      %622 = vrot.lane.b32.xlu0 %v297, 12
      %v623 = vpop.permute.xlu0 %622
      %640 = vrot.lane.b32.xlu0 %v398, 16
      %v641 = vpop.permute.xlu0 %640
      %642 = vrot.lane.b32.xlu0 %v400, 16
      %v643 = vpop.permute.xlu0 %642
      %644 = vrot.lane.b32.xlu0 %v403, 16
      %v645 = vpop.permute.xlu0 %644
      %646 = vrot.lane.b32.xlu0 %v405, 16
      %v647 = vpop.permute.xlu0 %646
      %648 = vrot.lane.b32.xlu0 %v408, 16
      %v649 = vpop.permute.xlu0 %648
      %650 = vrot.lane.b32.xlu0 %v410, 16
      %v651 = vpop.permute.xlu0 %650
      %652 = vrot.lane.b32.xlu0 %v413, 16
      %v653 = vpop.permute.xlu0 %652
      %654 = vrot.lane.b32.xlu0 %v415, 16
      %v655 = vpop.permute.xlu0 %654
      %656 = vrot.lane.b32.xlu0 %v418, 16
      %v657 = vpop.permute.xlu0 %656
      %658 = vrot.lane.b32.xlu0 %v420, 16
      %v659 = vpop.permute.xlu0 %658
      %660 = vrot.lane.b32.xlu0 %v423, 16
      %v661 = vpop.permute.xlu0 %660
      %662 = vrot.lane.b32.xlu0 %v425, 16
      %v663 = vpop.permute.xlu0 %662
      %664 = vrot.lane.b32.xlu0 %v428, 16
      %v665 = vpop.permute.xlu0 %664
      %666 = vrot.lane.b32.xlu0 %v430, 16
      %v667 = vpop.permute.xlu0 %666
      %668 = vrot.lane.b32.xlu0 %v476, 16
      %v669 = vpop.permute.xlu0 %668
      %670 = vrot.lane.b32.xlu0 %v478, 16
      %v671 = vpop.permute.xlu0 %670
      %688 = vrot.lane.b32.xlu0 %v439, 20
      %v689 = vpop.permute.xlu0 %688
      %690 = vrot.lane.b32.xlu0 %v441, 20
      %v691 = vpop.permute.xlu0 %690
      %692 = vrot.lane.b32.xlu0 %v444, 20
      %v693 = vpop.permute.xlu0 %692
      %694 = vrot.lane.b32.xlu0 %v446, 20
      %v695 = vpop.permute.xlu0 %694
      %696 = vrot.lane.b32.xlu0 %v449, 20
      %v697 = vpop.permute.xlu0 %696
      %698 = vrot.lane.b32.xlu0 %v451, 20
      %v699 = vpop.permute.xlu0 %698
      %700 = vrot.lane.b32.xlu0 %v454, 20
      %v701 = vpop.permute.xlu0 %700
      %702 = vrot.lane.b32.xlu0 %v456, 20
      %v703 = vpop.permute.xlu0 %702
      %704 = vrot.lane.b32.xlu0 %v459, 20
      %v705 = vpop.permute.xlu0 %704
      %706 = vrot.lane.b32.xlu0 %v461, 20
      %v707 = vpop.permute.xlu0 %706
      %708 = vrot.lane.b32.xlu0 %v464, 20
      %v709 = vpop.permute.xlu0 %708
      %710 = vrot.lane.b32.xlu0 %v466, 20
      %v711 = vpop.permute.xlu0 %710
      %712 = vrot.lane.b32.xlu0 %v469, 20
      %v713 = vpop.permute.xlu0 %712
      %714 = vrot.lane.b32.xlu0 %v471, 20
      %v715 = vpop.permute.xlu0 %714
      %716 = vrot.lane.b32.xlu0 %v481, 20
      %v717 = vpop.permute.xlu0 %716
      %718 = vrot.lane.b32.xlu0 %v483, 20
      %v719 = vpop.permute.xlu0 %718
      %736 = vrot.lane.b32.xlu0 %v351, 24
      %v737 = vpop.permute.xlu0 %736
      %738 = vrot.lane.b32.xlu0 %v279, 24
      %v739 = vpop.permute.xlu0 %738
      %740 = vrot.lane.b32.xlu0 %v352, 24
      %v741 = vpop.permute.xlu0 %740
      %742 = vrot.lane.b32.xlu0 %v282, 24
      %v743 = vpop.permute.xlu0 %742
      %744 = vrot.lane.b32.xlu0 %v353, 24
      %v745 = vpop.permute.xlu0 %744
      %746 = vrot.lane.b32.xlu0 %v285, 24
      %v747 = vpop.permute.xlu0 %746
      %748 = vrot.lane.b32.xlu0 %v354, 24
      %v749 = vpop.permute.xlu0 %748
      %750 = vrot.lane.b32.xlu0 %v288, 24
      %v751 = vpop.permute.xlu0 %750
      %752 = vrot.lane.b32.xlu0 %v355, 24
      %v753 = vpop.permute.xlu0 %752
      %754 = vrot.lane.b32.xlu0 %v291, 24
      %v755 = vpop.permute.xlu0 %754
      %756 = vrot.lane.b32.xlu0 %v356, 24
      %v757 = vpop.permute.xlu0 %756
      %758 = vrot.lane.b32.xlu0 %v294, 24
      %v759 = vpop.permute.xlu0 %758
      %760 = vrot.lane.b32.xlu0 %v357, 24
      %v761 = vpop.permute.xlu0 %760
      %762 = vrot.lane.b32.xlu0 %v297, 24
      %v763 = vpop.permute.xlu0 %762
      %764 = vrot.lane.b32.xlu0 %v358, 24
      %v765 = vpop.permute.xlu0 %764
      %766 = vrot.lane.b32.xlu0 %v300, 24
      %v767 = vpop.permute.xlu0 %766
      %784 = vrot.lane.b32.xlu0 %v403, 28
      %v785 = vpop.permute.xlu0 %784
      %786 = vrot.lane.b32.xlu0 %v405, 28
      %v787 = vpop.permute.xlu0 %786
      %788 = vrot.lane.b32.xlu0 %v408, 28
      %v789 = vpop.permute.xlu0 %788
      %790 = vrot.lane.b32.xlu0 %v410, 28
      %v791 = vpop.permute.xlu0 %790
      %792 = vrot.lane.b32.xlu0 %v413, 28
      %v793 = vpop.permute.xlu0 %792
      %794 = vrot.lane.b32.xlu0 %v415, 28
      %v795 = vpop.permute.xlu0 %794
      %796 = vrot.lane.b32.xlu0 %v418, 28
      %v797 = vpop.permute.xlu0 %796
      %798 = vrot.lane.b32.xlu0 %v420, 28
      %v799 = vpop.permute.xlu0 %798
      %800 = vrot.lane.b32.xlu0 %v423, 28
      %v801 = vpop.permute.xlu0 %800
      %802 = vrot.lane.b32.xlu0 %v425, 28
      %v803 = vpop.permute.xlu0 %802
      %804 = vrot.lane.b32.xlu0 %v428, 28
      %v805 = vpop.permute.xlu0 %804
      %806 = vrot.lane.b32.xlu0 %v430, 28
      %v807 = vpop.permute.xlu0 %806
      %808 = vrot.lane.b32.xlu0 %v476, 28
      %v809 = vpop.permute.xlu0 %808
      %810 = vrot.lane.b32.xlu0 %v478, 28
      %v811 = vpop.permute.xlu0 %810
      %812 = vrot.lane.b32.xlu0 %v488, 28
      %v813 = vpop.permute.xlu0 %812
      %814 = vrot.lane.b32.xlu0 %v490, 28
      %v815 = vpop.permute.xlu0 %814
      %832 = vrot.lane.b32.xlu0 %v444, 32
      %v833 = vpop.permute.xlu0 %832
      %834 = vrot.lane.b32.xlu0 %v446, 32
      %v835 = vpop.permute.xlu0 %834
      %836 = vrot.lane.b32.xlu0 %v449, 32
      %v837 = vpop.permute.xlu0 %836
      %838 = vrot.lane.b32.xlu0 %v451, 32
      %v839 = vpop.permute.xlu0 %838
      %840 = vrot.lane.b32.xlu0 %v454, 32
      %v841 = vpop.permute.xlu0 %840
      %842 = vrot.lane.b32.xlu0 %v456, 32
      %v843 = vpop.permute.xlu0 %842
      %844 = vrot.lane.b32.xlu0 %v459, 32
      %v845 = vpop.permute.xlu0 %844
      %846 = vrot.lane.b32.xlu0 %v461, 32
      %v847 = vpop.permute.xlu0 %846
      %848 = vrot.lane.b32.xlu0 %v464, 32
      %v849 = vpop.permute.xlu0 %848
      %850 = vrot.lane.b32.xlu0 %v466, 32
      %v851 = vpop.permute.xlu0 %850
      %852 = vrot.lane.b32.xlu0 %v469, 32
      %v853 = vpop.permute.xlu0 %852
      %854 = vrot.lane.b32.xlu0 %v471, 32
      %v855 = vpop.permute.xlu0 %854
      %856 = vrot.lane.b32.xlu0 %v481, 32
      %v857 = vpop.permute.xlu0 %856
      %858 = vrot.lane.b32.xlu0 %v483, 32
      %v859 = vpop.permute.xlu0 %858
      %860 = vrot.lane.b32.xlu0 %v493, 32
      %v861 = vpop.permute.xlu0 %860
      %862 = vrot.lane.b32.xlu0 %v495, 32
      %v863 = vpop.permute.xlu0 %862
      %vm880 = vcmask 31744
      %v881 = vsel %vm880, %v349, %v497
      %v882 = vsel %vm880, %v273, %v499
      %v883 = vsel %vm880, %v350, %v501
      %v884 = vsel %vm880, %v276, %v503
      %v885 = vsel %vm880, %v351, %v505
      %v886 = vsel %vm880, %v279, %v507
      %v887 = vsel %vm880, %v352, %v509
      %v888 = vsel %vm880, %v282, %v511
      %v889 = vsel %vm880, %v353, %v513
      %v890 = vsel %vm880, %v285, %v515
      %v891 = vsel %vm880, %v354, %v517
      %v892 = vsel %vm880, %v288, %v519
      %v893 = vsel %vm880, %v355, %v521
      %v894 = vsel %vm880, %v291, %v523
      %v895 = vsel %vm880, %v356, %v525
      %v896 = vsel %vm880, %v294, %v527
      %vm897 = vcmask 64512
      %v898 = vsel %vm897, %v881, %v545
      %v899 = vsel %vm897, %v882, %v547
      %v900 = vsel %vm897, %v883, %v549
      %v901 = vsel %vm897, %v884, %v551
      %v902 = vsel %vm897, %v885, %v553
      %v903 = vsel %vm897, %v886, %v555
      %v904 = vsel %vm897, %v887, %v557
      %v905 = vsel %vm897, %v888, %v559
      %v906 = vsel %vm897, %v889, %v561
      %v907 = vsel %vm897, %v890, %v563
      %v908 = vsel %vm897, %v891, %v565
      %v909 = vsel %vm897, %v892, %v567
      %v910 = vsel %vm897, %v893, %v569
      %v911 = vsel %vm897, %v894, %v571
      %v912 = vsel %vm897, %v895, %v573
      %v913 = vsel %vm897, %v896, %v575
      %vm914 = vcmask 97280
      %v915 = vsel %vm914, %v898, %v593
      %v916 = vsel %vm914, %v899, %v595
      %v917 = vsel %vm914, %v900, %v597
      %v918 = vsel %vm914, %v901, %v599
      %v919 = vsel %vm914, %v902, %v601
      %v920 = vsel %vm914, %v903, %v603
      %v921 = vsel %vm914, %v904, %v605
      %v922 = vsel %vm914, %v905, %v607
      %v923 = vsel %vm914, %v906, %v609
      %v924 = vsel %vm914, %v907, %v611
      %v925 = vsel %vm914, %v908, %v613
      %v926 = vsel %vm914, %v909, %v615
      %v927 = vsel %vm914, %v910, %v617
      %v928 = vsel %vm914, %v911, %v619
      %v929 = vsel %vm914, %v912, %v621
      %v930 = vsel %vm914, %v913, %v623
      %vm931 = vcmask 130048
      %v932 = vsel %vm931, %v915, %v641
      %v933 = vsel %vm931, %v916, %v643
      %v934 = vsel %vm931, %v917, %v645
      %v935 = vsel %vm931, %v918, %v647
      %v936 = vsel %vm931, %v919, %v649
      %v937 = vsel %vm931, %v920, %v651
      %v938 = vsel %vm931, %v921, %v653
      %v939 = vsel %vm931, %v922, %v655
      %v940 = vsel %vm931, %v923, %v657
      %v941 = vsel %vm931, %v924, %v659
      %v942 = vsel %vm931, %v925, %v661
      %v943 = vsel %vm931, %v926, %v663
      %v944 = vsel %vm931, %v927, %v665
      %v945 = vsel %vm931, %v928, %v667
      %v946 = vsel %vm931, %v929, %v669
      %v947 = vsel %vm931, %v930, %v671
      %vm948 = vcmask 162816
      %v949 = vsel %vm948, %v932, %v689
      %v950 = vsel %vm948, %v933, %v691
      %v951 = vsel %vm948, %v934, %v693
      %v952 = vsel %vm948, %v935, %v695
      %v953 = vsel %vm948, %v936, %v697
      %v954 = vsel %vm948, %v937, %v699
      %v955 = vsel %vm948, %v938, %v701
      %v956 = vsel %vm948, %v939, %v703
      %v957 = vsel %vm948, %v940, %v705
      %v958 = vsel %vm948, %v941, %v707
      %v959 = vsel %vm948, %v942, %v709
      %v960 = vsel %vm948, %v943, %v711
      %v961 = vsel %vm948, %v944, %v713
      %v962 = vsel %vm948, %v945, %v715
      %v963 = vsel %vm948, %v946, %v717
      %v964 = vsel %vm948, %v947, %v719
      %vm965 = vcmask 195584
      %v966 = vsel %vm965, %v949, %v737
      %v967 = vsel %vm965, %v950, %v739
      %v968 = vsel %vm965, %v951, %v741
      %v969 = vsel %vm965, %v952, %v743
      %v970 = vsel %vm965, %v953, %v745
      %v971 = vsel %vm965, %v954, %v747
      %v972 = vsel %vm965, %v955, %v749
      %v973 = vsel %vm965, %v956, %v751
      %v974 = vsel %vm965, %v957, %v753
      %v975 = vsel %vm965, %v958, %v755
      %v976 = vsel %vm965, %v959, %v757
      %v977 = vsel %vm965, %v960, %v759
      %v978 = vsel %vm965, %v961, %v761
      %v979 = vsel %vm965, %v962, %v763
      %v980 = vsel %vm965, %v963, %v765
      %v981 = vsel %vm965, %v964, %v767
      %vm982 = vcmask 228352
      %v983 = vsel %vm982, %v966, %v785
      %v984 = vsel %vm982, %v967, %v787
      %v985 = vsel %vm982, %v968, %v789
      %v986 = vsel %vm982, %v969, %v791
      %v987 = vsel %vm982, %v970, %v793
      %v988 = vsel %vm982, %v971, %v795
      %v989 = vsel %vm982, %v972, %v797
      %v990 = vsel %vm982, %v973, %v799
      %v991 = vsel %vm982, %v974, %v801
      %v992 = vsel %vm982, %v975, %v803
      %v993 = vsel %vm982, %v976, %v805
      %v994 = vsel %vm982, %v977, %v807
      %v995 = vsel %vm982, %v978, %v809
      %v996 = vsel %vm982, %v979, %v811
      %v997 = vsel %vm982, %v980, %v813
      %v998 = vsel %vm982, %v981, %v815
      %vm999 = vcmask 261120
      %v1000 = vsel %vm999, %v983, %v833
      %v1001 = vsel %vm999, %v984, %v835
      %v1002 = vsel %vm999, %v985, %v837
      %v1003 = vsel %vm999, %v986, %v839
      %v1004 = vsel %vm999, %v987, %v841
      %v1005 = vsel %vm999, %v988, %v843
      %v1006 = vsel %vm999, %v989, %v845
      %v1007 = vsel %vm999, %v990, %v847
      %v1008 = vsel %vm999, %v991, %v849
      %v1009 = vsel %vm999, %v992, %v851
      %v1010 = vsel %vm999, %v993, %v853
      %v1011 = vsel %vm999, %v994, %v855
      %v1012 = vsel %vm999, %v995, %v857
      %v1013 = vsel %vm999, %v996, %v859
      %v1014 = vsel %vm999, %v997, %v861
      %v1015 = vsel %vm999, %v998, %v863
      %vm1016 = vcmask 293888
      %v1018 = vsel %vm1016, %v1000, 0
      %v1021 = vsel %vm1016, %v1001, 0
      %v1024 = vsel %vm1016, %v1002, 0
      %v1027 = vsel %vm1016, %v1003, 0
      %v1030 = vsel %vm1016, %v1004, 0
      %v1033 = vsel %vm1016, %v1005, 0
      %v1036 = vsel %vm1016, %v1006, 0
      %v1039 = vsel %vm1016, %v1007, 0
      %v1042 = vsel %vm1016, %v1008, 0
      %v1045 = vsel %vm1016, %v1009, 0
      %v1048 = vsel %vm1016, %v1010, 0
      %v1051 = vsel %vm1016, %v1011, 0
      %v1054 = vsel %vm1016, %v1012, 0
      %v1057 = vsel %vm1016, %v1013, 0
      %v1060 = vsel %vm1016, %v1014, 0
      %v1063 = vsel %vm1016, %v1015, 0
      %vm1065 = vcmask 1043456
      %v1067 = vsel %vm1065, %v373, 0
      %1069 = vmatpush.msra.mxu0 0.0
      %1070 = vmatpush.msra.mxu0 0.0
      %1071 = vmatpush.msra.mxu0 0.0
      %1072 = vmatpush.msra.mxu0 0.0
      %1073 = vmatpush.msra.mxu0 0.0
      %1074 = vmatpush.msra.mxu0 0.0
      %1075 = vmatpush.msra.mxu0 0.0
      %1076 = vmatpush.msra.mxu0 0.0
      %1077 = vmatpush.msra.mxu0 0.0
      %1078 = vmatpush.msra.mxu0 0.0
      %1079 = vmatpush.msra.mxu0 0.0
      %1080 = vmatpush.msra.mxu0 %v1067
      %1081 = vmatpush.msra.mxu0 %v372
      %1082 = vmatpush.msra.mxu0 %v371
      %1083 = vmatpush.msra.mxu0 %v370
      %1084 = vmatpush.msra.mxu0 %v369
      %1085 = vmatmul.f32.gmra.mxu0 %v1018
      %v1086 = vpop.f32.mrf.mxu0
      %v1087 = vadd.f32 0.0, %v1086
      %1088 = vmatmul.f32.gmra.mxu0 %v1021
      %v1089 = vpop.f32.mrf.mxu0
      %v1090 = vadd.f32 0.0, %v1089
      %1091 = vmatmul.f32.gmra.mxu0 %v1024
      %v1092 = vpop.f32.mrf.mxu0
      %v1093 = vadd.f32 0.0, %v1092
      %1094 = vmatmul.f32.gmra.mxu0 %v1027
      %v1095 = vpop.f32.mrf.mxu0
      %v1096 = vadd.f32 0.0, %v1095
      %1097 = vmatmul.f32.gmra.mxu0 %v1030
      %v1098 = vpop.f32.mrf.mxu0
      %v1099 = vadd.f32 0.0, %v1098
      %1100 = vmatmul.f32.gmra.mxu0 %v1033
      %v1101 = vpop.f32.mrf.mxu0
      %v1102 = vadd.f32 0.0, %v1101
      %1103 = vmatmul.f32.gmra.mxu0 %v1036
      %v1104 = vpop.f32.mrf.mxu0
      %v1105 = vadd.f32 0.0, %v1104
      %1106 = vmatmul.f32.gmra.mxu0 %v1039
      %v1107 = vpop.f32.mrf.mxu0
      %v1108 = vadd.f32 0.0, %v1107
      %1109 = vmatmul.f32.gmra.mxu0 %v1042
      %v1110 = vpop.f32.mrf.mxu0
      %v1111 = vadd.f32 0.0, %v1110
      %1112 = vmatmul.f32.gmra.mxu0 %v1045
      %v1113 = vpop.f32.mrf.mxu0
      %v1114 = vadd.f32 0.0, %v1113
      %1115 = vmatmul.f32.gmra.mxu0 %v1048
      %v1116 = vpop.f32.mrf.mxu0
      %v1117 = vadd.f32 0.0, %v1116
      %1118 = vmatmul.f32.gmra.mxu0 %v1051
      %v1119 = vpop.f32.mrf.mxu0
      %v1120 = vadd.f32 0.0, %v1119
      %1121 = vmatmul.f32.gmra.mxu0 %v1054
      %v1122 = vpop.f32.mrf.mxu0
      %v1123 = vadd.f32 0.0, %v1122
      %1124 = vmatmul.f32.gmra.mxu0 %v1057
      %v1125 = vpop.f32.mrf.mxu0
      %v1126 = vadd.f32 0.0, %v1125
      %1127 = vmatmul.f32.gmra.mxu0 %v1060
      %v1128 = vpop.f32.mrf.mxu0
      %v1129 = vadd.f32 0.0, %v1128
      %1130 = vmatmul.f32.gmra.mxu0 %v1063
      %v1131 = vpop.f32.mrf.mxu0
      %v1132 = vadd.f32 0.0, %v1131
      %1133 = vdwg.mxu0
      %1134 = vst.msk [vmem:[%s207] sm:$0xff] %vm880, %v1087
      %1135 = vst.msk [vmem:[%s207 + $0x8] sm:$0xff] %vm880, %v1090
      %1136 = vst.msk [vmem:[%s207 + $0x10] sm:$0xff] %vm880, %v1093
      %1137 = vst.msk [vmem:[%s207 + $0x18] sm:$0xff] %vm880, %v1096
      %1138 = vst.msk [vmem:[%s207 + $0x20] sm:$0xff] %vm880, %v1099
      %1139 = vst.msk [vmem:[%s207 + $0x28] sm:$0xff] %vm880, %v1102
      %1140 = vst.msk [vmem:[%s207 + $0x30] sm:$0xff] %vm880, %v1105
      %1141 = vst.msk [vmem:[%s207 + $0x38] sm:$0xff] %vm880, %v1108
      %1142 = vst.msk [vmem:[%s207 + $0x40] sm:$0xff] %vm880, %v1111
      %1143 = vst.msk [vmem:[%s207 + $0x48] sm:$0xff] %vm880, %v1114
      %1144 = vst.msk [vmem:[%s207 + $0x50] sm:$0xff] %vm880, %v1117
      %1145 = vst.msk [vmem:[%s207 + $0x58] sm:$0xff] %vm880, %v1120
      %1146 = vst.msk [vmem:[%s207 + $0x60] sm:$0xff] %vm880, %v1123
      %1147 = vst.msk [vmem:[%s207 + $0x68] sm:$0xff] %vm880, %v1126
      %1148 = vst.msk [vmem:[%s207 + $0x70] sm:$0xff] %vm880, %v1129
      %1149 = vst.msk [vmem:[%s207 + $0x78] sm:$0xff] %vm880, %v1132
      %v1150 = vsel %vm880, %v1087, 0.0
      %v1151 = vsel %vm880, %v1090, 0.0
      %v1152 = vadd.f32 %v1150, %v1151
      %v1153 = vsel %vm880, %v1093, 0.0
      %v1154 = vadd.f32 %v1152, %v1153
      %v1155 = vsel %vm880, %v1096, 0.0
      %v1156 = vadd.f32 %v1154, %v1155
      %v1157 = vsel %vm880, %v1099, 0.0
      %v1158 = vadd.f32 %v1156, %v1157
      %v1159 = vsel %vm880, %v1102, 0.0
      %v1160 = vadd.f32 %v1158, %v1159
      %v1161 = vsel %vm880, %v1105, 0.0
      %v1162 = vadd.f32 %v1160, %v1161
      %v1163 = vsel %vm880, %v1108, 0.0
      %v1164 = vadd.f32 %v1162, %v1163
      %v1165 = vsel %vm880, %v1111, 0.0
      %v1166 = vadd.f32 %v1164, %v1165
      %v1167 = vsel %vm880, %v1114, 0.0
      %v1168 = vadd.f32 %v1166, %v1167
      %v1169 = vsel %vm880, %v1117, 0.0
      %v1170 = vadd.f32 %v1168, %v1169
      %v1171 = vsel %vm880, %v1120, 0.0
      %v1172 = vadd.f32 %v1170, %v1171
      %v1173 = vsel %vm880, %v1123, 0.0
      %v1174 = vadd.f32 %v1172, %v1173
      %v1175 = vsel %vm880, %v1126, 0.0
      %v1176 = vadd.f32 %v1174, %v1175
      %v1177 = vsel %vm880, %v1129, 0.0
      %v1178 = vadd.f32 %v1176, %v1177
      %v1179 = vsel %vm880, %v1132, 0.0
      %v1180 = vadd.f32 %v1178, %v1179
      %v1181 = vrot.slane %v1180, 4
      %v1182 = vadd.f32 %v1180, %v1181
      %v1183 = vrot.slane %v1182, 2
      %v1184 = vadd.f32 %v1182, %v1183
      %v1185 = vrot.slane %v1184, 1
      %v1186 = vadd.f32 %v1184, %v1185
      %v1187 = vadd.f32 %v1186, 0.0
      %v1188 = vmul.f32 %v1087, %v1087
      %v1189 = vmul.f32 %v1090, %v1090
      %v1190 = vmul.f32 %v1093, %v1093
      %v1191 = vmul.f32 %v1096, %v1096
      %v1192 = vmul.f32 %v1099, %v1099
      %v1193 = vmul.f32 %v1102, %v1102
      %v1194 = vmul.f32 %v1105, %v1105
      %v1195 = vmul.f32 %v1108, %v1108
      %v1196 = vmul.f32 %v1111, %v1111
      %v1197 = vmul.f32 %v1114, %v1114
      %v1198 = vmul.f32 %v1117, %v1117
      %v1199 = vmul.f32 %v1120, %v1120
      %v1200 = vmul.f32 %v1123, %v1123
      %v1201 = vmul.f32 %v1126, %v1126
      %v1202 = vmul.f32 %v1129, %v1129
      %v1203 = vmul.f32 %v1132, %v1132
      %v1204 = vsel %vm880, %v1188, 0.0
      %v1205 = vsel %vm880, %v1189, 0.0
      %v1206 = vadd.f32 %v1204, %v1205
      %v1207 = vsel %vm880, %v1190, 0.0
      %v1208 = vadd.f32 %v1206, %v1207
      %v1209 = vsel %vm880, %v1191, 0.0
      %v1210 = vadd.f32 %v1208, %v1209
      %v1211 = vsel %vm880, %v1192, 0.0
      %v1212 = vadd.f32 %v1210, %v1211
      %v1213 = vsel %vm880, %v1193, 0.0
      %v1214 = vadd.f32 %v1212, %v1213
      %v1215 = vsel %vm880, %v1194, 0.0
      %v1216 = vadd.f32 %v1214, %v1215
      %v1217 = vsel %vm880, %v1195, 0.0
      %v1218 = vadd.f32 %v1216, %v1217
      %v1219 = vsel %vm880, %v1196, 0.0
      %v1220 = vadd.f32 %v1218, %v1219
      %v1221 = vsel %vm880, %v1197, 0.0
      %v1222 = vadd.f32 %v1220, %v1221
      %v1223 = vsel %vm880, %v1198, 0.0
      %v1224 = vadd.f32 %v1222, %v1223
      %v1225 = vsel %vm880, %v1199, 0.0
      %v1226 = vadd.f32 %v1224, %v1225
      %v1227 = vsel %vm880, %v1200, 0.0
      %v1228 = vadd.f32 %v1226, %v1227
      %v1229 = vsel %vm880, %v1201, 0.0
      %v1230 = vadd.f32 %v1228, %v1229
      %v1231 = vsel %vm880, %v1202, 0.0
      %v1232 = vadd.f32 %v1230, %v1231
      %v1233 = vsel %vm880, %v1203, 0.0
      %v1234 = vadd.f32 %v1232, %v1233
      %v1235 = vrot.slane %v1234, 4
      %v1236 = vadd.f32 %v1234, %v1235
      %v1237 = vrot.slane %v1236, 2
      %v1238 = vadd.f32 %v1236, %v1237
      %v1239 = vrot.slane %v1238, 1
      %v1240 = vadd.f32 %v1238, %v1239
      %v1241 = vadd.f32 %v1240, 0.0
      %v1242 = vsel %vm270, %v1187, %v1241
      %vm1243 = vcmask 25600
      %1244 = vst.msk [vmem:[%s216] sm:$0x3] %vm1243, %v1242
      %s1245 = smul.u32 8, %s20
      %p1246 = scmp.lt.s32.totalorder %s19, 1
      %s1247 = scalar_select %p1246, %s19, 1
      %p1248 = scmp.lt.s32.totalorder %s1245, 15
      %s1249 = scalar_select %p1248, %s1245, 15
      %s1250 = smul.addr %s1249, 2
      %s1251 = smul.addr %s1247, 32
      %s1252 = sadd.s32 %s1250, %s1251
      %s1253 = smul.addr %s1252, 8
      %s1254 = scalar_lea.vmem %s2, %s1253
      %p1255 = scmp.lt.s32.totalorder %s19, 1
      %s1256 = scalar_select %p1255, %s19, 1
      %p1257 = scmp.lt.s32.totalorder %s20, 1
      %s1258 = scalar_select %p1257, %s20, 1
      %s1259 = smul.addr %s1256, 2
      %s1260 = sadd.s32 %s1258, %s1259
      %s1261 = smul.addr %s1260, 2
      %s1262 = scalar_lea.vmem %s3, %s1261
      // Predicated region
      $region29: #{resblock_forward.3} parent=27 // pred_check
        %p1263 = pneg %p94
      $region30: #{resblock_forward.3} parent=27 // pred_check_branch
        %1265 = sbr.rel (%p1263) target = $region32
      $region31: #{resblock_forward.3} parent=27 // pred_region
        %s1266 = smul.u32 8, %s20
      $region32: #{resblock_forward.3} parent=27 // pred_fallthru
        _
      // Predicated region
      $region33: #{resblock_forward.3} parent=27 // pred_check
        %p1267 = pneg %p122
      $region34: #{resblock_forward.3} parent=27 // pred_check_branch
        %1269 = sbr.rel (%p1267) target = $region36
      $region35: #{resblock_forward.3} parent=27 // pred_region
        _
      $region36: #{resblock_forward.3} parent=27 // pred_fallthru
        _
    $region28: #{resblock_forward.3} parent=5 // pred_fallthru
      _
    %p1270 = scmp.le.s32.totalorder 2, %s10
    // Predicated region
    $region37: #{resblock_forward.3} parent=5 // pred_check
      %p1271 = pneg %p1270
    $region38: #{resblock_forward.3} parent=5 // pred_check_branch
      %1273 = sbr.rel (%p1271) target = $region40
    $region39: #{resblock_forward.3} parent=5 // pred_region
      %s1274 = ssub.s32 %s10, 2
      // Predicated region
      $region41: #{resblock_forward.3} parent=39 // pred_check
        %p1275 = pneg %p100
      $region42: #{resblock_forward.3} parent=39 // pred_check_branch
        %1277 = sbr.rel (%p1275) target = $region44
      $region43: #{resblock_forward.3} parent=39 // pred_region
        %s1278 = smul.u32 8, %s22
        %p1279 = scmp.lt.s32.totalorder %s21, 1
        %s1280 = scalar_select %p1279, %s21, 1
        %p1281 = scmp.lt.s32.totalorder %s1278, 15
        %s1282 = scalar_select %p1281, %s1278, 15
        %s1283 = smul.addr %s1282, 2
        %s1284 = smul.addr %s1280, 32
        %s1285 = sadd.s32 %s1283, %s1284
        %s1286 = smul.addr %s1285, 8
        %s1287 = scalar_lea.vmem %s2, %s1286
      $region44: #{resblock_forward.3} parent=39 // pred_fallthru
        _
      // Predicated region
      $region45: #{resblock_forward.3} parent=39 // pred_check
        %p1288 = pneg %p128
      $region46: #{resblock_forward.3} parent=39 // pred_check_branch
        %1290 = sbr.rel (%p1288) target = $region48
      $region47: #{resblock_forward.3} parent=39 // pred_region
        %p1291 = scmp.lt.s32.totalorder %s21, 1
        %s1292 = scalar_select %p1291, %s21, 1
        %p1293 = scmp.lt.s32.totalorder %s22, 1
        %s1294 = scalar_select %p1293, %s22, 1
        %s1295 = smul.addr %s1292, 2
        %s1296 = sadd.s32 %s1294, %s1295
        %s1297 = smul.addr %s1296, 2
        %s1298 = scalar_lea.vmem %s3, %s1297
      $region48: #{resblock_forward.3} parent=39 // pred_fallthru
        _
    $region40: #{resblock_forward.3} parent=5 // pred_fallthru
      _
  $region6: #{resblock_forward.3} parent=0 // loop_footer
    %s14 = sadd.s32 1, %s10
  $region7: #{resblock_forward.3} parent=0 // loop_footer_branch
    %9 = sbr.rel target = $region3
  $region8: #{resblock_forward.3} parent=0 // loop_exit
    _

// kernel: resblock_forward.4
$region0: #{resblock_forward.4}
  #allocation0 [shape = 'u32[]', space=smem, size = 0x4, offset = 0x4, fixed_abs, tag = 'smem constant byte address 0x4 - core index']
  #allocation1 [shape = 'u32[72,128]{1,0:T(1,128)}', space=vmem, size = 0x9000, scoped, tag = 'internal scratch']
  %s0 = inlined_call_operand.vmem [shape: f32[2,16,16,4], index: 0, kind: input, shape index: {}]
  %s1 = inlined_call_operand.vmem [shape: f32[1,4], index: 1, kind: input, shape index: {}]
  %s2 = inlined_call_operand.vmem [shape: f32[1,4], index: 2, kind: input, shape index: {}]
  %s3 = inlined_call_operand.vmem [shape: f32[36,4], index: 3, kind: input, shape index: {}]
  %s4 = inlined_call_operand.vmem [shape: f32[2,16,16,4], index: 4, kind: output, shape index: {0}]
  %s5 = inlined_call_operand.vmem [shape: f32[2,2,2,4], index: 5, kind: output, shape index: {1}]
  %6 = xla_tuple %s4, %s5
  %s7 = sld [smem:[#allocation0]]
  $region57: #{resblock_forward.4} parent=0
    _
  %s9 = ssub.s32 1, %s7
  %s10 = scalar_select 0, %s9, %s7
  loop: start=0, step=1, limit=6
  $region2: #{resblock_forward.4} parent=0 // loop_pre_header
    _
  $region3: #{resblock_forward.4} parent=0 // loop_header
    %s12 = sphi 0, %s16
    %p13 = scmp.ge.s32.totalorder %s12, 6
    %s19 = sphi 0, %s31
    %s20 = sphi 0, %s27
    %s21 = sphi 0, %s19
    %s22 = sphi 0, %s20
    %s23 = sphi 0, %s21
    %s24 = sphi 0, %s22
    %s34 = sphi 0, %s36
    %s37 = sphi 0, %s34
    %s38 = sphi 0, %s37
    %s54 = sphi 0, %s38
    %s58 = sphi 0, %s58
    %s60 = sphi 0, %s58
    %s61 = sphi 0, %s60
    %s75 = sphi 0, %s61
    %s79 = sphi 0, %s79
    %s81 = sphi 0, %s79
    %s82 = sphi 0, %s81
    %s96 = sphi 0, %s82
    %s100 = sphi 0, %s100
    %s102 = sphi 0, %s100
    %s103 = sphi 0, %s102
    %s117 = sphi 0, %s103
    %s125 = sphi 0, %s127
    %s128 = sphi 0, %s125
    %s129 = sphi 0, %s128
    %s145 = sphi 0, %s129
    %s153 = sphi 0, %s155
    %s156 = sphi 0, %s153
    %s157 = sphi 0, %s156
    %s173 = sphi 0, %s157
  $region4: #{resblock_forward.4} parent=0 // loop_header_branch
    %15 = sbr.rel (%p13) target = $region8
  $region5: #{resblock_forward.4} parent=0 // loop_body
    %s17 = ssub.s32 %s12, 1
    %s18 = ssub.s32 %s12, 2
    %s25 = sadd.s32 1, %s20
    %p26 = scmp.ge.s32.totalorder %s25, 2
    %s27 = scalar_select %p26, 0, %s25
    %s28 = sadd.s32 1, %s19
    %s29 = scalar_select %p26, %s28, %s19
    %p30 = scmp.ge.s32.totalorder %s29, 2
    %s31 = scalar_select %p30, 0, %s29
    %s32 = ssub.s32 %s19, %s31
    %p33 = scmp.eq.s32.totalorder %s32, 0
    %s35 = sadd.s32 %s34, 1
    %s36 = scalar_select %p33, %s34, %s35
    %p39 = pneg %p33
    %p40 = scmp.eq.s32.totalorder %s12, 3
    %p41 = por %p39, %p40
    %p42 = scmp.ne.s32.totalorder %s34, %s37
    %p43 = scmp.eq.s32.totalorder %s12, 0
    %p44 = por %p42, %p43
    %p45 = scmp.ne.s32.totalorder %s34, %s37
    %p46 = scmp.eq.s32.totalorder %s17, 3
    %p47 = por %p45, %p46
    %p48 = scmp.ne.s32.totalorder %s37, %s38
    %p49 = scmp.eq.s32.totalorder %s17, 0
    %p50 = por %p48, %p49
    %p51 = scmp.ne.s32.totalorder %s37, %s38
    %p52 = scmp.eq.s32.totalorder %s18, 3
    %p53 = por %p51, %p52
    %p55 = scmp.ne.s32.totalorder %s38, %s54
    %p56 = scmp.eq.s32.totalorder %s18, 0
    %p57 = por %p55, %p56
    %s59 = sadd.s32 %s58, 1
    %p62 = scmp.eq.s32.totalorder %s12, 3
    %p63 = scmp.ne.s32.totalorder %s58, %s60
    %p64 = scmp.eq.s32.totalorder %s12, 0
    %p65 = por %p63, %p64
    %p66 = scmp.ne.s32.totalorder %s58, %s60
    %p67 = scmp.eq.s32.totalorder %s17, 3
    %p68 = por %p66, %p67
    %p69 = scmp.ne.s32.totalorder %s60, %s61
    %p70 = scmp.eq.s32.totalorder %s17, 0
    %p71 = por %p69, %p70
    %p72 = scmp.ne.s32.totalorder %s60, %s61
    %p73 = scmp.eq.s32.totalorder %s18, 3
    %p74 = por %p72, %p73
    %p76 = scmp.ne.s32.totalorder %s61, %s75
    %p77 = scmp.eq.s32.totalorder %s18, 0
    %p78 = por %p76, %p77
    %s80 = sadd.s32 %s79, 1
    %p83 = scmp.eq.s32.totalorder %s12, 3
    %p84 = scmp.ne.s32.totalorder %s79, %s81
    %p85 = scmp.eq.s32.totalorder %s12, 0
    %p86 = por %p84, %p85
    %p87 = scmp.ne.s32.totalorder %s79, %s81
    %p88 = scmp.eq.s32.totalorder %s17, 3
    %p89 = por %p87, %p88
    %p90 = scmp.ne.s32.totalorder %s81, %s82
    %p91 = scmp.eq.s32.totalorder %s17, 0
    %p92 = por %p90, %p91
    %p93 = scmp.ne.s32.totalorder %s81, %s82
    %p94 = scmp.eq.s32.totalorder %s18, 3
    %p95 = por %p93, %p94
    %p97 = scmp.ne.s32.totalorder %s82, %s96
    %p98 = scmp.eq.s32.totalorder %s18, 0
    %p99 = por %p97, %p98
    %s101 = sadd.s32 %s100, 1
    %p104 = scmp.eq.s32.totalorder %s12, 3
    %p105 = scmp.ne.s32.totalorder %s100, %s102
    %p106 = scmp.eq.s32.totalorder %s12, 0
    %p107 = por %p105, %p106
    %p108 = scmp.ne.s32.totalorder %s100, %s102
    %p109 = scmp.eq.s32.totalorder %s17, 3
    %p110 = por %p108, %p109
    %p111 = scmp.ne.s32.totalorder %s102, %s103
    %p112 = scmp.eq.s32.totalorder %s17, 0
    %p113 = por %p111, %p112
    %p114 = scmp.ne.s32.totalorder %s102, %s103
    %p115 = scmp.eq.s32.totalorder %s18, 3
    %p116 = por %p114, %p115
    %p118 = scmp.ne.s32.totalorder %s103, %s117
    %p119 = scmp.eq.s32.totalorder %s18, 0
    %p120 = por %p118, %p119
    %s121 = ssub.s32 %s19, %s31
    %s122 = ssub.s32 %s20, %s27
    %s123 = sor.u32 %s121, %s122
    %p124 = scmp.eq.s32.totalorder %s123, 0
    %s126 = sadd.s32 %s125, 1
    %s127 = scalar_select %p124, %s125, %s126
    %p130 = pneg %p124
    %p131 = scmp.eq.s32.totalorder %s12, 3
    %p132 = por %p130, %p131
    %p133 = scmp.ne.s32.totalorder %s125, %s128
    %p134 = scmp.eq.s32.totalorder %s12, 0
    %p135 = por %p133, %p134
    %p136 = scmp.ne.s32.totalorder %s125, %s128
    %p137 = scmp.eq.s32.totalorder %s17, 3
    %p138 = por %p136, %p137
    %p139 = scmp.ne.s32.totalorder %s128, %s129
    %p140 = scmp.eq.s32.totalorder %s17, 0
    %p141 = por %p139, %p140
    %p142 = scmp.ne.s32.totalorder %s128, %s129
    %p143 = scmp.eq.s32.totalorder %s18, 3
    %p144 = por %p142, %p143
    %p146 = scmp.ne.s32.totalorder %s129, %s145
    %p147 = scmp.eq.s32.totalorder %s18, 0
    %p148 = por %p146, %p147
    %s149 = ssub.s32 %s19, %s31
    %s150 = ssub.s32 %s20, %s27
    %s151 = sor.u32 %s149, %s150
    %p152 = scmp.eq.s32.totalorder %s151, 0
    %s154 = sadd.s32 %s153, 1
    %s155 = scalar_select %p152, %s153, %s154
    %p158 = pneg %p152
    %p159 = scmp.eq.s32.totalorder %s12, 3
    %p160 = por %p158, %p159
    %p161 = scmp.ne.s32.totalorder %s153, %s156
    %p162 = scmp.eq.s32.totalorder %s12, 0
    %p163 = por %p161, %p162
    %p164 = scmp.ne.s32.totalorder %s153, %s156
    %p165 = scmp.eq.s32.totalorder %s17, 3
    %p166 = por %p164, %p165
    %p167 = scmp.ne.s32.totalorder %s156, %s157
    %p168 = scmp.eq.s32.totalorder %s17, 0
    %p169 = por %p167, %p168
    %p170 = scmp.ne.s32.totalorder %s156, %s157
    %p171 = scmp.eq.s32.totalorder %s18, 3
    %p172 = por %p170, %p171
    %p174 = scmp.ne.s32.totalorder %s157, %s173
    %p175 = scmp.eq.s32.totalorder %s18, 0
    %p176 = por %p174, %p175
    %p177 = scmp.le.s32.totalorder 1, %s12
    %p178 = scmp.lt.s32.totalorder %s12, 5
    %p179 = pnand %p177, %p178
    %p180 = pneg %p179
    // Predicated region
    $region9: #{resblock_forward.4} parent=5 // pred_check
      _
    $region10: #{resblock_forward.4} parent=5 // pred_check_branch
      %182 = sbr.rel (%p179) target = $region12
    $region11: #{resblock_forward.4} parent=5 // pred_region
      %s183 = ssub.s32 %s12, 1
      // Predicated region
      $region13: #{resblock_forward.4} parent=11 // pred_check
        %p184 = pneg %p71
      $region14: #{resblock_forward.4} parent=11 // pred_check_branch
        %186 = sbr.rel (%p184) target = $region16
      $region15: #{resblock_forward.4} parent=11 // pred_region
        _
      $region16: #{resblock_forward.4} parent=11 // pred_fallthru
        _
      // Predicated region
      $region17: #{resblock_forward.4} parent=11 // pred_check
        %p187 = pneg %p92
      $region18: #{resblock_forward.4} parent=11 // pred_check_branch
        %189 = sbr.rel (%p187) target = $region20
      $region19: #{resblock_forward.4} parent=11 // pred_region
        _
      $region20: #{resblock_forward.4} parent=11 // pred_fallthru
        _
      // Predicated region
      $region21: #{resblock_forward.4} parent=11 // pred_check
        %p190 = pneg %p113
      $region22: #{resblock_forward.4} parent=11 // pred_check_branch
        %192 = sbr.rel (%p190) target = $region24
      $region23: #{resblock_forward.4} parent=11 // pred_region
        _
      $region24: #{resblock_forward.4} parent=11 // pred_fallthru
        _
    $region12: #{resblock_forward.4} parent=5 // pred_fallthru
      _
    %p193 = scmp.lt.s32.totalorder %s12, 4
    // Predicated region
    $region25: #{resblock_forward.4} parent=5 // pred_check
      %p194 = pneg %p193
    $region26: #{resblock_forward.4} parent=5 // pred_check_branch
      %196 = sbr.rel (%p194) target = $region28
    $region27: #{resblock_forward.4} parent=5 // pred_region
      // Predicated region
      $region29: #{resblock_forward.4} parent=27 // pred_check
        %p197 = pneg %p44
      $region30: #{resblock_forward.4} parent=27 // pred_check_branch
        %199 = sbr.rel (%p197) target = $region32
      $region31: #{resblock_forward.4} parent=27 // pred_region
        %p200 = scmp.lt.s32.totalorder %s19, 1
        %s201 = scalar_select %p200, %s19, 1
        %s202 = smul.addr %s201, 32
        %s203 = smul.addr %s202, 8
        %s204 = scalar_lea.vmem %s0, %s203
      $region32: #{resblock_forward.4} parent=27 // pred_fallthru
        _
    $region28: #{resblock_forward.4} parent=5 // pred_fallthru
      _
    %p205 = scmp.le.s32.totalorder 1, %s12
    %p206 = scmp.lt.s32.totalorder %s12, 5
    %p207 = pnand %p205, %p206
    %p208 = pneg %p207
    // Predicated region
    $region33: #{resblock_forward.4} parent=5 // pred_check
      _
    $region34: #{resblock_forward.4} parent=5 // pred_check_branch
      %210 = sbr.rel (%p207) target = $region36
    $region35: #{resblock_forward.4} parent=5 // pred_region
      %s211 = ssub.s32 %s12, 1
      %p212 = scmp.lt.s32.totalorder %s21, 1
      %s213 = scalar_select %p212, %s21, 1
      %s214 = smul.addr %s213, 32
      %s215 = smul.addr %s214, 8
      %s216 = scalar_lea.vmem %s0, %s215
      %p217 = pneg %p50
      %p218 = pneg %p47
      %p219 = pneg %p71
      %p220 = pneg %p68
      %p221 = pneg %p92
      %p222 = pneg %p89
      %p223 = pneg %p113
      %p224 = pneg %p110
      %p225 = pneg %p141
      %p226 = pneg %p138
      %s227 = smul.u32 8, %s22
      %p228 = scmp.lt.s32.totalorder %s21, 1
      %s229 = scalar_select %p228, %s21, 1
      %p230 = scmp.lt.s32.totalorder %s227, 15
      %s231 = scalar_select %p230, %s227, 15
      %s232 = smul.addr %s231, 2
      %s233 = smul.addr %s229, 32
      %s234 = sadd.s32 %s232, %s233
      %s235 = smul.addr %s234, 8
      %s236 = scalar_lea.vmem %s4, %s235
      %p237 = pneg %p169
      %p238 = pneg %p166
      %p239 = scmp.lt.s32.totalorder %s21, 1
      %s240 = scalar_select %p239, %s21, 1
      %p241 = scmp.lt.s32.totalorder %s22, 1
      %s242 = scalar_select %p241, %s22, 1
      %s243 = smul.addr %s240, 2
      %s244 = sadd.s32 %s242, %s243
      %s245 = smul.addr %s244, 2
      %s246 = scalar_lea.vmem %s5, %s245
      %p247 = scmp.lt.s32.totalorder %s21, 1
      %s248 = scalar_select %p247, %s21, 1
      %s249 = smul.addr %s248, 32
      %s250 = smul.addr %s249, 8
      %s251 = scalar_lea.vmem %s0, %s250
      %s252 = smul.u32 8, %s22
      %p253 = scmp.lt.s32.totalorder %s21, 1
      %s254 = scalar_select %p253, %s21, 1
      %p255 = scmp.lt.s32.totalorder %s252, 15
      %s256 = scalar_select %p255, %s252, 15
      %s257 = smul.addr %s256, 2
      %s258 = smul.addr %s254, 32
      %s259 = sadd.s32 %s257, %s258
      %s260 = smul.addr %s259, 8
      %s261 = scalar_lea.vmem %s4, %s260
      %s262 = smul.u32 8, %s22
      %p263 = scmp.lt.s32.totalorder %s21, 1
      %s264 = scalar_select %p263, %s21, 1
      %p265 = scmp.lt.s32.totalorder %s22, 1
      %s266 = scalar_select %p265, %s22, 1
      %s267 = smul.addr %s264, 2
      %s268 = sadd.s32 %s266, %s267
      %s269 = smul.addr %s268, 2
      %s270 = scalar_lea.vmem %s5, %s269
      %s271 = smul.u32 %s22, 8
      %s272 = ssub.s32 %s271, 1
      %p273 = scmp.gt.s32.totalorder %s272, 0
      %s274 = scalar_select %p273, %s272, 0
      %s275 = sadd.s32 %s271, 8
      %p276 = scmp.lt.s32.totalorder %s275, 15
      %s277 = scalar_select %p276, %s275, 15
      %s278 = smul.u32 %s274, 16
      %s279 = scalar_lea.vmem %s251, %s278
      %v280 = vld [vmem:[%s279] sm:$0xff]
      %v281 = vld [vmem:[%s279 + $0x8] sm:$0xff]
      %s282 = smul.u32 %s271, 16
      %s283 = scalar_lea.vmem %s251, %s282
      %v284 = vld [vmem:[%s283] sm:$0xff]
      %v285 = vld [vmem:[%s283 + $0x8] sm:$0xff]
      %v286 = vld [vmem:[%s283 + $0x10] sm:$0xff]
      %v287 = vld [vmem:[%s283 + $0x18] sm:$0xff]
      %v288 = vld [vmem:[%s283 + $0x20] sm:$0xff]
      %v289 = vld [vmem:[%s283 + $0x28] sm:$0xff]
      %v290 = vld [vmem:[%s283 + $0x30] sm:$0xff]
      %v291 = vld [vmem:[%s283 + $0x38] sm:$0xff]
      %v292 = vld [vmem:[%s283 + $0x40] sm:$0xff]
      %v293 = vld [vmem:[%s283 + $0x48] sm:$0xff]
      %v294 = vld [vmem:[%s283 + $0x50] sm:$0xff]
      %v295 = vld [vmem:[%s283 + $0x58] sm:$0xff]
      %v296 = vld [vmem:[%s283 + $0x60] sm:$0xff]
      %v297 = vld [vmem:[%s283 + $0x68] sm:$0xff]
      %v298 = vld [vmem:[%s283 + $0x70] sm:$0xff]
      %v299 = vld [vmem:[%s283 + $0x78] sm:$0xff]
      %s300 = smul.u32 %s277, 16
      %s301 = scalar_lea.vmem %s251, %s300
      %v302 = vld [vmem:[%s301] sm:$0xff]
      %v303 = vld [vmem:[%s301 + $0x8] sm:$0xff]
      %vm324 = vcmask 1040384
      %v325 = vrot.slane %v280, 7
      %v326 = vrot.slane %v281, 7
      %v327 = vsel %vm324, %v325, %v326
      %v328 = vrot.slane %v284, 7
      %v329 = vrot.slane %v285, 7
      %v330 = vsel %vm324, %v328, %v329
      %v331 = vrot.slane %v286, 7
      %v332 = vrot.slane %v287, 7
      %v333 = vsel %vm324, %v331, %v332
      %v334 = vrot.slane %v288, 7
      %v335 = vrot.slane %v289, 7
      %v336 = vsel %vm324, %v334, %v335
      %v337 = vrot.slane %v290, 7
      %v338 = vrot.slane %v291, 7
      %v339 = vsel %vm324, %v337, %v338
      %v340 = vrot.slane %v292, 7
      %v341 = vrot.slane %v293, 7
      %v342 = vsel %vm324, %v340, %v341
      %v343 = vrot.slane %v294, 7
      %v344 = vrot.slane %v295, 7
      %v345 = vsel %vm324, %v343, %v344
      %v346 = vrot.slane %v296, 7
      %v347 = vrot.slane %v297, 7
      %v348 = vsel %vm324, %v346, %v347
      %v349 = vrot.slane %v298, 7
      %v350 = vrot.slane %v299, 7
      %v351 = vsel %vm324, %v349, %v350
      %v352 = vrot.slane %v302, 7
      %v353 = vrot.slane %v303, 7
      %v354 = vsel %vm324, %v352, %v353
      %v385 = vrot.slane %v281, 6
      %v386 = vrot.slane %v285, 6
      %v387 = vrot.slane %v287, 6
      %v388 = vrot.slane %v289, 6
      %v389 = vrot.slane %v291, 6
      %v390 = vrot.slane %v293, 6
      %v391 = vrot.slane %v295, 6
      %v392 = vrot.slane %v297, 6
      %v393 = vrot.slane %v299, 6
      %v394 = vrot.slane %v303, 6
      %v405 = vsel %vm324, %v280, %v325
      %v406 = vsel %vm324, %v284, %v328
      %v407 = vsel %vm324, %v286, %v331
      %v408 = vsel %vm324, %v288, %v334
      %v409 = vsel %vm324, %v290, %v337
      %v410 = vsel %vm324, %v292, %v340
      %v411 = vsel %vm324, %v294, %v343
      %v412 = vsel %vm324, %v296, %v346
      %v413 = vsel %vm324, %v298, %v349
      %v414 = vsel %vm324, %v302, %v352
      %v415 = vsel %vm324, %v326, %v385
      %v416 = vsel %vm324, %v329, %v386
      %v417 = vsel %vm324, %v332, %v387
      %v418 = vsel %vm324, %v335, %v388
      %v419 = vsel %vm324, %v338, %v389
      %v420 = vsel %vm324, %v341, %v390
      %v421 = vsel %vm324, %v344, %v391
      %v422 = vsel %vm324, %v347, %v392
      %v423 = vsel %vm324, %v350, %v393
      %v424 = vsel %vm324, %v353, %v394
      %v425 = vld [vmem:[%s1] sm:$0x1]
      %v427 = vperm.slane %v425, 0
      %v429 = vmul.f32 %v405, %v427
      %v430 = vmul.f32 %v327, %v427
      %v431 = vmul.f32 %v415, %v427
      %v432 = vmul.f32 %v406, %v427
      %v433 = vmul.f32 %v330, %v427
      %v434 = vmul.f32 %v416, %v427
      %v435 = vmul.f32 %v407, %v427
      %v436 = vmul.f32 %v333, %v427
      %v437 = vmul.f32 %v417, %v427
      %v438 = vmul.f32 %v408, %v427
      %v439 = vmul.f32 %v336, %v427
      %v440 = vmul.f32 %v418, %v427
      %v441 = vmul.f32 %v409, %v427
      %v442 = vmul.f32 %v339, %v427
      %v443 = vmul.f32 %v419, %v427
      %v444 = vmul.f32 %v410, %v427
      %v445 = vmul.f32 %v342, %v427
      %v446 = vmul.f32 %v420, %v427
      %v447 = vmul.f32 %v411, %v427
      %v448 = vmul.f32 %v345, %v427
      %v449 = vmul.f32 %v421, %v427
      %v450 = vmul.f32 %v412, %v427
      %v451 = vmul.f32 %v348, %v427
      %v452 = vmul.f32 %v422, %v427
      %v453 = vmul.f32 %v413, %v427
      %v454 = vmul.f32 %v351, %v427
      %v455 = vmul.f32 %v423, %v427
      %v456 = vmul.f32 %v414, %v427
      %v457 = vmul.f32 %v354, %v427
      %v458 = vmul.f32 %v424, %v427
      %v459 = vld [vmem:[%s2] sm:$0x1]
      %v461 = vperm.slane %v459, 0
      %v463 = vadd.f32 %v429, %v461
      %v464 = vadd.f32 %v430, %v461
      %v465 = vadd.f32 %v431, %v461
      %v466 = vadd.f32 %v432, %v461
      %v467 = vadd.f32 %v433, %v461
      %v468 = vadd.f32 %v434, %v461
      %v469 = vadd.f32 %v435, %v461
      %v470 = vadd.f32 %v436, %v461
      %v471 = vadd.f32 %v437, %v461
      %v472 = vadd.f32 %v438, %v461
      %v473 = vadd.f32 %v439, %v461
      %v474 = vadd.f32 %v440, %v461
      %v475 = vadd.f32 %v441, %v461
      %v476 = vadd.f32 %v442, %v461
      %v477 = vadd.f32 %v443, %v461
      %v478 = vadd.f32 %v444, %v461
      %v479 = vadd.f32 %v445, %v461
      %v480 = vadd.f32 %v446, %v461
      %v481 = vadd.f32 %v447, %v461
      %v482 = vadd.f32 %v448, %v461
      %v483 = vadd.f32 %v449, %v461
      %v484 = vadd.f32 %v450, %v461
      %v485 = vadd.f32 %v451, %v461
      %v486 = vadd.f32 %v452, %v461
      %v487 = vadd.f32 %v453, %v461
      %v488 = vadd.f32 %v454, %v461
      %v489 = vadd.f32 %v455, %v461
      %v490 = vadd.f32 %v456, %v461
      %v491 = vadd.f32 %v457, %v461
      %v492 = vadd.f32 %v458, %v461
      %v493 = vmax.f32 %v463, 0.0
      %v494 = vmax.f32 %v464, 0.0
      %v495 = vmax.f32 %v465, 0.0
      %v496 = vmax.f32 %v466, 0.0
      %v497 = vmax.f32 %v467, 0.0
      %v498 = vmax.f32 %v468, 0.0
      %v499 = vmax.f32 %v469, 0.0
      %v500 = vmax.f32 %v470, 0.0
      %v501 = vmax.f32 %v471, 0.0
      %v502 = vmax.f32 %v472, 0.0
      %v503 = vmax.f32 %v473, 0.0
      %v504 = vmax.f32 %v474, 0.0
      %v505 = vmax.f32 %v475, 0.0
      %v506 = vmax.f32 %v476, 0.0
      %v507 = vmax.f32 %v477, 0.0
      %v508 = vmax.f32 %v478, 0.0
      %v509 = vmax.f32 %v479, 0.0
      %v510 = vmax.f32 %v480, 0.0
      %v511 = vmax.f32 %v481, 0.0
      %v512 = vmax.f32 %v482, 0.0
      %v513 = vmax.f32 %v483, 0.0
      %v514 = vmax.f32 %v484, 0.0
      %v515 = vmax.f32 %v485, 0.0
      %v516 = vmax.f32 %v486, 0.0
      %v517 = vmax.f32 %v487, 0.0
      %v518 = vmax.f32 %v488, 0.0
      %v519 = vmax.f32 %v489, 0.0
      %v520 = vmax.f32 %v490, 0.0
      %v521 = vmax.f32 %v491, 0.0
      %v522 = vmax.f32 %v492, 0.0
      %v523 = vld [vmem:[%s3] sm:$0xff]
      %v524 = vld [vmem:[%s3 + $0x8] sm:$0xff]
      %v525 = vld [vmem:[%s3 + $0x10] sm:$0xff]
      %v526 = vld [vmem:[%s3 + $0x18] sm:$0xff]
      %v527 = vld [vmem:[%s3 + $0x20] sm:$0xf]
      %vm552 = vcmask 1046528
      %v553 = vrot.slane %v493, 1
      %v554 = vrot.slane %v494, 1
      %v555 = vsel %vm552, %v553, %v554
      %v556 = vrot.slane %v495, 1
      %v557 = vsel %vm552, %v554, %v556
      %v558 = vrot.slane %v496, 1
      %v559 = vrot.slane %v497, 1
      %v560 = vsel %vm552, %v558, %v559
      %v561 = vrot.slane %v498, 1
      %v562 = vsel %vm552, %v559, %v561
      %v563 = vrot.slane %v499, 1
      %v564 = vrot.slane %v500, 1
      %v565 = vsel %vm552, %v563, %v564
      %v566 = vrot.slane %v501, 1
      %v567 = vsel %vm552, %v564, %v566
      %v568 = vrot.slane %v502, 1
      %v569 = vrot.slane %v503, 1
      %v570 = vsel %vm552, %v568, %v569
      %v571 = vrot.slane %v504, 1
      %v572 = vsel %vm552, %v569, %v571
      %v573 = vrot.slane %v505, 1
      %v574 = vrot.slane %v506, 1
      %v575 = vsel %vm552, %v573, %v574
      %v576 = vrot.slane %v507, 1
      %v577 = vsel %vm552, %v574, %v576
      %v578 = vrot.slane %v508, 1
      %v579 = vrot.slane %v509, 1
      %v580 = vsel %vm552, %v578, %v579
      %v581 = vrot.slane %v510, 1
      %v582 = vsel %vm552, %v579, %v581
      %v583 = vrot.slane %v511, 1
      %v584 = vrot.slane %v512, 1
      %v585 = vsel %vm552, %v583, %v584
      %v586 = vrot.slane %v513, 1
      %v587 = vsel %vm552, %v584, %v586
      %v588 = vrot.slane %v514, 1
      %v589 = vrot.slane %v515, 1
      %v590 = vsel %vm552, %v588, %v589
      %v591 = vrot.slane %v516, 1
      %v592 = vsel %vm552, %v589, %v591
      %vm593 = vcmask 1045504
      %v594 = vrot.slane %v493, 2
      %v595 = vrot.slane %v494, 2
      %v596 = vsel %vm593, %v594, %v595
      %v597 = vrot.slane %v495, 2
      %v598 = vsel %vm593, %v595, %v597
      %v599 = vrot.slane %v496, 2
      %v600 = vrot.slane %v497, 2
      %v601 = vsel %vm593, %v599, %v600
      %v602 = vrot.slane %v498, 2
      %v603 = vsel %vm593, %v600, %v602
      %v604 = vrot.slane %v499, 2
      %v605 = vrot.slane %v500, 2
      %v606 = vsel %vm593, %v604, %v605
      %v607 = vrot.slane %v501, 2
      %v608 = vsel %vm593, %v605, %v607
      %v609 = vrot.slane %v502, 2
      %v610 = vrot.slane %v503, 2
      %v611 = vsel %vm593, %v609, %v610
      %v612 = vrot.slane %v504, 2
      %v613 = vsel %vm593, %v610, %v612
      %v614 = vrot.slane %v505, 2
      %v615 = vrot.slane %v506, 2
      %v616 = vsel %vm593, %v614, %v615
      %v617 = vrot.slane %v507, 2
      %v618 = vsel %vm593, %v615, %v617
      %v619 = vrot.slane %v508, 2
      %v620 = vrot.slane %v509, 2
      %v621 = vsel %vm593, %v619, %v620
      %v622 = vrot.slane %v510, 2
      %v623 = vsel %vm593, %v620, %v622
      %v624 = vrot.slane %v511, 2
      %v625 = vrot.slane %v512, 2
      %v626 = vsel %vm593, %v624, %v625
      %v627 = vrot.slane %v513, 2
      %v628 = vsel %vm593, %v625, %v627
      %v629 = vrot.slane %v514, 2
      %v630 = vrot.slane %v515, 2
      %v631 = vsel %vm593, %v629, %v630
      %v632 = vrot.slane %v516, 2
      %v633 = vsel %vm593, %v630, %v632
      %v637 = vrot.slane %v517, 1
      %v638 = vrot.slane %v518, 1
      %v639 = vsel %vm552, %v637, %v638
      %v640 = vrot.slane %v519, 1
      %v641 = vsel %vm552, %v638, %v640
      %v642 = vrot.slane %v517, 2
      %v643 = vrot.slane %v518, 2
      %v644 = vsel %vm593, %v642, %v643
      %v645 = vrot.slane %v519, 2
      %v646 = vsel %vm593, %v643, %v645
      %v650 = vrot.slane %v520, 1
      %v651 = vrot.slane %v521, 1
      %v652 = vsel %vm552, %v650, %v651
      %v653 = vrot.slane %v522, 1
      %v654 = vsel %vm552, %v651, %v653
      %v655 = vrot.slane %v520, 2
      %v656 = vrot.slane %v521, 2
      %v657 = vsel %vm593, %v655, %v656
      %v658 = vrot.slane %v522, 2
      %v659 = vsel %vm593, %v656, %v658
      %660 = vrot.lane.b32.xlu0 %v555, 4
      %v661 = vpop.permute.xlu0 %660
      %662 = vrot.lane.b32.xlu0 %v557, 4
      %v663 = vpop.permute.xlu0 %662
      %664 = vrot.lane.b32.xlu0 %v560, 4
      %v665 = vpop.permute.xlu0 %664
      %666 = vrot.lane.b32.xlu0 %v562, 4
      %v667 = vpop.permute.xlu0 %666
      %668 = vrot.lane.b32.xlu0 %v565, 4
      %v669 = vpop.permute.xlu0 %668
      %670 = vrot.lane.b32.xlu0 %v567, 4
      %v671 = vpop.permute.xlu0 %670
      %672 = vrot.lane.b32.xlu0 %v570, 4
      %v673 = vpop.permute.xlu0 %672
      %674 = vrot.lane.b32.xlu0 %v572, 4
      %v675 = vpop.permute.xlu0 %674
      %676 = vrot.lane.b32.xlu0 %v575, 4
      %v677 = vpop.permute.xlu0 %676
      %678 = vrot.lane.b32.xlu0 %v577, 4
      %v679 = vpop.permute.xlu0 %678
      %680 = vrot.lane.b32.xlu0 %v580, 4
      %v681 = vpop.permute.xlu0 %680
      %682 = vrot.lane.b32.xlu0 %v582, 4
      %v683 = vpop.permute.xlu0 %682
      %684 = vrot.lane.b32.xlu0 %v585, 4
      %v685 = vpop.permute.xlu0 %684
      %686 = vrot.lane.b32.xlu0 %v587, 4
      %v687 = vpop.permute.xlu0 %686
      %688 = vrot.lane.b32.xlu0 %v590, 4
      %v689 = vpop.permute.xlu0 %688
      %690 = vrot.lane.b32.xlu0 %v592, 4
      %v691 = vpop.permute.xlu0 %690
      %708 = vrot.lane.b32.xlu0 %v596, 8
      %v709 = vpop.permute.xlu0 %708
      %710 = vrot.lane.b32.xlu0 %v598, 8
      %v711 = vpop.permute.xlu0 %710
      %712 = vrot.lane.b32.xlu0 %v601, 8
      %v713 = vpop.permute.xlu0 %712
      %714 = vrot.lane.b32.xlu0 %v603, 8
      %v715 = vpop.permute.xlu0 %714
      %716 = vrot.lane.b32.xlu0 %v606, 8
      %v717 = vpop.permute.xlu0 %716
      %718 = vrot.lane.b32.xlu0 %v608, 8
      %v719 = vpop.permute.xlu0 %718
      %720 = vrot.lane.b32.xlu0 %v611, 8
      %v721 = vpop.permute.xlu0 %720
      %722 = vrot.lane.b32.xlu0 %v613, 8
      %v723 = vpop.permute.xlu0 %722
      %724 = vrot.lane.b32.xlu0 %v616, 8
      %v725 = vpop.permute.xlu0 %724
      %726 = vrot.lane.b32.xlu0 %v618, 8
      %v727 = vpop.permute.xlu0 %726
      %728 = vrot.lane.b32.xlu0 %v621, 8
      %v729 = vpop.permute.xlu0 %728
      %730 = vrot.lane.b32.xlu0 %v623, 8
      %v731 = vpop.permute.xlu0 %730
      %732 = vrot.lane.b32.xlu0 %v626, 8
      %v733 = vpop.permute.xlu0 %732
      %734 = vrot.lane.b32.xlu0 %v628, 8
      %v735 = vpop.permute.xlu0 %734
      %736 = vrot.lane.b32.xlu0 %v631, 8
      %v737 = vpop.permute.xlu0 %736
      %738 = vrot.lane.b32.xlu0 %v633, 8
      %v739 = vpop.permute.xlu0 %738
      %756 = vrot.lane.b32.xlu0 %v496, 12
      %v757 = vpop.permute.xlu0 %756
      %758 = vrot.lane.b32.xlu0 %v497, 12
      %v759 = vpop.permute.xlu0 %758
      %760 = vrot.lane.b32.xlu0 %v499, 12
      %v761 = vpop.permute.xlu0 %760
      %762 = vrot.lane.b32.xlu0 %v500, 12
      %v763 = vpop.permute.xlu0 %762
      %764 = vrot.lane.b32.xlu0 %v502, 12
      %v765 = vpop.permute.xlu0 %764
      %766 = vrot.lane.b32.xlu0 %v503, 12
      %v767 = vpop.permute.xlu0 %766
      %768 = vrot.lane.b32.xlu0 %v505, 12
      %v769 = vpop.permute.xlu0 %768
      %770 = vrot.lane.b32.xlu0 %v506, 12
      %v771 = vpop.permute.xlu0 %770
      %772 = vrot.lane.b32.xlu0 %v508, 12
      %v773 = vpop.permute.xlu0 %772
      %774 = vrot.lane.b32.xlu0 %v509, 12
      %v775 = vpop.permute.xlu0 %774
      %776 = vrot.lane.b32.xlu0 %v511, 12
      %v777 = vpop.permute.xlu0 %776
      %778 = vrot.lane.b32.xlu0 %v512, 12
      %v779 = vpop.permute.xlu0 %778
      %780 = vrot.lane.b32.xlu0 %v514, 12
      %v781 = vpop.permute.xlu0 %780
      %782 = vrot.lane.b32.xlu0 %v515, 12
      %v783 = vpop.permute.xlu0 %782
      %784 = vrot.lane.b32.xlu0 %v517, 12
      %v785 = vpop.permute.xlu0 %784
      %786 = vrot.lane.b32.xlu0 %v518, 12
      %v787 = vpop.permute.xlu0 %786
      %804 = vrot.lane.b32.xlu0 %v560, 16
      %v805 = vpop.permute.xlu0 %804
      %806 = vrot.lane.b32.xlu0 %v562, 16
      %v807 = vpop.permute.xlu0 %806
      %808 = vrot.lane.b32.xlu0 %v565, 16
      %v809 = vpop.permute.xlu0 %808
      %810 = vrot.lane.b32.xlu0 %v567, 16
      %v811 = vpop.permute.xlu0 %810
      %812 = vrot.lane.b32.xlu0 %v570, 16
      %v813 = vpop.permute.xlu0 %812
      %814 = vrot.lane.b32.xlu0 %v572, 16
      %v815 = vpop.permute.xlu0 %814
      %816 = vrot.lane.b32.xlu0 %v575, 16
      %v817 = vpop.permute.xlu0 %816
      %818 = vrot.lane.b32.xlu0 %v577, 16
      %v819 = vpop.permute.xlu0 %818
      %820 = vrot.lane.b32.xlu0 %v580, 16
      %v821 = vpop.permute.xlu0 %820
      %822 = vrot.lane.b32.xlu0 %v582, 16
      %v823 = vpop.permute.xlu0 %822
      %824 = vrot.lane.b32.xlu0 %v585, 16
      %v825 = vpop.permute.xlu0 %824
      %826 = vrot.lane.b32.xlu0 %v587, 16
      %v827 = vpop.permute.xlu0 %826
      %828 = vrot.lane.b32.xlu0 %v590, 16
      %v829 = vpop.permute.xlu0 %828
      %830 = vrot.lane.b32.xlu0 %v592, 16
      %v831 = vpop.permute.xlu0 %830
      %832 = vrot.lane.b32.xlu0 %v639, 16
      %v833 = vpop.permute.xlu0 %832
      %834 = vrot.lane.b32.xlu0 %v641, 16
      %v835 = vpop.permute.xlu0 %834
      %852 = vrot.lane.b32.xlu0 %v601, 20
      %v853 = vpop.permute.xlu0 %852
      %854 = vrot.lane.b32.xlu0 %v603, 20
      %v855 = vpop.permute.xlu0 %854
      %856 = vrot.lane.b32.xlu0 %v606, 20
      %v857 = vpop.permute.xlu0 %856
      %858 = vrot.lane.b32.xlu0 %v608, 20
      %v859 = vpop.permute.xlu0 %858
      %860 = vrot.lane.b32.xlu0 %v611, 20
      %v861 = vpop.permute.xlu0 %860
      %862 = vrot.lane.b32.xlu0 %v613, 20
      %v863 = vpop.permute.xlu0 %862
      %864 = vrot.lane.b32.xlu0 %v616, 20
      %v865 = vpop.permute.xlu0 %864
      %866 = vrot.lane.b32.xlu0 %v618, 20
      %v867 = vpop.permute.xlu0 %866
      %868 = vrot.lane.b32.xlu0 %v621, 20
      %v869 = vpop.permute.xlu0 %868
      %870 = vrot.lane.b32.xlu0 %v623, 20
      %v871 = vpop.permute.xlu0 %870
      %872 = vrot.lane.b32.xlu0 %v626, 20
      %v873 = vpop.permute.xlu0 %872
      %874 = vrot.lane.b32.xlu0 %v628, 20
      %v875 = vpop.permute.xlu0 %874
      %876 = vrot.lane.b32.xlu0 %v631, 20
      %v877 = vpop.permute.xlu0 %876
      %878 = vrot.lane.b32.xlu0 %v633, 20
      %v879 = vpop.permute.xlu0 %878
      %880 = vrot.lane.b32.xlu0 %v644, 20
      %v881 = vpop.permute.xlu0 %880
      %882 = vrot.lane.b32.xlu0 %v646, 20
      %v883 = vpop.permute.xlu0 %882
      %900 = vrot.lane.b32.xlu0 %v499, 24
      %v901 = vpop.permute.xlu0 %900
      %902 = vrot.lane.b32.xlu0 %v500, 24
      %v903 = vpop.permute.xlu0 %902
      %904 = vrot.lane.b32.xlu0 %v502, 24
      %v905 = vpop.permute.xlu0 %904
      %906 = vrot.lane.b32.xlu0 %v503, 24
      %v907 = vpop.permute.xlu0 %906
      %908 = vrot.lane.b32.xlu0 %v505, 24
      %v909 = vpop.permute.xlu0 %908
      %910 = vrot.lane.b32.xlu0 %v506, 24
      %v911 = vpop.permute.xlu0 %910
      %912 = vrot.lane.b32.xlu0 %v508, 24
      %v913 = vpop.permute.xlu0 %912
      %914 = vrot.lane.b32.xlu0 %v509, 24
      %v915 = vpop.permute.xlu0 %914
      %916 = vrot.lane.b32.xlu0 %v511, 24
      %v917 = vpop.permute.xlu0 %916
      %918 = vrot.lane.b32.xlu0 %v512, 24
      %v919 = vpop.permute.xlu0 %918
      %920 = vrot.lane.b32.xlu0 %v514, 24
      %v921 = vpop.permute.xlu0 %920
      %922 = vrot.lane.b32.xlu0 %v515, 24
      %v923 = vpop.permute.xlu0 %922
      %924 = vrot.lane.b32.xlu0 %v517, 24
      %v925 = vpop.permute.xlu0 %924
      %926 = vrot.lane.b32.xlu0 %v518, 24
      %v927 = vpop.permute.xlu0 %926
      %928 = vrot.lane.b32.xlu0 %v520, 24
      %v929 = vpop.permute.xlu0 %928
      %930 = vrot.lane.b32.xlu0 %v521, 24
      %v931 = vpop.permute.xlu0 %930
      %948 = vrot.lane.b32.xlu0 %v565, 28
      %v949 = vpop.permute.xlu0 %948
      %950 = vrot.lane.b32.xlu0 %v567, 28
      %v951 = vpop.permute.xlu0 %950
      %952 = vrot.lane.b32.xlu0 %v570, 28
      %v953 = vpop.permute.xlu0 %952
      %954 = vrot.lane.b32.xlu0 %v572, 28
      %v955 = vpop.permute.xlu0 %954
      %956 = vrot.lane.b32.xlu0 %v575, 28
      %v957 = vpop.permute.xlu0 %956
      %958 = vrot.lane.b32.xlu0 %v577, 28
      %v959 = vpop.permute.xlu0 %958
      %960 = vrot.lane.b32.xlu0 %v580, 28
      %v961 = vpop.permute.xlu0 %960
      %962 = vrot.lane.b32.xlu0 %v582, 28
      %v963 = vpop.permute.xlu0 %962
      %964 = vrot.lane.b32.xlu0 %v585, 28
      %v965 = vpop.permute.xlu0 %964
      %966 = vrot.lane.b32.xlu0 %v587, 28
      %v967 = vpop.permute.xlu0 %966
      %968 = vrot.lane.b32.xlu0 %v590, 28
      %v969 = vpop.permute.xlu0 %968
      %970 = vrot.lane.b32.xlu0 %v592, 28
      %v971 = vpop.permute.xlu0 %970
      %972 = vrot.lane.b32.xlu0 %v639, 28
      %v973 = vpop.permute.xlu0 %972
      %974 = vrot.lane.b32.xlu0 %v641, 28
      %v975 = vpop.permute.xlu0 %974
      %976 = vrot.lane.b32.xlu0 %v652, 28
      %v977 = vpop.permute.xlu0 %976
      %978 = vrot.lane.b32.xlu0 %v654, 28
      %v979 = vpop.permute.xlu0 %978
      %996 = vrot.lane.b32.xlu0 %v606, 32
      %v997 = vpop.permute.xlu0 %996
      %998 = vrot.lane.b32.xlu0 %v608, 32
      %v999 = vpop.permute.xlu0 %998
      %1000 = vrot.lane.b32.xlu0 %v611, 32
      %v1001 = vpop.permute.xlu0 %1000
      %1002 = vrot.lane.b32.xlu0 %v613, 32
      %v1003 = vpop.permute.xlu0 %1002
      %1004 = vrot.lane.b32.xlu0 %v616, 32
      %v1005 = vpop.permute.xlu0 %1004
      %1006 = vrot.lane.b32.xlu0 %v618, 32
      %v1007 = vpop.permute.xlu0 %1006
      %1008 = vrot.lane.b32.xlu0 %v621, 32
      %v1009 = vpop.permute.xlu0 %1008
      %1010 = vrot.lane.b32.xlu0 %v623, 32
      %v1011 = vpop.permute.xlu0 %1010
      %1012 = vrot.lane.b32.xlu0 %v626, 32
      %v1013 = vpop.permute.xlu0 %1012
      %1014 = vrot.lane.b32.xlu0 %v628, 32
      %v1015 = vpop.permute.xlu0 %1014
      %1016 = vrot.lane.b32.xlu0 %v631, 32
      %v1017 = vpop.permute.xlu0 %1016
      %1018 = vrot.lane.b32.xlu0 %v633, 32
      %v1019 = vpop.permute.xlu0 %1018
      %1020 = vrot.lane.b32.xlu0 %v644, 32
      %v1021 = vpop.permute.xlu0 %1020
      %1022 = vrot.lane.b32.xlu0 %v646, 32
      %v1023 = vpop.permute.xlu0 %1022
      %1024 = vrot.lane.b32.xlu0 %v657, 32
      %v1025 = vpop.permute.xlu0 %1024
      %1026 = vrot.lane.b32.xlu0 %v659, 32
      %v1027 = vpop.permute.xlu0 %1026
      %vm1044 = vcmask 31744
      %v1045 = vsel %vm1044, %v493, %v661
      %v1046 = vsel %vm1044, %v494, %v663
      %v1047 = vsel %vm1044, %v496, %v665
      %v1048 = vsel %vm1044, %v497, %v667
      %v1049 = vsel %vm1044, %v499, %v669
      %v1050 = vsel %vm1044, %v500, %v671
      %v1051 = vsel %vm1044, %v502, %v673
      %v1052 = vsel %vm1044, %v503, %v675
      %v1053 = vsel %vm1044, %v505, %v677
      %v1054 = vsel %vm1044, %v506, %v679
      %v1055 = vsel %vm1044, %v508, %v681
      %v1056 = vsel %vm1044, %v509, %v683
      %v1057 = vsel %vm1044, %v511, %v685
      %v1058 = vsel %vm1044, %v512, %v687
      %v1059 = vsel %vm1044, %v514, %v689
      %v1060 = vsel %vm1044, %v515, %v691
      %vm1061 = vcmask 64512
      %v1062 = vsel %vm1061, %v1045, %v709
      %v1063 = vsel %vm1061, %v1046, %v711
      %v1064 = vsel %vm1061, %v1047, %v713
      %v1065 = vsel %vm1061, %v1048, %v715
      %v1066 = vsel %vm1061, %v1049, %v717
      %v1067 = vsel %vm1061, %v1050, %v719
      %v1068 = vsel %vm1061, %v1051, %v721
      %v1069 = vsel %vm1061, %v1052, %v723
      %v1070 = vsel %vm1061, %v1053, %v725
      %v1071 = vsel %vm1061, %v1054, %v727
      %v1072 = vsel %vm1061, %v1055, %v729
      %v1073 = vsel %vm1061, %v1056, %v731
      %v1074 = vsel %vm1061, %v1057, %v733
      %v1075 = vsel %vm1061, %v1058, %v735
      %v1076 = vsel %vm1061, %v1059, %v737
      %v1077 = vsel %vm1061, %v1060, %v739
      %vm1078 = vcmask 97280
      %v1079 = vsel %vm1078, %v1062, %v757
      %v1080 = vsel %vm1078, %v1063, %v759
      %v1081 = vsel %vm1078, %v1064, %v761
      %v1082 = vsel %vm1078, %v1065, %v763
      %v1083 = vsel %vm1078, %v1066, %v765
      %v1084 = vsel %vm1078, %v1067, %v767
      %v1085 = vsel %vm1078, %v1068, %v769
      %v1086 = vsel %vm1078, %v1069, %v771
      %v1087 = vsel %vm1078, %v1070, %v773
      %v1088 = vsel %vm1078, %v1071, %v775
      %v1089 = vsel %vm1078, %v1072, %v777
      %v1090 = vsel %vm1078, %v1073, %v779
      %v1091 = vsel %vm1078, %v1074, %v781
      %v1092 = vsel %vm1078, %v1075, %v783
      %v1093 = vsel %vm1078, %v1076, %v785
      %v1094 = vsel %vm1078, %v1077, %v787
      %vm1095 = vcmask 130048
      %v1096 = vsel %vm1095, %v1079, %v805
      %v1097 = vsel %vm1095, %v1080, %v807
      %v1098 = vsel %vm1095, %v1081, %v809
      %v1099 = vsel %vm1095, %v1082, %v811
      %v1100 = vsel %vm1095, %v1083, %v813
      %v1101 = vsel %vm1095, %v1084, %v815
      %v1102 = vsel %vm1095, %v1085, %v817
      %v1103 = vsel %vm1095, %v1086, %v819
      %v1104 = vsel %vm1095, %v1087, %v821
      %v1105 = vsel %vm1095, %v1088, %v823
      %v1106 = vsel %vm1095, %v1089, %v825
      %v1107 = vsel %vm1095, %v1090, %v827
      %v1108 = vsel %vm1095, %v1091, %v829
      %v1109 = vsel %vm1095, %v1092, %v831
      %v1110 = vsel %vm1095, %v1093, %v833
      %v1111 = vsel %vm1095, %v1094, %v835
      %vm1112 = vcmask 162816
      %v1113 = vsel %vm1112, %v1096, %v853
      %v1114 = vsel %vm1112, %v1097, %v855
      %v1115 = vsel %vm1112, %v1098, %v857
      %v1116 = vsel %vm1112, %v1099, %v859
      %v1117 = vsel %vm1112, %v1100, %v861
      %v1118 = vsel %vm1112, %v1101, %v863
      %v1119 = vsel %vm1112, %v1102, %v865
      %v1120 = vsel %vm1112, %v1103, %v867
      %v1121 = vsel %vm1112, %v1104, %v869
      %v1122 = vsel %vm1112, %v1105, %v871
      %v1123 = vsel %vm1112, %v1106, %v873
      %v1124 = vsel %vm1112, %v1107, %v875
      %v1125 = vsel %vm1112, %v1108, %v877
      %v1126 = vsel %vm1112, %v1109, %v879
      %v1127 = vsel %vm1112, %v1110, %v881
      %v1128 = vsel %vm1112, %v1111, %v883
      %vm1129 = vcmask 195584
      %v1130 = vsel %vm1129, %v1113, %v901
      %v1131 = vsel %vm1129, %v1114, %v903
      %v1132 = vsel %vm1129, %v1115, %v905
      %v1133 = vsel %vm1129, %v1116, %v907
      %v1134 = vsel %vm1129, %v1117, %v909
      %v1135 = vsel %vm1129, %v1118, %v911
      %v1136 = vsel %vm1129, %v1119, %v913
      %v1137 = vsel %vm1129, %v1120, %v915
      %v1138 = vsel %vm1129, %v1121, %v917
      %v1139 = vsel %vm1129, %v1122, %v919
      %v1140 = vsel %vm1129, %v1123, %v921
      %v1141 = vsel %vm1129, %v1124, %v923
      %v1142 = vsel %vm1129, %v1125, %v925
      %v1143 = vsel %vm1129, %v1126, %v927
      %v1144 = vsel %vm1129, %v1127, %v929
      %v1145 = vsel %vm1129, %v1128, %v931
      %vm1146 = vcmask 228352
      %v1147 = vsel %vm1146, %v1130, %v949
      %v1148 = vsel %vm1146, %v1131, %v951
      %v1149 = vsel %vm1146, %v1132, %v953
      %v1150 = vsel %vm1146, %v1133, %v955
      %v1151 = vsel %vm1146, %v1134, %v957
      %v1152 = vsel %vm1146, %v1135, %v959
      %v1153 = vsel %vm1146, %v1136, %v961
      %v1154 = vsel %vm1146, %v1137, %v963
      %v1155 = vsel %vm1146, %v1138, %v965
      %v1156 = vsel %vm1146, %v1139, %v967
      %v1157 = vsel %vm1146, %v1140, %v969
      %v1158 = vsel %vm1146, %v1141, %v971
      %v1159 = vsel %vm1146, %v1142, %v973
      %v1160 = vsel %vm1146, %v1143, %v975
      %v1161 = vsel %vm1146, %v1144, %v977
      %v1162 = vsel %vm1146, %v1145, %v979
      %vm1163 = vcmask 261120
      %v1164 = vsel %vm1163, %v1147, %v997
      %v1165 = vsel %vm1163, %v1148, %v999
      %v1166 = vsel %vm1163, %v1149, %v1001
      %v1167 = vsel %vm1163, %v1150, %v1003
      %v1168 = vsel %vm1163, %v1151, %v1005
      %v1169 = vsel %vm1163, %v1152, %v1007
      %v1170 = vsel %vm1163, %v1153, %v1009
      %v1171 = vsel %vm1163, %v1154, %v1011
      %v1172 = vsel %vm1163, %v1155, %v1013
      %v1173 = vsel %vm1163, %v1156, %v1015
      %v1174 = vsel %vm1163, %v1157, %v1017
      %v1175 = vsel %vm1163, %v1158, %v1019
      %v1176 = vsel %vm1163, %v1159, %v1021
      %v1177 = vsel %vm1163, %v1160, %v1023
      %v1178 = vsel %vm1163, %v1161, %v1025
      %v1179 = vsel %vm1163, %v1162, %v1027
      %vm1180 = vcmask 293888
      %v1182 = vsel %vm1180, %v1164, 0
      %v1185 = vsel %vm1180, %v1165, 0
      %v1188 = vsel %vm1180, %v1166, 0
      %v1191 = vsel %vm1180, %v1167, 0
      %v1194 = vsel %vm1180, %v1168, 0
      %v1197 = vsel %vm1180, %v1169, 0
      %v1200 = vsel %vm1180, %v1170, 0
      %v1203 = vsel %vm1180, %v1171, 0
      %v1206 = vsel %vm1180, %v1172, 0
      %v1209 = vsel %vm1180, %v1173, 0
      %v1212 = vsel %vm1180, %v1174, 0
      %v1215 = vsel %vm1180, %v1175, 0
      %v1218 = vsel %vm1180, %v1176, 0
      %v1221 = vsel %vm1180, %v1177, 0
      %v1224 = vsel %vm1180, %v1178, 0
      %v1227 = vsel %vm1180, %v1179, 0
      %vm1229 = vcmask 1043456
      %v1231 = vsel %vm1229, %v527, 0
      %1233 = vmatpush.msra.mxu0 0.0
      %1234 = vmatpush.msra.mxu0 0.0
      %1235 = vmatpush.msra.mxu0 0.0
      %1236 = vmatpush.msra.mxu0 0.0
      %1237 = vmatpush.msra.mxu0 0.0
      %1238 = vmatpush.msra.mxu0 0.0
      %1239 = vmatpush.msra.mxu0 0.0
      %1240 = vmatpush.msra.mxu0 0.0
      %1241 = vmatpush.msra.mxu0 0.0
      %1242 = vmatpush.msra.mxu0 0.0
      %1243 = vmatpush.msra.mxu0 0.0
      %1244 = vmatpush.msra.mxu0 %v1231
      %1245 = vmatpush.msra.mxu0 %v526
      %1246 = vmatpush.msra.mxu0 %v525
      %1247 = vmatpush.msra.mxu0 %v524
      %1248 = vmatpush.msra.mxu0 %v523
      %1249 = vmatmul.f32.gmra.mxu0 %v1182
      %v1250 = vpop.f32.mrf.mxu0
      %v1251 = vadd.f32 0.0, %v1250
      %1252 = vmatmul.f32.gmra.mxu0 %v1185
      %v1253 = vpop.f32.mrf.mxu0
      %v1254 = vadd.f32 0.0, %v1253
      %1255 = vmatmul.f32.gmra.mxu0 %v1188
      %v1256 = vpop.f32.mrf.mxu0
      %v1257 = vadd.f32 0.0, %v1256
      %1258 = vmatmul.f32.gmra.mxu0 %v1191
      %v1259 = vpop.f32.mrf.mxu0
      %v1260 = vadd.f32 0.0, %v1259
      %1261 = vmatmul.f32.gmra.mxu0 %v1194
      %v1262 = vpop.f32.mrf.mxu0
      %v1263 = vadd.f32 0.0, %v1262
      %1264 = vmatmul.f32.gmra.mxu0 %v1197
      %v1265 = vpop.f32.mrf.mxu0
      %v1266 = vadd.f32 0.0, %v1265
      %1267 = vmatmul.f32.gmra.mxu0 %v1200
      %v1268 = vpop.f32.mrf.mxu0
      %v1269 = vadd.f32 0.0, %v1268
      %1270 = vmatmul.f32.gmra.mxu0 %v1203
      %v1271 = vpop.f32.mrf.mxu0
      %v1272 = vadd.f32 0.0, %v1271
      %1273 = vmatmul.f32.gmra.mxu0 %v1206
      %v1274 = vpop.f32.mrf.mxu0
      %v1275 = vadd.f32 0.0, %v1274
      %1276 = vmatmul.f32.gmra.mxu0 %v1209
      %v1277 = vpop.f32.mrf.mxu0
      %v1278 = vadd.f32 0.0, %v1277
      %1279 = vmatmul.f32.gmra.mxu0 %v1212
      %v1280 = vpop.f32.mrf.mxu0
      %v1281 = vadd.f32 0.0, %v1280
      %1282 = vmatmul.f32.gmra.mxu0 %v1215
      %v1283 = vpop.f32.mrf.mxu0
      %v1284 = vadd.f32 0.0, %v1283
      %1285 = vmatmul.f32.gmra.mxu0 %v1218
      %v1286 = vpop.f32.mrf.mxu0
      %v1287 = vadd.f32 0.0, %v1286
      %1288 = vmatmul.f32.gmra.mxu0 %v1221
      %v1289 = vpop.f32.mrf.mxu0
      %v1290 = vadd.f32 0.0, %v1289
      %1291 = vmatmul.f32.gmra.mxu0 %v1224
      %v1292 = vpop.f32.mrf.mxu0
      %v1293 = vadd.f32 0.0, %v1292
      %1294 = vmatmul.f32.gmra.mxu0 %v1227
      %v1295 = vpop.f32.mrf.mxu0
      %v1296 = vadd.f32 0.0, %v1295
      %1297 = vdwg.mxu0
      %1298 = vst.msk [vmem:[%s261] sm:$0xff] %vm1044, %v1251
      %1299 = vst.msk [vmem:[%s261 + $0x8] sm:$0xff] %vm1044, %v1254
      %1300 = vst.msk [vmem:[%s261 + $0x10] sm:$0xff] %vm1044, %v1257
      %1301 = vst.msk [vmem:[%s261 + $0x18] sm:$0xff] %vm1044, %v1260
      %1302 = vst.msk [vmem:[%s261 + $0x20] sm:$0xff] %vm1044, %v1263
      %1303 = vst.msk [vmem:[%s261 + $0x28] sm:$0xff] %vm1044, %v1266
      %1304 = vst.msk [vmem:[%s261 + $0x30] sm:$0xff] %vm1044, %v1269
      %1305 = vst.msk [vmem:[%s261 + $0x38] sm:$0xff] %vm1044, %v1272
      %1306 = vst.msk [vmem:[%s261 + $0x40] sm:$0xff] %vm1044, %v1275
      %1307 = vst.msk [vmem:[%s261 + $0x48] sm:$0xff] %vm1044, %v1278
      %1308 = vst.msk [vmem:[%s261 + $0x50] sm:$0xff] %vm1044, %v1281
      %1309 = vst.msk [vmem:[%s261 + $0x58] sm:$0xff] %vm1044, %v1284
      %1310 = vst.msk [vmem:[%s261 + $0x60] sm:$0xff] %vm1044, %v1287
      %1311 = vst.msk [vmem:[%s261 + $0x68] sm:$0xff] %vm1044, %v1290
      %1312 = vst.msk [vmem:[%s261 + $0x70] sm:$0xff] %vm1044, %v1293
      %1313 = vst.msk [vmem:[%s261 + $0x78] sm:$0xff] %vm1044, %v1296
      %v1314 = vsel %vm1044, %v1251, 0.0
      %v1315 = vsel %vm1044, %v1254, 0.0
      %v1316 = vadd.f32 %v1314, %v1315
      %v1317 = vsel %vm1044, %v1257, 0.0
      %v1318 = vadd.f32 %v1316, %v1317
      %v1319 = vsel %vm1044, %v1260, 0.0
      %v1320 = vadd.f32 %v1318, %v1319
      %v1321 = vsel %vm1044, %v1263, 0.0
      %v1322 = vadd.f32 %v1320, %v1321
      %v1323 = vsel %vm1044, %v1266, 0.0
      %v1324 = vadd.f32 %v1322, %v1323
      %v1325 = vsel %vm1044, %v1269, 0.0
      %v1326 = vadd.f32 %v1324, %v1325
      %v1327 = vsel %vm1044, %v1272, 0.0
      %v1328 = vadd.f32 %v1326, %v1327
      %v1329 = vsel %vm1044, %v1275, 0.0
      %v1330 = vadd.f32 %v1328, %v1329
      %v1331 = vsel %vm1044, %v1278, 0.0
      %v1332 = vadd.f32 %v1330, %v1331
      %v1333 = vsel %vm1044, %v1281, 0.0
      %v1334 = vadd.f32 %v1332, %v1333
      %v1335 = vsel %vm1044, %v1284, 0.0
      %v1336 = vadd.f32 %v1334, %v1335
      %v1337 = vsel %vm1044, %v1287, 0.0
      %v1338 = vadd.f32 %v1336, %v1337
      %v1339 = vsel %vm1044, %v1290, 0.0
      %v1340 = vadd.f32 %v1338, %v1339
      %v1341 = vsel %vm1044, %v1293, 0.0
      %v1342 = vadd.f32 %v1340, %v1341
      %v1343 = vsel %vm1044, %v1296, 0.0
      %v1344 = vadd.f32 %v1342, %v1343
      %v1345 = vrot.slane %v1344, 4
      %v1346 = vadd.f32 %v1344, %v1345
      %v1347 = vrot.slane %v1346, 2
      %v1348 = vadd.f32 %v1346, %v1347
      %v1349 = vrot.slane %v1348, 1
      %v1350 = vadd.f32 %v1348, %v1349
      %v1351 = vadd.f32 %v1350, 0.0
      %v1352 = vmul.f32 %v1251, %v1251
      %v1353 = vmul.f32 %v1254, %v1254
      %v1354 = vmul.f32 %v1257, %v1257
      %v1355 = vmul.f32 %v1260, %v1260
      %v1356 = vmul.f32 %v1263, %v1263
      %v1357 = vmul.f32 %v1266, %v1266
      %v1358 = vmul.f32 %v1269, %v1269
      %v1359 = vmul.f32 %v1272, %v1272
      %v1360 = vmul.f32 %v1275, %v1275
      %v1361 = vmul.f32 %v1278, %v1278
      %v1362 = vmul.f32 %v1281, %v1281
      %v1363 = vmul.f32 %v1284, %v1284
      %v1364 = vmul.f32 %v1287, %v1287
      %v1365 = vmul.f32 %v1290, %v1290
      %v1366 = vmul.f32 %v1293, %v1293
      %v1367 = vmul.f32 %v1296, %v1296
      %v1368 = vsel %vm1044, %v1352, 0.0
      %v1369 = vsel %vm1044, %v1353, 0.0
      %v1370 = vadd.f32 %v1368, %v1369
      %v1371 = vsel %vm1044, %v1354, 0.0
      %v1372 = vadd.f32 %v1370, %v1371
      %v1373 = vsel %vm1044, %v1355, 0.0
      %v1374 = vadd.f32 %v1372, %v1373
      %v1375 = vsel %vm1044, %v1356, 0.0
      %v1376 = vadd.f32 %v1374, %v1375
      %v1377 = vsel %vm1044, %v1357, 0.0
      %v1378 = vadd.f32 %v1376, %v1377
      %v1379 = vsel %vm1044, %v1358, 0.0
      %v1380 = vadd.f32 %v1378, %v1379
      %v1381 = vsel %vm1044, %v1359, 0.0
      %v1382 = vadd.f32 %v1380, %v1381
      %v1383 = vsel %vm1044, %v1360, 0.0
      %v1384 = vadd.f32 %v1382, %v1383
      %v1385 = vsel %vm1044, %v1361, 0.0
      %v1386 = vadd.f32 %v1384, %v1385
      %v1387 = vsel %vm1044, %v1362, 0.0
      %v1388 = vadd.f32 %v1386, %v1387
      %v1389 = vsel %vm1044, %v1363, 0.0
      %v1390 = vadd.f32 %v1388, %v1389
      %v1391 = vsel %vm1044, %v1364, 0.0
      %v1392 = vadd.f32 %v1390, %v1391
      %v1393 = vsel %vm1044, %v1365, 0.0
      %v1394 = vadd.f32 %v1392, %v1393
      %v1395 = vsel %vm1044, %v1366, 0.0
      %v1396 = vadd.f32 %v1394, %v1395
      %v1397 = vsel %vm1044, %v1367, 0.0
      %v1398 = vadd.f32 %v1396, %v1397
      %v1399 = vrot.slane %v1398, 4
      %v1400 = vadd.f32 %v1398, %v1399
      %v1401 = vrot.slane %v1400, 2
      %v1402 = vadd.f32 %v1400, %v1401
      %v1403 = vrot.slane %v1402, 1
      %v1404 = vadd.f32 %v1402, %v1403
      %v1405 = vadd.f32 %v1404, 0.0
      %v1406 = vsel %vm324, %v1351, %v1405
      %vm1407 = vcmask 25600
      %1408 = vst.msk [vmem:[%s270] sm:$0x3] %vm1407, %v1406
      %s1409 = smul.u32 8, %s22
      %p1410 = scmp.lt.s32.totalorder %s21, 1
      %s1411 = scalar_select %p1410, %s21, 1
      %p1412 = scmp.lt.s32.totalorder %s1409, 15
      %s1413 = scalar_select %p1412, %s1409, 15
      %s1414 = smul.addr %s1413, 2
      %s1415 = smul.addr %s1411, 32
      %s1416 = sadd.s32 %s1414, %s1415
      %s1417 = smul.addr %s1416, 8
      %s1418 = scalar_lea.vmem %s4, %s1417
      %p1419 = scmp.lt.s32.totalorder %s21, 1
      %s1420 = scalar_select %p1419, %s21, 1
      %p1421 = scmp.lt.s32.totalorder %s22, 1
      %s1422 = scalar_select %p1421, %s22, 1
      %s1423 = smul.addr %s1420, 2
      %s1424 = sadd.s32 %s1422, %s1423
      %s1425 = smul.addr %s1424, 2
      %s1426 = scalar_lea.vmem %s5, %s1425
      // Predicated region
      $region37: #{resblock_forward.4} parent=35 // pred_check
        %p1427 = pneg %p138
      $region38: #{resblock_forward.4} parent=35 // pred_check_branch
        %1429 = sbr.rel (%p1427) target = $region40
      $region39: #{resblock_forward.4} parent=35 // pred_region
        %s1430 = smul.u32 8, %s22
      $region40: #{resblock_forward.4} parent=35 // pred_fallthru
        _
      // Predicated region
      $region41: #{resblock_forward.4} parent=35 // pred_check
        %p1431 = pneg %p166
      $region42: #{resblock_forward.4} parent=35 // pred_check_branch
        %1433 = sbr.rel (%p1431) target = $region44
      $region43: #{resblock_forward.4} parent=35 // pred_region
        _
      $region44: #{resblock_forward.4} parent=35 // pred_fallthru
        _
    $region36: #{resblock_forward.4} parent=5 // pred_fallthru
      _
    %p1434 = scmp.le.s32.totalorder 2, %s12
    // Predicated region
    $region45: #{resblock_forward.4} parent=5 // pred_check
      %p1435 = pneg %p1434
    $region46: #{resblock_forward.4} parent=5 // pred_check_branch
      %1437 = sbr.rel (%p1435) target = $region48
    $region47: #{resblock_forward.4} parent=5 // pred_region
      %s1438 = ssub.s32 %s12, 2
      // Predicated region
      $region49: #{resblock_forward.4} parent=47 // pred_check
        %p1439 = pneg %p144
      $region50: #{resblock_forward.4} parent=47 // pred_check_branch
        %1441 = sbr.rel (%p1439) target = $region52
      $region51: #{resblock_forward.4} parent=47 // pred_region
        %s1442 = smul.u32 8, %s24
        %p1443 = scmp.lt.s32.totalorder %s23, 1
        %s1444 = scalar_select %p1443, %s23, 1
        %p1445 = scmp.lt.s32.totalorder %s1442, 15
        %s1446 = scalar_select %p1445, %s1442, 15
        %s1447 = smul.addr %s1446, 2
        %s1448 = smul.addr %s1444, 32
        %s1449 = sadd.s32 %s1447, %s1448
        %s1450 = smul.addr %s1449, 8
        %s1451 = scalar_lea.vmem %s4, %s1450
      $region52: #{resblock_forward.4} parent=47 // pred_fallthru
        _
      // Predicated region
      $region53: #{resblock_forward.4} parent=47 // pred_check
        %p1452 = pneg %p172
      $region54: #{resblock_forward.4} parent=47 // pred_check_branch
        %1454 = sbr.rel (%p1452) target = $region56
      $region55: #{resblock_forward.4} parent=47 // pred_region
        %p1455 = scmp.lt.s32.totalorder %s23, 1
        %s1456 = scalar_select %p1455, %s23, 1
        %p1457 = scmp.lt.s32.totalorder %s24, 1
        %s1458 = scalar_select %p1457, %s24, 1
        %s1459 = smul.addr %s1456, 2
        %s1460 = sadd.s32 %s1458, %s1459
        %s1461 = smul.addr %s1460, 2
        %s1462 = scalar_lea.vmem %s5, %s1461
      $region56: #{resblock_forward.4} parent=47 // pred_fallthru
        _
    $region48: #{resblock_forward.4} parent=5 // pred_fallthru
      _
  $region6: #{resblock_forward.4} parent=0 // loop_footer
    %s16 = sadd.s32 1, %s12
  $region7: #{resblock_forward.4} parent=0 // loop_footer_branch
    %11 = sbr.rel target = $region3
  $region8: #{resblock_forward.4} parent=0 // loop_exit
    _

</llo_original>
